<compile_context>
chip_gen: v7x
topology: tpu7x:2x2x1
jax: 0.10.0
libtpu: 0.0.40
codegen_flags: <defaults>
</compile_context>

<pallas_src>
import functools

import jax
import jax.numpy as jnp
from jax.experimental import pallas as pl
from jax.experimental.pallas import tpu as pltpu

_EPS = 1e-5
_NEG = -1e30


# -----------------------------------------------------------------------------
# In-kernel helpers (pure value math on VMEM-resident tiles)
# -----------------------------------------------------------------------------
def _add_layernorm(x, res, gamma, beta, eps):
    """Post-norm residual LayerNorm(x + res); all math f32."""
    y = x + res
    mean = jnp.mean(y, axis=-1, keepdims=True)
    var = jnp.mean(jnp.square(y - mean), axis=-1, keepdims=True)
    return (y - mean) * jax.lax.rsqrt(var + eps) * gamma + beta


def _mha_core(x, mem, key_bias, wq_ref, wk_ref, wv_ref, wo_ref,
              bq_ref, bk_ref, bv_ref, bo_ref, *, n_head, scale):
    """Multi-head attention for one batch element.

    x: [Sq, D] f32 (queries), mem: [Sk, D] f32 (keys/values),
    key_bias: [1, Sk] additive bias (or None).  Returns [Sq, D] f32.
    Heads are sliced from the lane-dense [.., D] projections; the output
    projection is accumulated per head (no concat, no transposes).
    """
    Sq, D = x.shape
    Dh = D // n_head
    xb = x.astype(jnp.bfloat16)
    mb = mem.astype(jnp.bfloat16)

    q = jnp.dot(xb, wq_ref[...].astype(jnp.bfloat16),
                preferred_element_type=jnp.float32) + bq_ref[...]
    k = jnp.dot(mb, wk_ref[...].astype(jnp.bfloat16),
                preferred_element_type=jnp.float32) + bk_ref[...]
    v = jnp.dot(mb, wv_ref[...].astype(jnp.bfloat16),
                preferred_element_type=jnp.float32) + bv_ref[...]

    acc = None
    for h in range(n_head):
        lo, hi = h * Dh, (h + 1) * Dh
        qh = q[:, lo:hi].astype(jnp.bfloat16)          # [Sq, Dh]
        kh = k[:, lo:hi].astype(jnp.bfloat16)          # [Sk, Dh]
        vh = v[:, lo:hi].astype(jnp.bfloat16)          # [Sk, Dh]

        # scores: contract last axes (q @ k^T without materializing a transpose)
        s = jax.lax.dot_general(qh, kh, (((1,), (1,)), ((), ())),
                                preferred_element_type=jnp.float32) * scale
        if key_bias is not None:
            s = s + key_bias                            # [Sq, Sk]
        s = s - jnp.max(s, axis=-1, keepdims=True)
        p = jnp.exp(s)
        p = p * pl.reciprocal(jnp.sum(p, axis=-1, keepdims=True), approx=True)

        oh = jnp.dot(p.astype(jnp.bfloat16), vh,
                     preferred_element_type=jnp.float32)            # [Sq, Dh]
        contrib = jnp.dot(oh.astype(jnp.bfloat16),
                          wo_ref[lo:hi, :].astype(jnp.bfloat16),
                          preferred_element_type=jnp.float32)       # [Sq, D]
        acc = contrib if acc is None else acc + contrib

    return acc + bo_ref[...]


# -----------------------------------------------------------------------------
# Pallas kernels
# -----------------------------------------------------------------------------
def _tok_kernel(x_ref, w_ref, b_ref, pos_ref, o_ref):
    """Tokenizer Linear + learned positional embedding (fused epilogue)."""
    xb = x_ref[0].astype(jnp.bfloat16)                  # [S, D]
    y = jnp.dot(xb, w_ref[...].astype(jnp.bfloat16),
                preferred_element_type=jnp.float32)
    o_ref[0] = (y + b_ref[...] + pos_ref[...]).astype(o_ref.dtype)


def _self_block_kernel(bias_ref, x_ref, wq_ref, wk_ref, wv_ref, wo_ref,
                       bq_ref, bk_ref, bv_ref, bo_ref, g_ref, beta_ref, o_ref,
                       *, n_head, scale, eps):
    """Self-attention + residual + LayerNorm for one batch element."""
    x = x_ref[0].astype(jnp.float32)                    # [S, D]
    key_bias = bias_ref[0]                              # [1, S] additive (-1e30 on pads)
    attn = _mha_core(x, x, key_bias, wq_ref, wk_ref, wv_ref, wo_ref,
                     bq_ref, bk_ref, bv_ref, bo_ref, n_head=n_head, scale=scale)
    o_ref[0] = _add_layernorm(x, attn, g_ref[...], beta_ref[...], eps).astype(o_ref.dtype)


def _cross_ffn_block_kernel(x_ref, mem_ref, wq_ref, wk_ref, wv_ref, wo_ref,
                            bq_ref, bk_ref, bv_ref, bo_ref,
                            g1_ref, beta1_ref,
                            w1_ref, fb1_ref, w2_ref, fb2_ref,
                            g2_ref, beta2_ref, o_ref,
                            *, n_head, scale, eps):
    """Cross-attention (+res+LN) fused with the FFN (+res+LN) for one batch element.

    The [S, d_ff] intermediate never leaves VMEM/vregs.
    """
    x = x_ref[0].astype(jnp.float32)                    # [S, D]
    mem = mem_ref[0].astype(jnp.float32)                # [S_enc, D]

    attn = _mha_core(x, mem, None, wq_ref, wk_ref, wv_ref, wo_ref,
                     bq_ref, bk_ref, bv_ref, bo_ref, n_head=n_head, scale=scale)
    y = _add_layernorm(x, attn, g1_ref[...], beta1_ref[...], eps)   # post cross-attn LN

    h = jnp.dot(y.astype(jnp.bfloat16), w1_ref[...].astype(jnp.bfloat16),
                preferred_element_type=jnp.float32) + fb1_ref[...]
    h = jnp.maximum(h, 0.0)
    z = jnp.dot(h.astype(jnp.bfloat16), w2_ref[...].astype(jnp.bfloat16),
                preferred_element_type=jnp.float32) + fb2_ref[...]

    o_ref[0] = _add_layernorm(y, z, g2_ref[...], beta2_ref[...], eps).astype(o_ref.dtype)


def _dense_kernel(x_ref, w_ref, b_ref, o_ref):
    y = jnp.dot(x_ref[...].astype(jnp.bfloat16), w_ref[...].astype(jnp.bfloat16),
                preferred_element_type=jnp.float32) + b_ref[...]
    o_ref[...] = y.astype(o_ref.dtype)


# -----------------------------------------------------------------------------
# Wrappers (pallas_call plumbing)
# -----------------------------------------------------------------------------
def _params(n_parallel_axes):
    return pltpu.CompilerParams(dimension_semantics=("parallel",) * n_parallel_axes)


def tokenize(token, w, b, pos_emb):
    """token: [B, S, D] -> Linear + pos_emb[:S] added, one grid step per batch."""
    B, S, D = token.shape
    return pl.pallas_call(
        _tok_kernel,
        out_shape=jax.ShapeDtypeStruct((B, S, D), jnp.float32),
        grid=(B,),
        in_specs=[
            pl.BlockSpec((1, S, D), lambda i: (i, 0, 0)),
            pl.BlockSpec((D, D), lambda i: (0, 0)),
            pl.BlockSpec((1, D), lambda i: (0, 0)),
            pl.BlockSpec((S, D), lambda i: (0, 0)),       # rows 0..S of pos_emb (no tiling in HBM)
        ],
        out_specs=pl.BlockSpec((1, S, D), lambda i: (i, 0, 0)),
        compiler_params=_params(1),
    )(token, w, b.reshape(1, D), pos_emb)


def self_attn_block(x, key_bias, p, ln_g, ln_b, *, n_head, eps=_EPS):
    B, S, D = x.shape
    Dh = D // n_head
    scale = 1.0 / (Dh ** 0.5)
    wspec = pl.BlockSpec((D, D), lambda b: (0, 0))        # weights resident across batch grid
    vspec = pl.BlockSpec((1, D), lambda b: (0, 0))
    return pl.pallas_call(
        functools.partial(_self_block_kernel, n_head=n_head, scale=scale, eps=eps),
        out_shape=jax.ShapeDtypeStruct((B, S, D), jnp.float32),
        grid=(B,),
        in_specs=[
            pl.BlockSpec((1, 1, S), lambda b: (b, 0, 0)),  # additive key-padding bias
            pl.BlockSpec((1, S, D), lambda b: (b, 0, 0)),  # x
            wspec, wspec, wspec, wspec,                    # wq wk wv wo
            vspec, vspec, vspec, vspec,                    # bq bk bv bo
            vspec, vspec,                                  # ln gamma, beta
        ],
        out_specs=pl.BlockSpec((1, S, D), lambda b: (b, 0, 0)),
        compiler_params=_params(1),
    )(key_bias, x,
      p["wq"], p["wk"], p["wv"], p["wo"],
      p["bq"].reshape(1, D), p["bk"].reshape(1, D),
      p["bv"].reshape(1, D), p["bo"].reshape(1, D),
      ln_g.reshape(1, D), ln_b.reshape(1, D))


def cross_ffn_block(x, mem, lp, *, n_head, eps=_EPS):
    B, S, D = x.shape
    Sk = mem.shape[1]
    d_ff = lp["ff_w1"].shape[1]
    Dh = D // n_head
    scale = 1.0 / (Dh ** 0.5)
    p = lp["cross"]
    wspec = pl.BlockSpec((D, D), lambda b: (0, 0))
    vspec = pl.BlockSpec((1, D), lambda b: (0, 0))
    return pl.pallas_call(
        functools.partial(_cross_ffn_block_kernel, n_head=n_head, scale=scale, eps=eps),
        out_shape=jax.ShapeDtypeStruct((B, S, D), jnp.float32),
        grid=(B,),
        in_specs=[
            pl.BlockSpec((1, S, D), lambda b: (b, 0, 0)),    # x
            pl.BlockSpec((1, Sk, D), lambda b: (b, 0, 0)),   # enc_data
            wspec, wspec, wspec, wspec,                      # wq wk wv wo
            vspec, vspec, vspec, vspec,                      # bq bk bv bo
            vspec, vspec,                                    # ln2 gamma, beta
            pl.BlockSpec((D, d_ff), lambda b: (0, 0)),       # ff w1
            pl.BlockSpec((1, d_ff), lambda b: (0, 0)),       # ff b1
            pl.BlockSpec((d_ff, D), lambda b: (0, 0)),       # ff w2
            vspec,                                           # ff b2
            vspec, vspec,                                    # ln3 gamma, beta
        ],
        out_specs=pl.BlockSpec((1, S, D), lambda b: (b, 0, 0)),
        compiler_params=_params(1),
    )(x, mem,
      p["wq"], p["wk"], p["wv"], p["wo"],
      p["bq"].reshape(1, D), p["bk"].reshape(1, D),
      p["bv"].reshape(1, D), p["bo"].reshape(1, D),
      lp["ln2_g"].reshape(1, D), lp["ln2_b"].reshape(1, D),
      lp["ff_w1"], lp["ff_b1"].reshape(1, d_ff), lp["ff_w2"], lp["ff_b2"].reshape(1, D),
      lp["ln3_g"].reshape(1, D), lp["ln3_b"].reshape(1, D))


def dense(x, w, b, *, block_rows=256):
    """x: [M, K] @ w: [K, N] + b, row-tiled; weights resident (constant index_map)."""
    M, K = x.shape
    N = w.shape[1]
    tm = M if (M <= block_rows or M % block_rows != 0) else block_rows
    return pl.pallas_call(
        _dense_kernel,
        out_shape=jax.ShapeDtypeStruct((M, N), jnp.float32),
        grid=(M // tm,),
        in_specs=[
            pl.BlockSpec((tm, K), lambda i: (i, 0)),
            pl.BlockSpec((K, N), lambda i: (0, 0)),
            pl.BlockSpec((1, N), lambda i: (0, 0)),
        ],
        out_specs=pl.BlockSpec((tm, N), lambda i: (i, 0)),
        compiler_params=_params(1),
    )(x, w, b.reshape(1, N))


# -----------------------------------------------------------------------------
# DecoderV2 forward
# -----------------------------------------------------------------------------
def decoder_v2_forward(params, token, padding_mask, enc_data, *, n_head):
    """token: [B, n_part, d_model], padding_mask: [B, n_part] (1 = valid),
    enc_data: [B, S_enc, d_model]."""
    B, S, D = token.shape

    # tokenizer (Linear) + learned positional embedding, fused into one kernel
    x = tokenize(token, params["tok_w"], params["tok_b"], params["pos_emb"])

    # generate_mask is all-ones [n_part, n_part]  ->  the self-attn mask reduces to the
    # key padding mask, passed as a tiny additive [B, 1, S] score bias (no [B,S,S] tensor).
    # Cross-attention mask is all-ones -> dropped entirely.
    key_bias = jnp.where(padding_mask > 0, 0.0, _NEG).astype(jnp.float32).reshape(B, 1, S)

    for lp in params["layers"]:
        x = self_attn_block(x, key_bias, lp["self"], lp["ln1_g"], lp["ln1_b"], n_head=n_head)
        x = cross_ffn_block(x, enc_data, lp, n_head=n_head)

    # untokenizer (Linear)
    out = dense(x.reshape(B * S, D), params["untok_w"], params["untok_b"])
    return out.reshape(B, S, -1)


# -----------------------------------------------------------------------------
# Deterministic parameter construction
# -----------------------------------------------------------------------------
def make_params(key, d_model, d_ff, n_layer, max_len, d_out):
    def lin(k, fan_in, fan_out):
        return (jax.random.normal(k, (fan_in, fan_out), jnp.float32) * 0.02,
                jnp.zeros((fan_out,), jnp.float32))

    keys = iter(jax.random.split(key, 3 + n_layer * 10))
    params = {}
    params["tok_w"], params["tok_b"] = lin(next(keys), d_model, d_model)
    params["pos_emb"] = jax.random.normal(next(keys), (max_len, d_model), jnp.float32) * 0.02
    params["untok_w"], params["untok_b"] = lin(next(keys), d_model, d_out)

    layers = []
    for _ in range(n_layer):
        lp = {}
        for name in ("self", "cross"):
            blk = {}
            for wn in ("q", "k", "v", "o"):
                blk["w" + wn], blk["b" + wn] = lin(next(keys), d_model, d_model)
            lp[name] = blk
        lp["ff_w1"], lp["ff_b1"] = lin(next(keys), d_model, d_ff)
        lp["ff_w2"], lp["ff_b2"] = lin(next(keys), d_ff, d_model)
        for i in (1, 2, 3):
            lp[f"ln{i}_g"] = jnp.ones((d_model,), jnp.float32)
            lp[f"ln{i}_b"] = jnp.zeros((d_model,), jnp.float32)
        layers.append(lp)
    params["layers"] = layers
    return params


# -----------------------------------------------------------------------------
if __name__ == "__main__":
    # small config implied by forward(): input['token'] is [batch, n_part, d_model]
    batch, n_part, d_model = 2, 8, 32
    n_head, d_ff, n_layer = 4, 64, 2
    s_enc, d_out, max_len = 8, 32, 64

    root = jax.random.PRNGKey(0)
    k_tok, k_enc, k_par = jax.random.split(root, 3)

    token = jax.random.normal(k_tok, (batch, n_part, d_model), jnp.float32)
    enc_data = jax.random.normal(k_enc, (batch, s_enc, d_model), jnp.float32)
    # key padding mask: 1 = valid token; second example has the last 2 parts padded
    padding_mask = jnp.array(
        [[1] * n_part, [1] * (n_part - 2) + [0, 0]], dtype=jnp.int32)

    params = make_params(k_par, d_model, d_ff, n_layer, max_len, d_out)

    fwd = jax.jit(functools.partial(decoder_v2_forward, n_head=n_head))
    out = fwd(params, token, padding_mask, enc_data)
    jax.block_until_ready(out)

    assert out.shape == (batch, n_part, d_out)
    assert bool(jnp.all(jnp.isfinite(out)))
    print("KERNEL_OK")
</pallas_src>

<mosaic_0001>
module attributes {stable_mosaic.version = 11 : i64} {
  func.func @_tok_kernel(%arg0: i32, %arg1: memref<1x8x32xf32, #tpu.memory_space<vmem>>, %arg2: memref<32x32xf32, #tpu.memory_space<vmem>>, %arg3: memref<1x32xf32, #tpu.memory_space<vmem>>, %arg4: memref<8x32xf32, #tpu.memory_space<vmem>>, %arg5: memref<1x8x32xf32, #tpu.memory_space<vmem>>) attributes {dimension_semantics = [#tpu.dimension_semantics<parallel>], iteration_bounds = array<i64: 2>, scalar_prefetch = 0 : i64, scratch_operands = 0 : i64, tpu.core_type = #tpu.core_type<tc>, window_params = [{transform_indices = @transform_0, window_bounds = array<i64: 1, 8, 32>}, {pipeline_mode = #tpu.pipeline_mode<synchronous>, transform_indices = @transform_1, window_bounds = array<i64: 32, 32>}, {pipeline_mode = #tpu.pipeline_mode<synchronous>, transform_indices = @transform_2, window_bounds = array<i64: 1, 32>}, {transform_indices = @transform_3, window_bounds = array<i64: 8, 32>}, {transform_indices = @transform_4, window_bounds = array<i64: 1, 8, 32>}]} {
    %c0 = arith.constant 0 : index
    %c0_0 = arith.constant 0 : index
    %c0_1 = arith.constant 0 : index
    %0 = vector.load %arg1[%c0, %c0_0, %c0_1] : memref<1x8x32xf32, #tpu.memory_space<vmem>>, vector<1x8x32xf32>
    %1 = vector.shape_cast %0 : vector<1x8x32xf32> to vector<8x32xf32>
    %2 = arith.truncf %1 : vector<8x32xf32> to vector<8x32xbf16>
    %c0_2 = arith.constant 0 : index
    %c0_3 = arith.constant 0 : index
    %3 = vector.load %arg2[%c0_2, %c0_3] : memref<32x32xf32, #tpu.memory_space<vmem>>, vector<32x32xf32>
    %4 = arith.truncf %3 : vector<32x32xf32> to vector<32x32xbf16>
    %cst = arith.constant dense<0.000000e+00> : vector<8x32xf32>
    %5 = tpu.matmul %2, %4, %cst {dimension_numbers = #tpu.dot_dimension_numbers<[1], [0], [0], [1], [0, 0, 1, 1], [], []>} : vector<8x32xbf16>, vector<32x32xbf16>, vector<8x32xf32> -> vector<8x32xf32>
    %c0_4 = arith.constant 0 : index
    %c0_5 = arith.constant 0 : index
    %6 = vector.load %arg3[%c0_4, %c0_5] : memref<1x32xf32, #tpu.memory_space<vmem>>, vector<1x32xf32>
    %7 = vector.broadcast %6 : vector<1x32xf32> to vector<8x32xf32>
    %8 = arith.addf %5, %7 : vector<8x32xf32>
    %c0_6 = arith.constant 0 : index
    %c0_7 = arith.constant 0 : index
    %9 = vector.load %arg4[%c0_6, %c0_7] : memref<8x32xf32, #tpu.memory_space<vmem>>, vector<8x32xf32>
    %10 = arith.addf %8, %9 : vector<8x32xf32>
    %c0_8 = arith.constant 0 : index
    %c0_9 = arith.constant 0 : index
    %c0_10 = arith.constant 0 : index
    %11 = vector.load %arg5[%c0_8, %c0_9, %c0_10] : memref<1x8x32xf32, #tpu.memory_space<vmem>>, vector<1x8x32xf32>
    %12 = vector.shape_cast %11 : vector<1x8x32xf32> to vector<8x32xf32>
    %13 = vector.shape_cast %10 : vector<8x32xf32> to vector<1x8x32xf32>
    tpu.vector_store %arg5[%c0_8, %c0_9, %c0_10], %13 {strides = array<i32>} : memref<1x8x32xf32, #tpu.memory_space<vmem>>, vector<1x8x32xf32>,
    return
  }
  func.func @transform_0(%arg0: i32) -> (i32, i32, i32) {
    %c0_i32 = arith.constant 0 : i32
    %c0_i32_0 = arith.constant 0 : i32
    %c0_i32_1 = arith.constant 0 : i32
    return %arg0, %c0_i32, %c0_i32_0 : i32, i32, i32
  }
  func.func @transform_1(%arg0: i32) -> (i32, i32) {
    %c0_i32 = arith.constant 0 : i32
    %c0_i32_0 = arith.constant 0 : i32
    %c0_i32_1 = arith.constant 0 : i32
    return %c0_i32, %c0_i32_0 : i32, i32
  }
  func.func @transform_2(%arg0: i32) -> (i32, i32) {
    %c0_i32 = arith.constant 0 : i32
    %c0_i32_0 = arith.constant 0 : i32
    %c0_i32_1 = arith.constant 0 : i32
    return %c0_i32, %c0_i32_0 : i32, i32
  }
  func.func @transform_3(%arg0: i32) -> (i32, i32) {
    %c0_i32 = arith.constant 0 : i32
    %c0_i32_0 = arith.constant 0 : i32
    %c0_i32_1 = arith.constant 0 : i32
    return %c0_i32, %c0_i32_0 : i32, i32
  }
  func.func @transform_4(%arg0: i32) -> (i32, i32, i32) {
    %c0_i32 = arith.constant 0 : i32
    %c0_i32_0 = arith.constant 0 : i32
    %c0_i32_1 = arith.constant 0 : i32
    return %arg0, %c0_i32, %c0_i32_0 : i32, i32, i32
  }
}

module attributes {stable_mosaic.version = 11 : i64} {
  func.func @_self_block_kernel(%arg0: i32, %arg1: memref<1x1x8xf32, #tpu.memory_space<vmem>>, %arg2: memref<1x8x32xf32, #tpu.memory_space<vmem>>, %arg3: memref<32x32xf32, #tpu.memory_space<vmem>>, %arg4: memref<32x32xf32, #tpu.memory_space<vmem>>, %arg5: memref<32x32xf32, #tpu.memory_space<vmem>>, %arg6: memref<32x32xf32, #tpu.memory_space<vmem>>, %arg7: memref<1x32xf32, #tpu.memory_space<vmem>>, %arg8: memref<1x32xf32, #tpu.memory_space<vmem>>, %arg9: memref<1x32xf32, #tpu.memory_space<vmem>>, %arg10: memref<1x32xf32, #tpu.memory_space<vmem>>, %arg11: memref<1x32xf32, #tpu.memory_space<vmem>>, %arg12: memref<1x32xf32, #tpu.memory_space<vmem>>, %arg13: memref<1x8x32xf32, #tpu.memory_space<vmem>>) attributes {dimension_semantics = [#tpu.dimension_semantics<parallel>], iteration_bounds = array<i64: 2>, scalar_prefetch = 0 : i64, scratch_operands = 0 : i64, tpu.core_type = #tpu.core_type<tc>, window_params = [{transform_indices = @transform_0, window_bounds = array<i64: 1, 1, 8>}, {transform_indices = @transform_1, window_bounds = array<i64: 1, 8, 32>}, {pipeline_mode = #tpu.pipeline_mode<synchronous>, transform_indices = @transform_2, window_bounds = array<i64: 32, 32>}, {pipeline_mode = #tpu.pipeline_mode<synchronous>, transform_indices = @transform_3, window_bounds = array<i64: 32, 32>}, {pipeline_mode = #tpu.pipeline_mode<synchronous>, transform_indices = @transform_4, window_bounds = array<i64: 32, 32>}, {pipeline_mode = #tpu.pipeline_mode<synchronous>, transform_indices = @transform_5, window_bounds = array<i64: 32, 32>}, {pipeline_mode = #tpu.pipeline_mode<synchronous>, transform_indices = @transform_6, window_bounds = array<i64: 1, 32>}, {pipeline_mode = #tpu.pipeline_mode<synchronous>, transform_indices = @transform_7, window_bounds = array<i64: 1, 32>}, {pipeline_mode = #tpu.pipeline_mode<synchronous>, transform_indices = @transform_8, window_bounds = array<i64: 1, 32>}, {pipeline_mode = #tpu.pipeline_mode<synchronous>, transform_indices = @transform_9, window_bounds = array<i64: 1, 32>}, {pipeline_mode = #tpu.pipeline_mode<synchronous>, transform_indices = @transform_10, window_bounds = array<i64: 1, 32>}, {pipeline_mode = #tpu.pipeline_mode<synchronous>, transform_indices = @transform_11, window_bounds = array<i64: 1, 32>}, {transform_indices = @transform_12, window_bounds = array<i64: 1, 8, 32>}]} {
    %c0 = arith.constant 0 : index
    %c0_0 = arith.constant 0 : index
    %c0_1 = arith.constant 0 : index
    %0 = vector.load %arg2[%c0, %c0_0, %c0_1] : memref<1x8x32xf32, #tpu.memory_space<vmem>>, vector<1x8x32xf32>
    %1 = vector.shape_cast %0 : vector<1x8x32xf32> to vector<8x32xf32>
    %c0_2 = arith.constant 0 : index
    %c0_3 = arith.constant 0 : index
    %c0_4 = arith.constant 0 : index
    %2 = vector.load %arg1[%c0_2, %c0_3, %c0_4] : memref<1x1x8xf32, #tpu.memory_space<vmem>>, vector<1x1x8xf32>
    %3 = vector.shape_cast %2 : vector<1x1x8xf32> to vector<1x8xf32>
    %4 = arith.truncf %1 : vector<8x32xf32> to vector<8x32xbf16>
    %5 = arith.truncf %1 : vector<8x32xf32> to vector<8x32xbf16>
    %c0_5 = arith.constant 0 : index
    %c0_6 = arith.constant 0 : index
    %6 = vector.load %arg3[%c0_5, %c0_6] : memref<32x32xf32, #tpu.memory_space<vmem>>, vector<32x32xf32>
    %7 = arith.truncf %6 : vector<32x32xf32> to vector<32x32xbf16>
    %cst = arith.constant dense<0.000000e+00> : vector<8x32xf32>
    %8 = tpu.matmul %4, %7, %cst {dimension_numbers = #tpu.dot_dimension_numbers<[1], [0], [0], [1], [0, 0, 1, 1], [], []>} : vector<8x32xbf16>, vector<32x32xbf16>, vector<8x32xf32> -> vector<8x32xf32>
    %c0_7 = arith.constant 0 : index
    %c0_8 = arith.constant 0 : index
    %9 = vector.load %arg7[%c0_7, %c0_8] : memref<1x32xf32, #tpu.memory_space<vmem>>, vector<1x32xf32>
    %10 = vector.broadcast %9 : vector<1x32xf32> to vector<8x32xf32>
    %11 = arith.addf %8, %10 : vector<8x32xf32>
    %c0_9 = arith.constant 0 : index
    %c0_10 = arith.constant 0 : index
    %12 = vector.load %arg4[%c0_9, %c0_10] : memref<32x32xf32, #tpu.memory_space<vmem>>, vector<32x32xf32>
    %13 = arith.truncf %12 : vector<32x32xf32> to vector<32x32xbf16>
    %cst_11 = arith.constant dense<0.000000e+00> : vector<8x32xf32>
    %14 = tpu.matmul %5, %13, %cst_11 {dimension_numbers = #tpu.dot_dimension_numbers<[1], [0], [0], [1], [0, 0, 1, 1], [], []>} : vector<8x32xbf16>, vector<32x32xbf16>, vector<8x32xf32> -> vector<8x32xf32>
    %c0_12 = arith.constant 0 : index
    %c0_13 = arith.constant 0 : index
    %15 = vector.load %arg8[%c0_12, %c0_13] : memref<1x32xf32, #tpu.memory_space<vmem>>, vector<1x32xf32>
    %16 = vector.broadcast %15 : vector<1x32xf32> to vector<8x32xf32>
    %17 = arith.addf %14, %16 : vector<8x32xf32>
    %c0_14 = arith.constant 0 : index
    %c0_15 = arith.constant 0 : index
    %18 = vector.load %arg5[%c0_14, %c0_15] : memref<32x32xf32, #tpu.memory_space<vmem>>, vector<32x32xf32>
    %19 = arith.truncf %18 : vector<32x32xf32> to vector<32x32xbf16>
    %cst_16 = arith.constant dense<0.000000e+00> : vector<8x32xf32>
    %20 = tpu.matmul %5, %19, %cst_16 {dimension_numbers = #tpu.dot_dimension_numbers<[1], [0], [0], [1], [0, 0, 1, 1], [], []>} : vector<8x32xbf16>, vector<32x32xbf16>, vector<8x32xf32> -> vector<8x32xf32>
    %c0_17 = arith.constant 0 : index
    %c0_18 = arith.constant 0 : index
    %21 = vector.load %arg9[%c0_17, %c0_18] : memref<1x32xf32, #tpu.memory_space<vmem>>, vector<1x32xf32>
    %22 = vector.broadcast %21 : vector<1x32xf32> to vector<8x32xf32>
    %23 = arith.addf %20, %22 : vector<8x32xf32>
    %24 = vector.extract_strided_slice %11 {offsets = [0, 0], sizes = [8, 8], strides = [1, 1]} : vector<8x32xf32> to vector<8x8xf32>
    %25 = arith.truncf %24 : vector<8x8xf32> to vector<8x8xbf16>
    %26 = vector.extract_strided_slice %17 {offsets = [0, 0], sizes = [8, 8], strides = [1, 1]} : vector<8x32xf32> to vector<8x8xf32>
    %27 = arith.truncf %26 : vector<8x8xf32> to vector<8x8xbf16>
    %28 = vector.extract_strided_slice %23 {offsets = [0, 0], sizes = [8, 8], strides = [1, 1]} : vector<8x32xf32> to vector<8x8xf32>
    %29 = arith.truncf %28 : vector<8x8xf32> to vector<8x8xbf16>
    %cst_19 = arith.constant dense<0.000000e+00> : vector<8x8xf32>
    %30 = tpu.matmul %25, %27, %cst_19 {dimension_numbers = #tpu.dot_dimension_numbers<[1], [1], [0], [0], [0, 0, 1, 0], [], []>} : vector<8x8xbf16>, vector<8x8xbf16>, vector<8x8xf32> -> vector<8x8xf32>
    %cst_20 = arith.constant 0.353553385 : f32
    %31 = vector.broadcast %cst_20 : f32 to vector<8x8xf32>
    %32 = arith.mulf %30, %31 : vector<8x8xf32>
    %33 = vector.broadcast %3 : vector<1x8xf32> to vector<8x8xf32>
    %34 = arith.addf %32, %33 : vector<8x8xf32>
    %cst_21 = arith.constant dense<0xFF800000> : vector<8xf32>
    %35 = vector.multi_reduction <maximumf>, %34, %cst_21 [1] : vector<8x8xf32> to vector<8xf32>
    %36 = vector.shape_cast %35 : vector<8xf32> to vector<8x1xf32>
    %37 = vector.broadcast %36 : vector<8x1xf32> to vector<8x8xf32>
    %38 = arith.subf %34, %37 : vector<8x8xf32>
    %39 = math.exp %38 : vector<8x8xf32>
    %cst_22 = arith.constant dense<0.000000e+00> : vector<8xf32>
    %40 = vector.multi_reduction <add>, %39, %cst_22 [1] : vector<8x8xf32> to vector<8xf32>
    %41 = vector.shape_cast %40 : vector<8xf32> to vector<8x1xf32>
    %42 = tpu.reciprocal %41 {approx = true} : vector<8x1xf32> -> vector<8x1xf32>
    %43 = vector.broadcast %42 : vector<8x1xf32> to vector<8x8xf32>
    %44 = arith.mulf %39, %43 : vector<8x8xf32>
    %45 = arith.truncf %44 : vector<8x8xf32> to vector<8x8xbf16>
    %cst_23 = arith.constant dense<0.000000e+00> : vector<8x8xf32>
    %46 = tpu.matmul %45, %29, %cst_23 {dimension_numbers = #tpu.dot_dimension_numbers<[1], [0], [0], [1], [0, 0, 1, 1], [], []>} : vector<8x8xbf16>, vector<8x8xbf16>, vector<8x8xf32> -> vector<8x8xf32>
    %47 = arith.truncf %46 : vector<8x8xf32> to vector<8x8xbf16>
    %c0_24 = arith.constant 0 : index
    %c0_25 = arith.constant 0 : index
    %48 = vector.load %arg6[%c0_24, %c0_25] : memref<32x32xf32, #tpu.memory_space<vmem>>, vector<8x32xf32>
    %49 = arith.truncf %48 : vector<8x32xf32> to vector<8x32xbf16>
    %cst_26 = arith.constant dense<0.000000e+00> : vector<8x32xf32>
    %50 = tpu.matmul %47, %49, %cst_26 {dimension_numbers = #tpu.dot_dimension_numbers<[1], [0], [0], [1], [0, 0, 1, 1], [], []>} : vector<8x8xbf16>, vector<8x32xbf16>, vector<8x32xf32> -> vector<8x32xf32>
    %51 = vector.extract_strided_slice %11 {offsets = [0, 8], sizes = [8, 8], strides = [1, 1]} : vector<8x32xf32> to vector<8x8xf32>
    %52 = arith.truncf %51 : vector<8x8xf32> to vector<8x8xbf16>
    %53 = vector.extract_strided_slice %17 {offsets = [0, 8], sizes = [8, 8], strides = [1, 1]} : vector<8x32xf32> to vector<8x8xf32>
    %54 = arith.truncf %53 : vector<8x8xf32> to vector<8x8xbf16>
    %55 = vector.extract_strided_slice %23 {offsets = [0, 8], sizes = [8, 8], strides = [1, 1]} : vector<8x32xf32> to vector<8x8xf32>
    %56 = arith.truncf %55 : vector<8x8xf32> to vector<8x8xbf16>
    %cst_27 = arith.constant dense<0.000000e+00> : vector<8x8xf32>
    %57 = tpu.matmul %52, %54, %cst_27 {dimension_numbers = #tpu.dot_dimension_numbers<[1], [1], [0], [0], [0, 0, 1, 0], [], []>} : vector<8x8xbf16>, vector<8x8xbf16>, vector<8x8xf32> -> vector<8x8xf32>
    %cst_28 = arith.constant 0.353553385 : f32
    %58 = vector.broadcast %cst_28 : f32 to vector<8x8xf32>
    %59 = arith.mulf %57, %58 : vector<8x8xf32>
    %60 = vector.broadcast %3 : vector<1x8xf32> to vector<8x8xf32>
    %61 = arith.addf %59, %60 : vector<8x8xf32>
    %cst_29 = arith.constant dense<0xFF800000> : vector<8xf32>
    %62 = vector.multi_reduction <maximumf>, %61, %cst_29 [1] : vector<8x8xf32> to vector<8xf32>
    %63 = vector.shape_cast %62 : vector<8xf32> to vector<8x1xf32>
    %64 = vector.broadcast %63 : vector<8x1xf32> to vector<8x8xf32>
    %65 = arith.subf %61, %64 : vector<8x8xf32>
    %66 = math.exp %65 : vector<8x8xf32>
    %cst_30 = arith.constant dense<0.000000e+00> : vector<8xf32>
    %67 = vector.multi_reduction <add>, %66, %cst_30 [1] : vector<8x8xf32> to vector<8xf32>
    %68 = vector.shape_cast %67 : vector<8xf32> to vector<8x1xf32>
    %69 = tpu.reciprocal %68 {approx = true} : vector<8x1xf32> -> vector<8x1xf32>
    %70 = vector.broadcast %69 : vector<8x1xf32> to vector<8x8xf32>
    %71 = arith.mulf %66, %70 : vector<8x8xf32>
    %72 = arith.truncf %71 : vector<8x8xf32> to vector<8x8xbf16>
    %cst_31 = arith.constant dense<0.000000e+00> : vector<8x8xf32>
    %73 = tpu.matmul %72, %56, %cst_31 {dimension_numbers = #tpu.dot_dimension_numbers<[1], [0], [0], [1], [0, 0, 1, 1], [], []>} : vector<8x8xbf16>, vector<8x8xbf16>, vector<8x8xf32> -> vector<8x8xf32>
    %74 = arith.truncf %73 : vector<8x8xf32> to vector<8x8xbf16>
    %c8 = arith.constant 8 : index
    %c0_32 = arith.constant 0 : index
    %75 = vector.load %arg6[%c8, %c0_32] : memref<32x32xf32, #tpu.memory_space<vmem>>, vector<8x32xf32>
    %76 = arith.truncf %75 : vector<8x32xf32> to vector<8x32xbf16>
    %cst_33 = arith.constant dense<0.000000e+00> : vector<8x32xf32>
    %77 = tpu.matmul %74, %76, %cst_33 {dimension_numbers = #tpu.dot_dimension_numbers<[1], [0], [0], [1], [0, 0, 1, 1], [], []>} : vector<8x8xbf16>, vector<8x32xbf16>, vector<8x32xf32> -> vector<8x32xf32>
    %78 = arith.addf %50, %77 : vector<8x32xf32>
    %79 = vector.extract_strided_slice %11 {offsets = [0, 16], sizes = [8, 8], strides = [1, 1]} : vector<8x32xf32> to vector<8x8xf32>
    %80 = arith.truncf %79 : vector<8x8xf32> to vector<8x8xbf16>
    %81 = vector.extract_strided_slice %17 {offsets = [0, 16], sizes = [8, 8], strides = [1, 1]} : vector<8x32xf32> to vector<8x8xf32>
    %82 = arith.truncf %81 : vector<8x8xf32> to vector<8x8xbf16>
    %83 = vector.extract_strided_slice %23 {offsets = [0, 16], sizes = [8, 8], strides = [1, 1]} : vector<8x32xf32> to vector<8x8xf32>
    %84 = arith.truncf %83 : vector<8x8xf32> to vector<8x8xbf16>
    %cst_34 = arith.constant dense<0.000000e+00> : vector<8x8xf32>
    %85 = tpu.matmul %80, %82, %cst_34 {dimension_numbers = #tpu.dot_dimension_numbers<[1], [1], [0], [0], [0, 0, 1, 0], [], []>} : vector<8x8xbf16>, vector<8x8xbf16>, vector<8x8xf32> -> vector<8x8xf32>
    %cst_35 = arith.constant 0.353553385 : f32
    %86 = vector.broadcast %cst_35 : f32 to vector<8x8xf32>
    %87 = arith.mulf %85, %86 : vector<8x8xf32>
    %88 = vector.broadcast %3 : vector<1x8xf32> to vector<8x8xf32>
    %89 = arith.addf %87, %88 : vector<8x8xf32>
    %cst_36 = arith.constant dense<0xFF800000> : vector<8xf32>
    %90 = vector.multi_reduction <maximumf>, %89, %cst_36 [1] : vector<8x8xf32> to vector<8xf32>
    %91 = vector.shape_cast %90 : vector<8xf32> to vector<8x1xf32>
    %92 = vector.broadcast %91 : vector<8x1xf32> to vector<8x8xf32>
    %93 = arith.subf %89, %92 : vector<8x8xf32>
    %94 = math.exp %93 : vector<8x8xf32>
    %cst_37 = arith.constant dense<0.000000e+00> : vector<8xf32>
    %95 = vector.multi_reduction <add>, %94, %cst_37 [1] : vector<8x8xf32> to vector<8xf32>
    %96 = vector.shape_cast %95 : vector<8xf32> to vector<8x1xf32>
    %97 = tpu.reciprocal %96 {approx = true} : vector<8x1xf32> -> vector<8x1xf32>
    %98 = vector.broadcast %97 : vector<8x1xf32> to vector<8x8xf32>
    %99 = arith.mulf %94, %98 : vector<8x8xf32>
    %100 = arith.truncf %99 : vector<8x8xf32> to vector<8x8xbf16>
    %cst_38 = arith.constant dense<0.000000e+00> : vector<8x8xf32>
    %101 = tpu.matmul %100, %84, %cst_38 {dimension_numbers = #tpu.dot_dimension_numbers<[1], [0], [0], [1], [0, 0, 1, 1], [], []>} : vector<8x8xbf16>, vector<8x8xbf16>, vector<8x8xf32> -> vector<8x8xf32>
    %102 = arith.truncf %101 : vector<8x8xf32> to vector<8x8xbf16>
    %c16 = arith.constant 16 : index
    %c0_39 = arith.constant 0 : index
    %103 = vector.load %arg6[%c16, %c0_39] : memref<32x32xf32, #tpu.memory_space<vmem>>, vector<8x32xf32>
    %104 = arith.truncf %103 : vector<8x32xf32> to vector<8x32xbf16>
    %cst_40 = arith.constant dense<0.000000e+00> : vector<8x32xf32>
    %105 = tpu.matmul %102, %104, %cst_40 {dimension_numbers = #tpu.dot_dimension_numbers<[1], [0], [0], [1], [0, 0, 1, 1], [], []>} : vector<8x8xbf16>, vector<8x32xbf16>, vector<8x32xf32> -> vector<8x32xf32>
    %106 = arith.addf %78, %105 : vector<8x32xf32>
    %107 = vector.extract_strided_slice %11 {offsets = [0, 24], sizes = [8, 8], strides = [1, 1]} : vector<8x32xf32> to vector<8x8xf32>
    %108 = arith.truncf %107 : vector<8x8xf32> to vector<8x8xbf16>
    %109 = vector.extract_strided_slice %17 {offsets = [0, 24], sizes = [8, 8], strides = [1, 1]} : vector<8x32xf32> to vector<8x8xf32>
    %110 = arith.truncf %109 : vector<8x8xf32> to vector<8x8xbf16>
    %111 = vector.extract_strided_slice %23 {offsets = [0, 24], sizes = [8, 8], strides = [1, 1]} : vector<8x32xf32> to vector<8x8xf32>
    %112 = arith.truncf %111 : vector<8x8xf32> to vector<8x8xbf16>
    %cst_41 = arith.constant dense<0.000000e+00> : vector<8x8xf32>
    %113 = tpu.matmul %108, %110, %cst_41 {dimension_numbers = #tpu.dot_dimension_numbers<[1], [1], [0], [0], [0, 0, 1, 0], [], []>} : vector<8x8xbf16>, vector<8x8xbf16>, vector<8x8xf32> -> vector<8x8xf32>
    %cst_42 = arith.constant 0.353553385 : f32
    %114 = vector.broadcast %cst_42 : f32 to vector<8x8xf32>
    %115 = arith.mulf %113, %114 : vector<8x8xf32>
    %116 = vector.broadcast %3 : vector<1x8xf32> to vector<8x8xf32>
    %117 = arith.addf %115, %116 : vector<8x8xf32>
    %cst_43 = arith.constant dense<0xFF800000> : vector<8xf32>
    %118 = vector.multi_reduction <maximumf>, %117, %cst_43 [1] : vector<8x8xf32> to vector<8xf32>
    %119 = vector.shape_cast %118 : vector<8xf32> to vector<8x1xf32>
    %120 = vector.broadcast %119 : vector<8x1xf32> to vector<8x8xf32>
    %121 = arith.subf %117, %120 : vector<8x8xf32>
    %122 = math.exp %121 : vector<8x8xf32>
    %cst_44 = arith.constant dense<0.000000e+00> : vector<8xf32>
    %123 = vector.multi_reduction <add>, %122, %cst_44 [1] : vector<8x8xf32> to vector<8xf32>
    %124 = vector.shape_cast %123 : vector<8xf32> to vector<8x1xf32>
    %125 = tpu.reciprocal %124 {approx = true} : vector<8x1xf32> -> vector<8x1xf32>
    %126 = vector.broadcast %125 : vector<8x1xf32> to vector<8x8xf32>
    %127 = arith.mulf %122, %126 : vector<8x8xf32>
    %128 = arith.truncf %127 : vector<8x8xf32> to vector<8x8xbf16>
    %cst_45 = arith.constant dense<0.000000e+00> : vector<8x8xf32>
    %129 = tpu.matmul %128, %112, %cst_45 {dimension_numbers = #tpu.dot_dimension_numbers<[1], [0], [0], [1], [0, 0, 1, 1], [], []>} : vector<8x8xbf16>, vector<8x8xbf16>, vector<8x8xf32> -> vector<8x8xf32>
    %130 = arith.truncf %129 : vector<8x8xf32> to vector<8x8xbf16>
    %c24 = arith.constant 24 : index
    %c0_46 = arith.constant 0 : index
    %131 = vector.load %arg6[%c24, %c0_46] : memref<32x32xf32, #tpu.memory_space<vmem>>, vector<8x32xf32>
    %132 = arith.truncf %131 : vector<8x32xf32> to vector<8x32xbf16>
    %cst_47 = arith.constant dense<0.000000e+00> : vector<8x32xf32>
    %133 = tpu.matmul %130, %132, %cst_47 {dimension_numbers = #tpu.dot_dimension_numbers<[1], [0], [0], [1], [0, 0, 1, 1], [], []>} : vector<8x8xbf16>, vector<8x32xbf16>, vector<8x32xf32> -> vector<8x32xf32>
    %134 = arith.addf %106, %133 : vector<8x32xf32>
    %c0_48 = arith.constant 0 : index
    %c0_49 = arith.constant 0 : index
    %135 = vector.load %arg10[%c0_48, %c0_49] : memref<1x32xf32, #tpu.memory_space<vmem>>, vector<1x32xf32>
    %136 = vector.broadcast %135 : vector<1x32xf32> to vector<8x32xf32>
    %137 = arith.addf %134, %136 : vector<8x32xf32>
    %c0_50 = arith.constant 0 : index
    %c0_51 = arith.constant 0 : index
    %138 = vector.load %arg11[%c0_50, %c0_51] : memref<1x32xf32, #tpu.memory_space<vmem>>, vector<1x32xf32>
    %c0_52 = arith.constant 0 : index
    %c0_53 = arith.constant 0 : index
    %139 = vector.load %arg12[%c0_52, %c0_53] : memref<1x32xf32, #tpu.memory_space<vmem>>, vector<1x32xf32>
    %140 = arith.addf %1, %137 : vector<8x32xf32>
    %cst_54 = arith.constant dense<0.000000e+00> : vector<8xf32>
    %141 = vector.multi_reduction <add>, %140, %cst_54 [1] : vector<8x32xf32> to vector<8xf32>
    %142 = vector.shape_cast %141 : vector<8xf32> to vector<8x1xf32>
    %cst_55 = arith.constant 3.200000e+01 : f32
    %143 = vector.broadcast %cst_55 : f32 to vector<8x1xf32>
    %144 = arith.divf %142, %143 : vector<8x1xf32>
    %145 = vector.broadcast %144 : vector<8x1xf32> to vector<8x32xf32>
    %146 = arith.subf %140, %145 : vector<8x32xf32>
    %147 = arith.mulf %146, %146 : vector<8x32xf32>
    %cst_56 = arith.constant dense<0.000000e+00> : vector<8xf32>
    %148 = vector.multi_reduction <add>, %147, %cst_56 [1] : vector<8x32xf32> to vector<8xf32>
    %149 = vector.shape_cast %148 : vector<8xf32> to vector<8x1xf32>
    %cst_57 = arith.constant 3.200000e+01 : f32
    %150 = vector.broadcast %cst_57 : f32 to vector<8x1xf32>
    %151 = arith.divf %149, %150 : vector<8x1xf32>
    %152 = vector.broadcast %144 : vector<8x1xf32> to vector<8x32xf32>
    %153 = arith.subf %140, %152 : vector<8x32xf32>
    %cst_58 = arith.constant 9.99999974E-6 : f32
    %154 = vector.broadcast %cst_58 : f32 to vector<8x1xf32>
    %155 = arith.addf %151, %154 : vector<8x1xf32>
    %156 = math.rsqrt %155 : vector<8x1xf32>
    %157 = vector.broadcast %156 : vector<8x1xf32> to vector<8x32xf32>
    %158 = arith.mulf %153, %157 : vector<8x32xf32>
    %159 = vector.broadcast %138 : vector<1x32xf32> to vector<8x32xf32>
    %160 = arith.mulf %158, %159 : vector<8x32xf32>
    %161 = vector.broadcast %139 : vector<1x32xf32> to vector<8x32xf32>
    %162 = arith.addf %160, %161 : vector<8x32xf32>
    %c0_59 = arith.constant 0 : index
    %c0_60 = arith.constant 0 : index
    %c0_61 = arith.constant 0 : index
    %163 = vector.load %arg13[%c0_59, %c0_60, %c0_61] : memref<1x8x32xf32, #tpu.memory_space<vmem>>, vector<1x8x32xf32>
    %164 = vector.shape_cast %163 : vector<1x8x32xf32> to vector<8x32xf32>
    %165 = vector.shape_cast %162 : vector<8x32xf32> to vector<1x8x32xf32>
    tpu.vector_store %arg13[%c0_59, %c0_60, %c0_61], %165 {strides = array<i32>} : memref<1x8x32xf32, #tpu.memory_space<vmem>>, vector<1x8x32xf32>,
    return
  }
  func.func @transform_0(%arg0: i32) -> (i32, i32, i32) {
    %c0_i32 = arith.constant 0 : i32
    %c0_i32_0 = arith.constant 0 : i32
    %c0_i32_1 = arith.constant 0 : i32
    return %arg0, %c0_i32, %c0_i32_0 : i32, i32, i32
  }
  func.func @transform_1(%arg0: i32) -> (i32, i32, i32) {
    %c0_i32 = arith.constant 0 : i32
    %c0_i32_0 = arith.constant 0 : i32
    %c0_i32_1 = arith.constant 0 : i32
    return %arg0, %c0_i32, %c0_i32_0 : i32, i32, i32
  }
  func.func @transform_2(%arg0: i32) -> (i32, i32) {
    %c0_i32 = arith.constant 0 : i32
    %c0_i32_0 = arith.constant 0 : i32
    %c0_i32_1 = arith.constant 0 : i32
    return %c0_i32, %c0_i32_0 : i32, i32
  }
  func.func @transform_3(%arg0: i32) -> (i32, i32) {
    %c0_i32 = arith.constant 0 : i32
    %c0_i32_0 = arith.constant 0 : i32
    %c0_i32_1 = arith.constant 0 : i32
    return %c0_i32, %c0_i32_0 : i32, i32
  }
  func.func @transform_4(%arg0: i32) -> (i32, i32) {
    %c0_i32 = arith.constant 0 : i32
    %c0_i32_0 = arith.constant 0 : i32
    %c0_i32_1 = arith.constant 0 : i32
    return %c0_i32, %c0_i32_0 : i32, i32
  }
  func.func @transform_5(%arg0: i32) -> (i32, i32) {
    %c0_i32 = arith.constant 0 : i32
    %c0_i32_0 = arith.constant 0 : i32
    %c0_i32_1 = arith.constant 0 : i32
    return %c0_i32, %c0_i32_0 : i32, i32
  }
  func.func @transform_6(%arg0: i32) -> (i32, i32) {
    %c0_i32 = arith.constant 0 : i32
    %c0_i32_0 = arith.constant 0 : i32
    %c0_i32_1 = arith.constant 0 : i32
    return %c0_i32, %c0_i32_0 : i32, i32
  }
  func.func @transform_7(%arg0: i32) -> (i32, i32) {
    %c0_i32 = arith.constant 0 : i32
    %c0_i32_0 = arith.constant 0 : i32
    %c0_i32_1 = arith.constant 0 : i32
    return %c0_i32, %c0_i32_0 : i32, i32
  }
  func.func @transform_8(%arg0: i32) -> (i32, i32) {
    %c0_i32 = arith.constant 0 : i32
    %c0_i32_0 = arith.constant 0 : i32
    %c0_i32_1 = arith.constant 0 : i32
    return %c0_i32, %c0_i32_0 : i32, i32
  }
  func.func @transform_9(%arg0: i32) -> (i32, i32) {
    %c0_i32 = arith.constant 0 : i32
    %c0_i32_0 = arith.constant 0 : i32
    %c0_i32_1 = arith.constant 0 : i32
    return %c0_i32, %c0_i32_0 : i32, i32
  }
  func.func @transform_10(%arg0: i32) -> (i32, i32) {
    %c0_i32 = arith.constant 0 : i32
    %c0_i32_0 = arith.constant 0 : i32
    %c0_i32_1 = arith.constant 0 : i32
    return %c0_i32, %c0_i32_0 : i32, i32
  }
  func.func @transform_11(%arg0: i32) -> (i32, i32) {
    %c0_i32 = arith.constant 0 : i32
    %c0_i32_0 = arith.constant 0 : i32
    %c0_i32_1 = arith.constant 0 : i32
    return %c0_i32, %c0_i32_0 : i32, i32
  }
  func.func @transform_12(%arg0: i32) -> (i32, i32, i32) {
    %c0_i32 = arith.constant 0 : i32
    %c0_i32_0 = arith.constant 0 : i32
    %c0_i32_1 = arith.constant 0 : i32
    return %arg0, %c0_i32, %c0_i32_0 : i32, i32, i32
  }
}

module attributes {stable_mosaic.version = 11 : i64} {
  func.func @_dense_kernel(%arg0: i32, %arg1: memref<16x32xf32, #tpu.memory_space<vmem>>, %arg2: memref<32x32xf32, #tpu.memory_space<vmem>>, %arg3: memref<1x32xf32, #tpu.memory_space<vmem>>, %arg4: memref<16x32xf32, #tpu.memory_space<vmem>>) attributes {dimension_semantics = [#tpu.dimension_semantics<parallel>], iteration_bounds = array<i64: 1>, scalar_prefetch = 0 : i64, scratch_operands = 0 : i64, tpu.core_type = #tpu.core_type<tc>, window_params = [{transform_indices = @transform_0, window_bounds = array<i64: 16, 32>}, {pipeline_mode = #tpu.pipeline_mode<synchronous>, transform_indices = @transform_1, window_bounds = array<i64: 32, 32>}, {pipeline_mode = #tpu.pipeline_mode<synchronous>, transform_indices = @transform_2, window_bounds = array<i64: 1, 32>}, {transform_indices = @transform_3, window_bounds = array<i64: 16, 32>}]} {
    %c0 = arith.constant 0 : index
    %c0_0 = arith.constant 0 : index
    %0 = vector.load %arg1[%c0, %c0_0] : memref<16x32xf32, #tpu.memory_space<vmem>>, vector<16x32xf32>
    %1 = arith.truncf %0 : vector<16x32xf32> to vector<16x32xbf16>
    %c0_1 = arith.constant 0 : index
    %c0_2 = arith.constant 0 : index
    %2 = vector.load %arg2[%c0_1, %c0_2] : memref<32x32xf32, #tpu.memory_space<vmem>>, vector<32x32xf32>
    %3 = arith.truncf %2 : vector<32x32xf32> to vector<32x32xbf16>
    %cst = arith.constant dense<0.000000e+00> : vector<16x32xf32>
    %4 = tpu.matmul %1, %3, %cst {dimension_numbers = #tpu.dot_dimension_numbers<[1], [0], [0], [1], [0, 0, 1, 1], [], []>} : vector<16x32xbf16>, vector<32x32xbf16>, vector<16x32xf32> -> vector<16x32xf32>
    %c0_3 = arith.constant 0 : index
    %c0_4 = arith.constant 0 : index
    %5 = vector.load %arg3[%c0_3, %c0_4] : memref<1x32xf32, #tpu.memory_space<vmem>>, vector<1x32xf32>
    %6 = vector.broadcast %5 : vector<1x32xf32> to vector<16x32xf32>
    %7 = arith.addf %4, %6 : vector<16x32xf32>
    %c0_5 = arith.constant 0 : index
    %c0_6 = arith.constant 0 : index
    %8 = vector.load %arg4[%c0_5, %c0_6] : memref<16x32xf32, #tpu.memory_space<vmem>>, vector<16x32xf32>
    tpu.vector_store %arg4[%c0_5, %c0_6], %7 {strides = array<i32>} : memref<16x32xf32, #tpu.memory_space<vmem>>, vector<16x32xf32>,
    return
  }
  func.func @transform_0(%arg0: i32) -> (i32, i32) {
    %c0_i32 = arith.constant 0 : i32
    %c0_i32_0 = arith.constant 0 : i32
    return %arg0, %c0_i32 : i32, i32
  }
  func.func @transform_1(%arg0: i32) -> (i32, i32) {
    %c0_i32 = arith.constant 0 : i32
    %c0_i32_0 = arith.constant 0 : i32
    %c0_i32_1 = arith.constant 0 : i32
    return %c0_i32, %c0_i32_0 : i32, i32
  }
  func.func @transform_2(%arg0: i32) -> (i32, i32) {
    %c0_i32 = arith.constant 0 : i32
    %c0_i32_0 = arith.constant 0 : i32
    %c0_i32_1 = arith.constant 0 : i32
    return %c0_i32, %c0_i32_0 : i32, i32
  }
  func.func @transform_3(%arg0: i32) -> (i32, i32) {
    %c0_i32 = arith.constant 0 : i32
    %c0_i32_0 = arith.constant 0 : i32
    return %arg0, %c0_i32 : i32, i32
  }
}

module attributes {stable_mosaic.version = 11 : i64} {
  func.func @_cross_ffn_block_kernel(%arg0: i32, %arg1: memref<1x8x32xf32, #tpu.memory_space<vmem>>, %arg2: memref<1x8x32xf32, #tpu.memory_space<vmem>>, %arg3: memref<32x32xf32, #tpu.memory_space<vmem>>, %arg4: memref<32x32xf32, #tpu.memory_space<vmem>>, %arg5: memref<32x32xf32, #tpu.memory_space<vmem>>, %arg6: memref<32x32xf32, #tpu.memory_space<vmem>>, %arg7: memref<1x32xf32, #tpu.memory_space<vmem>>, %arg8: memref<1x32xf32, #tpu.memory_space<vmem>>, %arg9: memref<1x32xf32, #tpu.memory_space<vmem>>, %arg10: memref<1x32xf32, #tpu.memory_space<vmem>>, %arg11: memref<1x32xf32, #tpu.memory_space<vmem>>, %arg12: memref<1x32xf32, #tpu.memory_space<vmem>>, %arg13: memref<32x64xf32, #tpu.memory_space<vmem>>, %arg14: memref<1x64xf32, #tpu.memory_space<vmem>>, %arg15: memref<64x32xf32, #tpu.memory_space<vmem>>, %arg16: memref<1x32xf32, #tpu.memory_space<vmem>>, %arg17: memref<1x32xf32, #tpu.memory_space<vmem>>, %arg18: memref<1x32xf32, #tpu.memory_space<vmem>>, %arg19: memref<1x8x32xf32, #tpu.memory_space<vmem>>) attributes {dimension_semantics = [#tpu.dimension_semantics<parallel>], iteration_bounds = array<i64: 2>, scalar_prefetch = 0 : i64, scratch_operands = 0 : i64, tpu.core_type = #tpu.core_type<tc>, window_params = [{transform_indices = @transform_0, window_bounds = array<i64: 1, 8, 32>}, {transform_indices = @transform_1, window_bounds = array<i64: 1, 8, 32>}, {pipeline_mode = #tpu.pipeline_mode<synchronous>, transform_indices = @transform_2, window_bounds = array<i64: 32, 32>}, {pipeline_mode = #tpu.pipeline_mode<synchronous>, transform_indices = @transform_3, window_bounds = array<i64: 32, 32>}, {pipeline_mode = #tpu.pipeline_mode<synchronous>, transform_indices = @transform_4, window_bounds = array<i64: 32, 32>}, {pipeline_mode = #tpu.pipeline_mode<synchronous>, transform_indices = @transform_5, window_bounds = array<i64: 32, 32>}, {pipeline_mode = #tpu.pipeline_mode<synchronous>, transform_indices = @transform_6, window_bounds = array<i64: 1, 32>}, {pipeline_mode = #tpu.pipeline_mode<synchronous>, transform_indices = @transform_7, window_bounds = array<i64: 1, 32>}, {pipeline_mode = #tpu.pipeline_mode<synchronous>, transform_indices = @transform_8, window_bounds = array<i64: 1, 32>}, {pipeline_mode = #tpu.pipeline_mode<synchronous>, transform_indices = @transform_9, window_bounds = array<i64: 1, 32>}, {pipeline_mode = #tpu.pipeline_mode<synchronous>, transform_indices = @transform_10, window_bounds = array<i64: 1, 32>}, {pipeline_mode = #tpu.pipeline_mode<synchronous>, transform_indices = @transform_11, window_bounds = array<i64: 1, 32>}, {pipeline_mode = #tpu.pipeline_mode<synchronous>, transform_indices = @transform_12, window_bounds = array<i64: 32, 64>}, {pipeline_mode = #tpu.pipeline_mode<synchronous>, transform_indices = @transform_13, window_bounds = array<i64: 1, 64>}, {pipeline_mode = #tpu.pipeline_mode<synchronous>, transform_indices = @transform_14, window_bounds = array<i64: 64, 32>}, {pipeline_mode = #tpu.pipeline_mode<synchronous>, transform_indices = @transform_15, window_bounds = array<i64: 1, 32>}, {pipeline_mode = #tpu.pipeline_mode<synchronous>, transform_indices = @transform_16, window_bounds = array<i64: 1, 32>}, {pipeline_mode = #tpu.pipeline_mode<synchronous>, transform_indices = @transform_17, window_bounds = array<i64: 1, 32>}, {transform_indices = @transform_18, window_bounds = array<i64: 1, 8, 32>}]} {
    %c0 = arith.constant 0 : index
    %c0_0 = arith.constant 0 : index
    %c0_1 = arith.constant 0 : index
    %0 = vector.load %arg1[%c0, %c0_0, %c0_1] : memref<1x8x32xf32, #tpu.memory_space<vmem>>, vector<1x8x32xf32>
    %1 = vector.shape_cast %0 : vector<1x8x32xf32> to vector<8x32xf32>
    %c0_2 = arith.constant 0 : index
    %c0_3 = arith.constant 0 : index
    %c0_4 = arith.constant 0 : index
    %2 = vector.load %arg2[%c0_2, %c0_3, %c0_4] : memref<1x8x32xf32, #tpu.memory_space<vmem>>, vector<1x8x32xf32>
    %3 = vector.shape_cast %2 : vector<1x8x32xf32> to vector<8x32xf32>
    %4 = arith.truncf %1 : vector<8x32xf32> to vector<8x32xbf16>
    %5 = arith.truncf %3 : vector<8x32xf32> to vector<8x32xbf16>
    %c0_5 = arith.constant 0 : index
    %c0_6 = arith.constant 0 : index
    %6 = vector.load %arg3[%c0_5, %c0_6] : memref<32x32xf32, #tpu.memory_space<vmem>>, vector<32x32xf32>
    %7 = arith.truncf %6 : vector<32x32xf32> to vector<32x32xbf16>
    %cst = arith.constant dense<0.000000e+00> : vector<8x32xf32>
    %8 = tpu.matmul %4, %7, %cst {dimension_numbers = #tpu.dot_dimension_numbers<[1], [0], [0], [1], [0, 0, 1, 1], [], []>} : vector<8x32xbf16>, vector<32x32xbf16>, vector<8x32xf32> -> vector<8x32xf32>
    %c0_7 = arith.constant 0 : index
    %c0_8 = arith.constant 0 : index
    %9 = vector.load %arg7[%c0_7, %c0_8] : memref<1x32xf32, #tpu.memory_space<vmem>>, vector<1x32xf32>
    %10 = vector.broadcast %9 : vector<1x32xf32> to vector<8x32xf32>
    %11 = arith.addf %8, %10 : vector<8x32xf32>
    %c0_9 = arith.constant 0 : index
    %c0_10 = arith.constant 0 : index
    %12 = vector.load %arg4[%c0_9, %c0_10] : memref<32x32xf32, #tpu.memory_space<vmem>>, vector<32x32xf32>
    %13 = arith.truncf %12 : vector<32x32xf32> to vector<32x32xbf16>
    %cst_11 = arith.constant dense<0.000000e+00> : vector<8x32xf32>
    %14 = tpu.matmul %5, %13, %cst_11 {dimension_numbers = #tpu.dot_dimension_numbers<[1], [0], [0], [1], [0, 0, 1, 1], [], []>} : vector<8x32xbf16>, vector<32x32xbf16>, vector<8x32xf32> -> vector<8x32xf32>
    %c0_12 = arith.constant 0 : index
    %c0_13 = arith.constant 0 : index
    %15 = vector.load %arg8[%c0_12, %c0_13] : memref<1x32xf32, #tpu.memory_space<vmem>>, vector<1x32xf32>
    %16 = vector.broadcast %15 : vector<1x32xf32> to vector<8x32xf32>
    %17 = arith.addf %14, %16 : vector<8x32xf32>
    %c0_14 = arith.constant 0 : index
    %c0_15 = arith.constant 0 : index
    %18 = vector.load %arg5[%c0_14, %c0_15] : memref<32x32xf32, #tpu.memory_space<vmem>>, vector<32x32xf32>
    %19 = arith.truncf %18 : vector<32x32xf32> to vector<32x32xbf16>
    %cst_16 = arith.constant dense<0.000000e+00> : vector<8x32xf32>
    %20 = tpu.matmul %5, %19, %cst_16 {dimension_numbers = #tpu.dot_dimension_numbers<[1], [0], [0], [1], [0, 0, 1, 1], [], []>} : vector<8x32xbf16>, vector<32x32xbf16>, vector<8x32xf32> -> vector<8x32xf32>
    %c0_17 = arith.constant 0 : index
    %c0_18 = arith.constant 0 : index
    %21 = vector.load %arg9[%c0_17, %c0_18] : memref<1x32xf32, #tpu.memory_space<vmem>>, vector<1x32xf32>
    %22 = vector.broadcast %21 : vector<1x32xf32> to vector<8x32xf32>
    %23 = arith.addf %20, %22 : vector<8x32xf32>
    %24 = vector.extract_strided_slice %11 {offsets = [0, 0], sizes = [8, 8], strides = [1, 1]} : vector<8x32xf32> to vector<8x8xf32>
    %25 = arith.truncf %24 : vector<8x8xf32> to vector<8x8xbf16>
    %26 = vector.extract_strided_slice %17 {offsets = [0, 0], sizes = [8, 8], strides = [1, 1]} : vector<8x32xf32> to vector<8x8xf32>
    %27 = arith.truncf %26 : vector<8x8xf32> to vector<8x8xbf16>
    %28 = vector.extract_strided_slice %23 {offsets = [0, 0], sizes = [8, 8], strides = [1, 1]} : vector<8x32xf32> to vector<8x8xf32>
    %29 = arith.truncf %28 : vector<8x8xf32> to vector<8x8xbf16>
    %cst_19 = arith.constant dense<0.000000e+00> : vector<8x8xf32>
    %30 = tpu.matmul %25, %27, %cst_19 {dimension_numbers = #tpu.dot_dimension_numbers<[1], [1], [0], [0], [0, 0, 1, 0], [], []>} : vector<8x8xbf16>, vector<8x8xbf16>, vector<8x8xf32> -> vector<8x8xf32>
    %cst_20 = arith.constant 0.353553385 : f32
    %31 = vector.broadcast %cst_20 : f32 to vector<8x8xf32>
    %32 = arith.mulf %30, %31 : vector<8x8xf32>
    %cst_21 = arith.constant dense<0xFF800000> : vector<8xf32>
    %33 = vector.multi_reduction <maximumf>, %32, %cst_21 [1] : vector<8x8xf32> to vector<8xf32>
    %34 = vector.shape_cast %33 : vector<8xf32> to vector<8x1xf32>
    %35 = vector.broadcast %34 : vector<8x1xf32> to vector<8x8xf32>
    %36 = arith.subf %32, %35 : vector<8x8xf32>
    %37 = math.exp %36 : vector<8x8xf32>
    %cst_22 = arith.constant dense<0.000000e+00> : vector<8xf32>
    %38 = vector.multi_reduction <add>, %37, %cst_22 [1] : vector<8x8xf32> to vector<8xf32>
    %39 = vector.shape_cast %38 : vector<8xf32> to vector<8x1xf32>
    %40 = tpu.reciprocal %39 {approx = true} : vector<8x1xf32> -> vector<8x1xf32>
    %41 = vector.broadcast %40 : vector<8x1xf32> to vector<8x8xf32>
    %42 = arith.mulf %37, %41 : vector<8x8xf32>
    %43 = arith.truncf %42 : vector<8x8xf32> to vector<8x8xbf16>
    %cst_23 = arith.constant dense<0.000000e+00> : vector<8x8xf32>
    %44 = tpu.matmul %43, %29, %cst_23 {dimension_numbers = #tpu.dot_dimension_numbers<[1], [0], [0], [1], [0, 0, 1, 1], [], []>} : vector<8x8xbf16>, vector<8x8xbf16>, vector<8x8xf32> -> vector<8x8xf32>
    %45 = arith.truncf %44 : vector<8x8xf32> to vector<8x8xbf16>
    %c0_24 = arith.constant 0 : index
    %c0_25 = arith.constant 0 : index
    %46 = vector.load %arg6[%c0_24, %c0_25] : memref<32x32xf32, #tpu.memory_space<vmem>>, vector<8x32xf32>
    %47 = arith.truncf %46 : vector<8x32xf32> to vector<8x32xbf16>
    %cst_26 = arith.constant dense<0.000000e+00> : vector<8x32xf32>
    %48 = tpu.matmul %45, %47, %cst_26 {dimension_numbers = #tpu.dot_dimension_numbers<[1], [0], [0], [1], [0, 0, 1, 1], [], []>} : vector<8x8xbf16>, vector<8x32xbf16>, vector<8x32xf32> -> vector<8x32xf32>
    %49 = vector.extract_strided_slice %11 {offsets = [0, 8], sizes = [8, 8], strides = [1, 1]} : vector<8x32xf32> to vector<8x8xf32>
    %50 = arith.truncf %49 : vector<8x8xf32> to vector<8x8xbf16>
    %51 = vector.extract_strided_slice %17 {offsets = [0, 8], sizes = [8, 8], strides = [1, 1]} : vector<8x32xf32> to vector<8x8xf32>
    %52 = arith.truncf %51 : vector<8x8xf32> to vector<8x8xbf16>
    %53 = vector.extract_strided_slice %23 {offsets = [0, 8], sizes = [8, 8], strides = [1, 1]} : vector<8x32xf32> to vector<8x8xf32>
    %54 = arith.truncf %53 : vector<8x8xf32> to vector<8x8xbf16>
    %cst_27 = arith.constant dense<0.000000e+00> : vector<8x8xf32>
    %55 = tpu.matmul %50, %52, %cst_27 {dimension_numbers = #tpu.dot_dimension_numbers<[1], [1], [0], [0], [0, 0, 1, 0], [], []>} : vector<8x8xbf16>, vector<8x8xbf16>, vector<8x8xf32> -> vector<8x8xf32>
    %cst_28 = arith.constant 0.353553385 : f32
    %56 = vector.broadcast %cst_28 : f32 to vector<8x8xf32>
    %57 = arith.mulf %55, %56 : vector<8x8xf32>
    %cst_29 = arith.constant dense<0xFF800000> : vector<8xf32>
    %58 = vector.multi_reduction <maximumf>, %57, %cst_29 [1] : vector<8x8xf32> to vector<8xf32>
    %59 = vector.shape_cast %58 : vector<8xf32> to vector<8x1xf32>
    %60 = vector.broadcast %59 : vector<8x1xf32> to vector<8x8xf32>
    %61 = arith.subf %57, %60 : vector<8x8xf32>
    %62 = math.exp %61 : vector<8x8xf32>
    %cst_30 = arith.constant dense<0.000000e+00> : vector<8xf32>
    %63 = vector.multi_reduction <add>, %62, %cst_30 [1] : vector<8x8xf32> to vector<8xf32>
    %64 = vector.shape_cast %63 : vector<8xf32> to vector<8x1xf32>
    %65 = tpu.reciprocal %64 {approx = true} : vector<8x1xf32> -> vector<8x1xf32>
    %66 = vector.broadcast %65 : vector<8x1xf32> to vector<8x8xf32>
    %67 = arith.mulf %62, %66 : vector<8x8xf32>
    %68 = arith.truncf %67 : vector<8x8xf32> to vector<8x8xbf16>
    %cst_31 = arith.constant dense<0.000000e+00> : vector<8x8xf32>
    %69 = tpu.matmul %68, %54, %cst_31 {dimension_numbers = #tpu.dot_dimension_numbers<[1], [0], [0], [1], [0, 0, 1, 1], [], []>} : vector<8x8xbf16>, vector<8x8xbf16>, vector<8x8xf32> -> vector<8x8xf32>
    %70 = arith.truncf %69 : vector<8x8xf32> to vector<8x8xbf16>
    %c8 = arith.constant 8 : index
    %c0_32 = arith.constant 0 : index
    %71 = vector.load %arg6[%c8, %c0_32] : memref<32x32xf32, #tpu.memory_space<vmem>>, vector<8x32xf32>
    %72 = arith.truncf %71 : vector<8x32xf32> to vector<8x32xbf16>
    %cst_33 = arith.constant dense<0.000000e+00> : vector<8x32xf32>
    %73 = tpu.matmul %70, %72, %cst_33 {dimension_numbers = #tpu.dot_dimension_numbers<[1], [0], [0], [1], [0, 0, 1, 1], [], []>} : vector<8x8xbf16>, vector<8x32xbf16>, vector<8x32xf32> -> vector<8x32xf32>
    %74 = arith.addf %48, %73 : vector<8x32xf32>
    %75 = vector.extract_strided_slice %11 {offsets = [0, 16], sizes = [8, 8], strides = [1, 1]} : vector<8x32xf32> to vector<8x8xf32>
    %76 = arith.truncf %75 : vector<8x8xf32> to vector<8x8xbf16>
    %77 = vector.extract_strided_slice %17 {offsets = [0, 16], sizes = [8, 8], strides = [1, 1]} : vector<8x32xf32> to vector<8x8xf32>
    %78 = arith.truncf %77 : vector<8x8xf32> to vector<8x8xbf16>
    %79 = vector.extract_strided_slice %23 {offsets = [0, 16], sizes = [8, 8], strides = [1, 1]} : vector<8x32xf32> to vector<8x8xf32>
    %80 = arith.truncf %79 : vector<8x8xf32> to vector<8x8xbf16>
    %cst_34 = arith.constant dense<0.000000e+00> : vector<8x8xf32>
    %81 = tpu.matmul %76, %78, %cst_34 {dimension_numbers = #tpu.dot_dimension_numbers<[1], [1], [0], [0], [0, 0, 1, 0], [], []>} : vector<8x8xbf16>, vector<8x8xbf16>, vector<8x8xf32> -> vector<8x8xf32>
    %cst_35 = arith.constant 0.353553385 : f32
    %82 = vector.broadcast %cst_35 : f32 to vector<8x8xf32>
    %83 = arith.mulf %81, %82 : vector<8x8xf32>
    %cst_36 = arith.constant dense<0xFF800000> : vector<8xf32>
    %84 = vector.multi_reduction <maximumf>, %83, %cst_36 [1] : vector<8x8xf32> to vector<8xf32>
    %85 = vector.shape_cast %84 : vector<8xf32> to vector<8x1xf32>
    %86 = vector.broadcast %85 : vector<8x1xf32> to vector<8x8xf32>
    %87 = arith.subf %83, %86 : vector<8x8xf32>
    %88 = math.exp %87 : vector<8x8xf32>
    %cst_37 = arith.constant dense<0.000000e+00> : vector<8xf32>
    %89 = vector.multi_reduction <add>, %88, %cst_37 [1] : vector<8x8xf32> to vector<8xf32>
    %90 = vector.shape_cast %89 : vector<8xf32> to vector<8x1xf32>
    %91 = tpu.reciprocal %90 {approx = true} : vector<8x1xf32> -> vector<8x1xf32>
    %92 = vector.broadcast %91 : vector<8x1xf32> to vector<8x8xf32>
    %93 = arith.mulf %88, %92 : vector<8x8xf32>
    %94 = arith.truncf %93 : vector<8x8xf32> to vector<8x8xbf16>
    %cst_38 = arith.constant dense<0.000000e+00> : vector<8x8xf32>
    %95 = tpu.matmul %94, %80, %cst_38 {dimension_numbers = #tpu.dot_dimension_numbers<[1], [0], [0], [1], [0, 0, 1, 1], [], []>} : vector<8x8xbf16>, vector<8x8xbf16>, vector<8x8xf32> -> vector<8x8xf32>
    %96 = arith.truncf %95 : vector<8x8xf32> to vector<8x8xbf16>
    %c16 = arith.constant 16 : index
    %c0_39 = arith.constant 0 : index
    %97 = vector.load %arg6[%c16, %c0_39] : memref<32x32xf32, #tpu.memory_space<vmem>>, vector<8x32xf32>
    %98 = arith.truncf %97 : vector<8x32xf32> to vector<8x32xbf16>
    %cst_40 = arith.constant dense<0.000000e+00> : vector<8x32xf32>
    %99 = tpu.matmul %96, %98, %cst_40 {dimension_numbers = #tpu.dot_dimension_numbers<[1], [0], [0], [1], [0, 0, 1, 1], [], []>} : vector<8x8xbf16>, vector<8x32xbf16>, vector<8x32xf32> -> vector<8x32xf32>
    %100 = arith.addf %74, %99 : vector<8x32xf32>
    %101 = vector.extract_strided_slice %11 {offsets = [0, 24], sizes = [8, 8], strides = [1, 1]} : vector<8x32xf32> to vector<8x8xf32>
    %102 = arith.truncf %101 : vector<8x8xf32> to vector<8x8xbf16>
    %103 = vector.extract_strided_slice %17 {offsets = [0, 24], sizes = [8, 8], strides = [1, 1]} : vector<8x32xf32> to vector<8x8xf32>
    %104 = arith.truncf %103 : vector<8x8xf32> to vector<8x8xbf16>
    %105 = vector.extract_strided_slice %23 {offsets = [0, 24], sizes = [8, 8], strides = [1, 1]} : vector<8x32xf32> to vector<8x8xf32>
    %106 = arith.truncf %105 : vector<8x8xf32> to vector<8x8xbf16>
    %cst_41 = arith.constant dense<0.000000e+00> : vector<8x8xf32>
    %107 = tpu.matmul %102, %104, %cst_41 {dimension_numbers = #tpu.dot_dimension_numbers<[1], [1], [0], [0], [0, 0, 1, 0], [], []>} : vector<8x8xbf16>, vector<8x8xbf16>, vector<8x8xf32> -> vector<8x8xf32>
    %cst_42 = arith.constant 0.353553385 : f32
    %108 = vector.broadcast %cst_42 : f32 to vector<8x8xf32>
    %109 = arith.mulf %107, %108 : vector<8x8xf32>
    %cst_43 = arith.constant dense<0xFF800000> : vector<8xf32>
    %110 = vector.multi_reduction <maximumf>, %109, %cst_43 [1] : vector<8x8xf32> to vector<8xf32>
    %111 = vector.shape_cast %110 : vector<8xf32> to vector<8x1xf32>
    %112 = vector.broadcast %111 : vector<8x1xf32> to vector<8x8xf32>
    %113 = arith.subf %109, %112 : vector<8x8xf32>
    %114 = math.exp %113 : vector<8x8xf32>
    %cst_44 = arith.constant dense<0.000000e+00> : vector<8xf32>
    %115 = vector.multi_reduction <add>, %114, %cst_44 [1] : vector<8x8xf32> to vector<8xf32>
    %116 = vector.shape_cast %115 : vector<8xf32> to vector<8x1xf32>
    %117 = tpu.reciprocal %116 {approx = true} : vector<8x1xf32> -> vector<8x1xf32>
    %118 = vector.broadcast %117 : vector<8x1xf32> to vector<8x8xf32>
    %119 = arith.mulf %114, %118 : vector<8x8xf32>
    %120 = arith.truncf %119 : vector<8x8xf32> to vector<8x8xbf16>
    %cst_45 = arith.constant dense<0.000000e+00> : vector<8x8xf32>
    %121 = tpu.matmul %120, %106, %cst_45 {dimension_numbers = #tpu.dot_dimension_numbers<[1], [0], [0], [1], [0, 0, 1, 1], [], []>} : vector<8x8xbf16>, vector<8x8xbf16>, vector<8x8xf32> -> vector<8x8xf32>
    %122 = arith.truncf %121 : vector<8x8xf32> to vector<8x8xbf16>
    %c24 = arith.constant 24 : index
    %c0_46 = arith.constant 0 : index
    %123 = vector.load %arg6[%c24, %c0_46] : memref<32x32xf32, #tpu.memory_space<vmem>>, vector<8x32xf32>
    %124 = arith.truncf %123 : vector<8x32xf32> to vector<8x32xbf16>
    %cst_47 = arith.constant dense<0.000000e+00> : vector<8x32xf32>
    %125 = tpu.matmul %122, %124, %cst_47 {dimension_numbers = #tpu.dot_dimension_numbers<[1], [0], [0], [1], [0, 0, 1, 1], [], []>} : vector<8x8xbf16>, vector<8x32xbf16>, vector<8x32xf32> -> vector<8x32xf32>
    %126 = arith.addf %100, %125 : vector<8x32xf32>
    %c0_48 = arith.constant 0 : index
    %c0_49 = arith.constant 0 : index
    %127 = vector.load %arg10[%c0_48, %c0_49] : memref<1x32xf32, #tpu.memory_space<vmem>>, vector<1x32xf32>
    %128 = vector.broadcast %127 : vector<1x32xf32> to vector<8x32xf32>
    %129 = arith.addf %126, %128 : vector<8x32xf32>
    %c0_50 = arith.constant 0 : index
    %c0_51 = arith.constant 0 : index
    %130 = vector.load %arg11[%c0_50, %c0_51] : memref<1x32xf32, #tpu.memory_space<vmem>>, vector<1x32xf32>
    %c0_52 = arith.constant 0 : index
    %c0_53 = arith.constant 0 : index
    %131 = vector.load %arg12[%c0_52, %c0_53] : memref<1x32xf32, #tpu.memory_space<vmem>>, vector<1x32xf32>
    %132 = arith.addf %1, %129 : vector<8x32xf32>
    %cst_54 = arith.constant dense<0.000000e+00> : vector<8xf32>
    %133 = vector.multi_reduction <add>, %132, %cst_54 [1] : vector<8x32xf32> to vector<8xf32>
    %134 = vector.shape_cast %133 : vector<8xf32> to vector<8x1xf32>
    %cst_55 = arith.constant 3.200000e+01 : f32
    %135 = vector.broadcast %cst_55 : f32 to vector<8x1xf32>
    %136 = arith.divf %134, %135 : vector<8x1xf32>
    %137 = vector.broadcast %136 : vector<8x1xf32> to vector<8x32xf32>
    %138 = arith.subf %132, %137 : vector<8x32xf32>
    %139 = arith.mulf %138, %138 : vector<8x32xf32>
    %cst_56 = arith.constant dense<0.000000e+00> : vector<8xf32>
    %140 = vector.multi_reduction <add>, %139, %cst_56 [1] : vector<8x32xf32> to vector<8xf32>
    %141 = vector.shape_cast %140 : vector<8xf32> to vector<8x1xf32>
    %cst_57 = arith.constant 3.200000e+01 : f32
    %142 = vector.broadcast %cst_57 : f32 to vector<8x1xf32>
    %143 = arith.divf %141, %142 : vector<8x1xf32>
    %144 = vector.broadcast %136 : vector<8x1xf32> to vector<8x32xf32>
    %145 = arith.subf %132, %144 : vector<8x32xf32>
    %cst_58 = arith.constant 9.99999974E-6 : f32
    %146 = vector.broadcast %cst_58 : f32 to vector<8x1xf32>
    %147 = arith.addf %143, %146 : vector<8x1xf32>
    %148 = math.rsqrt %147 : vector<8x1xf32>
    %149 = vector.broadcast %148 : vector<8x1xf32> to vector<8x32xf32>
    %150 = arith.mulf %145, %149 : vector<8x32xf32>
    %151 = vector.broadcast %130 : vector<1x32xf32> to vector<8x32xf32>
    %152 = arith.mulf %150, %151 : vector<8x32xf32>
    %153 = vector.broadcast %131 : vector<1x32xf32> to vector<8x32xf32>
    %154 = arith.addf %152, %153 : vector<8x32xf32>
    %155 = arith.truncf %154 : vector<8x32xf32> to vector<8x32xbf16>
    %c0_59 = arith.constant 0 : index
    %c0_60 = arith.constant 0 : index
    %156 = vector.load %arg13[%c0_59, %c0_60] : memref<32x64xf32, #tpu.memory_space<vmem>>, vector<32x64xf32>
    %157 = arith.truncf %156 : vector<32x64xf32> to vector<32x64xbf16>
    %cst_61 = arith.constant dense<0.000000e+00> : vector<8x64xf32>
    %158 = tpu.matmul %155, %157, %cst_61 {dimension_numbers = #tpu.dot_dimension_numbers<[1], [0], [0], [1], [0, 0, 1, 1], [], []>} : vector<8x32xbf16>, vector<32x64xbf16>, vector<8x64xf32> -> vector<8x64xf32>
    %c0_62 = arith.constant 0 : index
    %c0_63 = arith.constant 0 : index
    %159 = vector.load %arg14[%c0_62, %c0_63] : memref<1x64xf32, #tpu.memory_space<vmem>>, vector<1x64xf32>
    %160 = vector.broadcast %159 : vector<1x64xf32> to vector<8x64xf32>
    %161 = arith.addf %158, %160 : vector<8x64xf32>
    %cst_64 = arith.constant 0.000000e+00 : f32
    %162 = vector.broadcast %cst_64 : f32 to vector<8x64xf32>
    %163 = arith.maximumf %161, %162 : vector<8x64xf32>
    %164 = arith.truncf %163 : vector<8x64xf32> to vector<8x64xbf16>
    %c0_65 = arith.constant 0 : index
    %c0_66 = arith.constant 0 : index
    %165 = vector.load %arg15[%c0_65, %c0_66] : memref<64x32xf32, #tpu.memory_space<vmem>>, vector<64x32xf32>
    %166 = arith.truncf %165 : vector<64x32xf32> to vector<64x32xbf16>
    %cst_67 = arith.constant dense<0.000000e+00> : vector<8x32xf32>
    %167 = tpu.matmul %164, %166, %cst_67 {dimension_numbers = #tpu.dot_dimension_numbers<[1], [0], [0], [1], [0, 0, 1, 1], [], []>} : vector<8x64xbf16>, vector<64x32xbf16>, vector<8x32xf32> -> vector<8x32xf32>
    %c0_68 = arith.constant 0 : index
    %c0_69 = arith.constant 0 : index
    %168 = vector.load %arg16[%c0_68, %c0_69] : memref<1x32xf32, #tpu.memory_space<vmem>>, vector<1x32xf32>
    %169 = vector.broadcast %168 : vector<1x32xf32> to vector<8x32xf32>
    %170 = arith.addf %167, %169 : vector<8x32xf32>
    %c0_70 = arith.constant 0 : index
    %c0_71 = arith.constant 0 : index
    %171 = vector.load %arg17[%c0_70, %c0_71] : memref<1x32xf32, #tpu.memory_space<vmem>>, vector<1x32xf32>
    %c0_72 = arith.constant 0 : index
    %c0_73 = arith.constant 0 : index
    %172 = vector.load %arg18[%c0_72, %c0_73] : memref<1x32xf32, #tpu.memory_space<vmem>>, vector<1x32xf32>
    %173 = arith.addf %154, %170 : vector<8x32xf32>
    %cst_74 = arith.constant dense<0.000000e+00> : vector<8xf32>
    %174 = vector.multi_reduction <add>, %173, %cst_74 [1] : vector<8x32xf32> to vector<8xf32>
    %175 = vector.shape_cast %174 : vector<8xf32> to vector<8x1xf32>
    %cst_75 = arith.constant 3.200000e+01 : f32
    %176 = vector.broadcast %cst_75 : f32 to vector<8x1xf32>
    %177 = arith.divf %175, %176 : vector<8x1xf32>
    %178 = vector.broadcast %177 : vector<8x1xf32> to vector<8x32xf32>
    %179 = arith.subf %173, %178 : vector<8x32xf32>
    %180 = arith.mulf %179, %179 : vector<8x32xf32>
    %cst_76 = arith.constant dense<0.000000e+00> : vector<8xf32>
    %181 = vector.multi_reduction <add>, %180, %cst_76 [1] : vector<8x32xf32> to vector<8xf32>
    %182 = vector.shape_cast %181 : vector<8xf32> to vector<8x1xf32>
    %cst_77 = arith.constant 3.200000e+01 : f32
    %183 = vector.broadcast %cst_77 : f32 to vector<8x1xf32>
    %184 = arith.divf %182, %183 : vector<8x1xf32>
    %185 = vector.broadcast %177 : vector<8x1xf32> to vector<8x32xf32>
    %186 = arith.subf %173, %185 : vector<8x32xf32>
    %cst_78 = arith.constant 9.99999974E-6 : f32
    %187 = vector.broadcast %cst_78 : f32 to vector<8x1xf32>
    %188 = arith.addf %184, %187 : vector<8x1xf32>
    %189 = math.rsqrt %188 : vector<8x1xf32>
    %190 = vector.broadcast %189 : vector<8x1xf32> to vector<8x32xf32>
    %191 = arith.mulf %186, %190 : vector<8x32xf32>
    %192 = vector.broadcast %171 : vector<1x32xf32> to vector<8x32xf32>
    %193 = arith.mulf %191, %192 : vector<8x32xf32>
    %194 = vector.broadcast %172 : vector<1x32xf32> to vector<8x32xf32>
    %195 = arith.addf %193, %194 : vector<8x32xf32>
    %c0_79 = arith.constant 0 : index
    %c0_80 = arith.constant 0 : index
    %c0_81 = arith.constant 0 : index
    %196 = vector.load %arg19[%c0_79, %c0_80, %c0_81] : memref<1x8x32xf32, #tpu.memory_space<vmem>>, vector<1x8x32xf32>
    %197 = vector.shape_cast %196 : vector<1x8x32xf32> to vector<8x32xf32>
    %198 = vector.shape_cast %195 : vector<8x32xf32> to vector<1x8x32xf32>
    tpu.vector_store %arg19[%c0_79, %c0_80, %c0_81], %198 {strides = array<i32>} : memref<1x8x32xf32, #tpu.memory_space<vmem>>, vector<1x8x32xf32>,
    return
  }
  func.func @transform_0(%arg0: i32) -> (i32, i32, i32) {
    %c0_i32 = arith.constant 0 : i32
    %c0_i32_0 = arith.constant 0 : i32
    %c0_i32_1 = arith.constant 0 : i32
    return %arg0, %c0_i32, %c0_i32_0 : i32, i32, i32
  }
  func.func @transform_1(%arg0: i32) -> (i32, i32, i32) {
    %c0_i32 = arith.constant 0 : i32
    %c0_i32_0 = arith.constant 0 : i32
    %c0_i32_1 = arith.constant 0 : i32
    return %arg0, %c0_i32, %c0_i32_0 : i32, i32, i32
  }
  func.func @transform_2(%arg0: i32) -> (i32, i32) {
    %c0_i32 = arith.constant 0 : i32
    %c0_i32_0 = arith.constant 0 : i32
    %c0_i32_1 = arith.constant 0 : i32
    return %c0_i32, %c0_i32_0 : i32, i32
  }
  func.func @transform_3(%arg0: i32) -> (i32, i32) {
    %c0_i32 = arith.constant 0 : i32
    %c0_i32_0 = arith.constant 0 : i32
    %c0_i32_1 = arith.constant 0 : i32
    return %c0_i32, %c0_i32_0 : i32, i32
  }
  func.func @transform_4(%arg0: i32) -> (i32, i32) {
    %c0_i32 = arith.constant 0 : i32
    %c0_i32_0 = arith.constant 0 : i32
    %c0_i32_1 = arith.constant 0 : i32
    return %c0_i32, %c0_i32_0 : i32, i32
  }
  func.func @transform_5(%arg0: i32) -> (i32, i32) {
    %c0_i32 = arith.constant 0 : i32
    %c0_i32_0 = arith.constant 0 : i32
    %c0_i32_1 = arith.constant 0 : i32
    return %c0_i32, %c0_i32_0 : i32, i32
  }
  func.func @transform_6(%arg0: i32) -> (i32, i32) {
    %c0_i32 = arith.constant 0 : i32
    %c0_i32_0 = arith.constant 0 : i32
    %c0_i32_1 = arith.constant 0 : i32
    return %c0_i32, %c0_i32_0 : i32, i32
  }
  func.func @transform_7(%arg0: i32) -> (i32, i32) {
    %c0_i32 = arith.constant 0 : i32
    %c0_i32_0 = arith.constant 0 : i32
    %c0_i32_1 = arith.constant 0 : i32
    return %c0_i32, %c0_i32_0 : i32, i32
  }
  func.func @transform_8(%arg0: i32) -> (i32, i32) {
    %c0_i32 = arith.constant 0 : i32
    %c0_i32_0 = arith.constant 0 : i32
    %c0_i32_1 = arith.constant 0 : i32
    return %c0_i32, %c0_i32_0 : i32, i32
  }
  func.func @transform_9(%arg0: i32) -> (i32, i32) {
    %c0_i32 = arith.constant 0 : i32
    %c0_i32_0 = arith.constant 0 : i32
    %c0_i32_1 = arith.constant 0 : i32
    return %c0_i32, %c0_i32_0 : i32, i32
  }
  func.func @transform_10(%arg0: i32) -> (i32, i32) {
    %c0_i32 = arith.constant 0 : i32
    %c0_i32_0 = arith.constant 0 : i32
    %c0_i32_1 = arith.constant 0 : i32
    return %c0_i32, %c0_i32_0 : i32, i32
  }
  func.func @transform_11(%arg0: i32) -> (i32, i32) {
    %c0_i32 = arith.constant 0 : i32
    %c0_i32_0 = arith.constant 0 : i32
    %c0_i32_1 = arith.constant 0 : i32
    return %c0_i32, %c0_i32_0 : i32, i32
  }
  func.func @transform_12(%arg0: i32) -> (i32, i32) {
    %c0_i32 = arith.constant 0 : i32
    %c0_i32_0 = arith.constant 0 : i32
    %c0_i32_1 = arith.constant 0 : i32
    return %c0_i32, %c0_i32_0 : i32, i32
  }
  func.func @transform_13(%arg0: i32) -> (i32, i32) {
    %c0_i32 = arith.constant 0 : i32
    %c0_i32_0 = arith.constant 0 : i32
    %c0_i32_1 = arith.constant 0 : i32
    return %c0_i32, %c0_i32_0 : i32, i32
  }
  func.func @transform_14(%arg0: i32) -> (i32, i32) {
    %c0_i32 = arith.constant 0 : i32
    %c0_i32_0 = arith.constant 0 : i32
    %c0_i32_1 = arith.constant 0 : i32
    return %c0_i32, %c0_i32_0 : i32, i32
  }
  func.func @transform_15(%arg0: i32) -> (i32, i32) {
    %c0_i32 = arith.constant 0 : i32
    %c0_i32_0 = arith.constant 0 : i32
    %c0_i32_1 = arith.constant 0 : i32
    return %c0_i32, %c0_i32_0 : i32, i32
  }
  func.func @transform_16(%arg0: i32) -> (i32, i32) {
    %c0_i32 = arith.constant 0 : i32
    %c0_i32_0 = arith.constant 0 : i32
    %c0_i32_1 = arith.constant 0 : i32
    return %c0_i32, %c0_i32_0 : i32, i32
  }
  func.func @transform_17(%arg0: i32) -> (i32, i32) {
    %c0_i32 = arith.constant 0 : i32
    %c0_i32_0 = arith.constant 0 : i32
    %c0_i32_1 = arith.constant 0 : i32
    return %c0_i32, %c0_i32_0 : i32, i32
  }
  func.func @transform_18(%arg0: i32) -> (i32, i32, i32) {
    %c0_i32 = arith.constant 0 : i32
    %c0_i32_0 = arith.constant 0 : i32
    %c0_i32_1 = arith.constant 0 : i32
    return %arg0, %c0_i32, %c0_i32_0 : i32, i32, i32
  }
}

</mosaic_0001>

<llo_original>
// kernel: decoder_v2_forward.6
$region0: #{decoder_v2_forward.6}
  #allocation0 [shape = 'u32[]', space=smem, size = 0x4, offset = 0x4, fixed_abs, tag = 'smem constant byte address 0x4 - core index']
  #allocation1 [shape = 'u32[144,128]{1,0:T(1,128)}', space=vmem, size = 0x12000, scoped, tag = 'internal scratch']
  %s0 = inlined_call_operand.vmem [shape: f32[2,8,32], index: 0, kind: input, shape index: {}]
  %s1 = inlined_call_operand.vmem [shape: f32[32,32], index: 1, kind: input, shape index: {}]
  %s2 = inlined_call_operand.vmem [shape: f32[1,32], index: 2, kind: input, shape index: {}]
  %s3 = inlined_call_operand.vmem [shape: f32[64,32], index: 3, kind: input, shape index: {}]
  %s4 = inlined_call_operand.vmem [shape: f32[2,8,32], index: 4, kind: output, shape index: {}]
  %s5 = sld [smem:[#allocation0]]
  $region49: #{decoder_v2_forward.6} parent=0
    _
  %s7 = ssub.s32 1, %s5
  %s8 = scalar_select 0, %s7, %s5
  loop: start=0, step=1, limit=4
  $region2: #{decoder_v2_forward.6} parent=0 // loop_pre_header
    _
  $region3: #{decoder_v2_forward.6} parent=0 // loop_header
    %s10 = sphi 0, %s14
    %p11 = scmp.ge.s32.totalorder %s10, 4
    %s20 = sphi 0, %s22
    %s23 = sphi 0, %s20
    %s24 = sphi 0, %s23
    %s40 = sphi 0, %s24
    %s44 = sphi 0, %s44
    %s46 = sphi 0, %s44
    %s47 = sphi 0, %s46
    %s61 = sphi 0, %s47
    %s65 = sphi 0, %s65
    %s67 = sphi 0, %s65
    %s68 = sphi 0, %s67
    %s82 = sphi 0, %s68
    %s86 = sphi 0, %s86
    %s88 = sphi 0, %s86
    %s89 = sphi 0, %s88
    %s103 = sphi 0, %s89
    %s109 = sphi 0, %s111
    %s112 = sphi 0, %s109
    %s113 = sphi 0, %s112
    %s129 = sphi 0, %s113
  $region4: #{decoder_v2_forward.6} parent=0 // loop_header_branch
    %13 = sbr.rel (%p11) target = $region8
  $region5: #{decoder_v2_forward.6} parent=0 // loop_body
    %s15 = ssub.s32 %s10, 1
    %s16 = ssub.s32 %s10, 2
    %s17 = sadd.s32 %s10, 1
    %s18 = ssub.s32 %s10, %s17
    %p19 = scmp.eq.s32.totalorder %s18, 0
    %s21 = sadd.s32 %s20, 1
    %s22 = scalar_select %p19, %s20, %s21
    %p25 = pneg %p19
    %p26 = scmp.eq.s32.totalorder %s10, 1
    %p27 = por %p25, %p26
    %p28 = scmp.ne.s32.totalorder %s20, %s23
    %p29 = scmp.eq.s32.totalorder %s10, 0
    %p30 = por %p28, %p29
    %p31 = scmp.ne.s32.totalorder %s20, %s23
    %p32 = scmp.eq.s32.totalorder %s15, 1
    %p33 = por %p31, %p32
    %p34 = scmp.ne.s32.totalorder %s23, %s24
    %p35 = scmp.eq.s32.totalorder %s15, 0
    %p36 = por %p34, %p35
    %p37 = scmp.ne.s32.totalorder %s23, %s24
    %p38 = scmp.eq.s32.totalorder %s16, 1
    %p39 = por %p37, %p38
    %p41 = scmp.ne.s32.totalorder %s24, %s40
    %p42 = scmp.eq.s32.totalorder %s16, 0
    %p43 = por %p41, %p42
    %s45 = sadd.s32 %s44, 1
    %p48 = scmp.eq.s32.totalorder %s10, 1
    %p49 = scmp.ne.s32.totalorder %s44, %s46
    %p50 = scmp.eq.s32.totalorder %s10, 0
    %p51 = por %p49, %p50
    %p52 = scmp.ne.s32.totalorder %s44, %s46
    %p53 = scmp.eq.s32.totalorder %s15, 1
    %p54 = por %p52, %p53
    %p55 = scmp.ne.s32.totalorder %s46, %s47
    %p56 = scmp.eq.s32.totalorder %s15, 0
    %p57 = por %p55, %p56
    %p58 = scmp.ne.s32.totalorder %s46, %s47
    %p59 = scmp.eq.s32.totalorder %s16, 1
    %p60 = por %p58, %p59
    %p62 = scmp.ne.s32.totalorder %s47, %s61
    %p63 = scmp.eq.s32.totalorder %s16, 0
    %p64 = por %p62, %p63
    %s66 = sadd.s32 %s65, 1
    %p69 = scmp.eq.s32.totalorder %s10, 1
    %p70 = scmp.ne.s32.totalorder %s65, %s67
    %p71 = scmp.eq.s32.totalorder %s10, 0
    %p72 = por %p70, %p71
    %p73 = scmp.ne.s32.totalorder %s65, %s67
    %p74 = scmp.eq.s32.totalorder %s15, 1
    %p75 = por %p73, %p74
    %p76 = scmp.ne.s32.totalorder %s67, %s68
    %p77 = scmp.eq.s32.totalorder %s15, 0
    %p78 = por %p76, %p77
    %p79 = scmp.ne.s32.totalorder %s67, %s68
    %p80 = scmp.eq.s32.totalorder %s16, 1
    %p81 = por %p79, %p80
    %p83 = scmp.ne.s32.totalorder %s68, %s82
    %p84 = scmp.eq.s32.totalorder %s16, 0
    %p85 = por %p83, %p84
    %s87 = sadd.s32 %s86, 1
    %p90 = scmp.eq.s32.totalorder %s10, 1
    %p91 = scmp.ne.s32.totalorder %s86, %s88
    %p92 = scmp.eq.s32.totalorder %s10, 0
    %p93 = por %p91, %p92
    %p94 = scmp.ne.s32.totalorder %s86, %s88
    %p95 = scmp.eq.s32.totalorder %s15, 1
    %p96 = por %p94, %p95
    %p97 = scmp.ne.s32.totalorder %s88, %s89
    %p98 = scmp.eq.s32.totalorder %s15, 0
    %p99 = por %p97, %p98
    %p100 = scmp.ne.s32.totalorder %s88, %s89
    %p101 = scmp.eq.s32.totalorder %s16, 1
    %p102 = por %p100, %p101
    %p104 = scmp.ne.s32.totalorder %s89, %s103
    %p105 = scmp.eq.s32.totalorder %s16, 0
    %p106 = por %p104, %p105
    %s107 = ssub.s32 %s10, %s17
    %p108 = scmp.eq.s32.totalorder %s107, 0
    %s110 = sadd.s32 %s109, 1
    %s111 = scalar_select %p108, %s109, %s110
    %p114 = pneg %p108
    %p115 = scmp.eq.s32.totalorder %s10, 1
    %p116 = por %p114, %p115
    %p117 = scmp.ne.s32.totalorder %s109, %s112
    %p118 = scmp.eq.s32.totalorder %s10, 0
    %p119 = por %p117, %p118
    %p120 = scmp.ne.s32.totalorder %s109, %s112
    %p121 = scmp.eq.s32.totalorder %s15, 1
    %p122 = por %p120, %p121
    %p123 = scmp.ne.s32.totalorder %s112, %s113
    %p124 = scmp.eq.s32.totalorder %s15, 0
    %p125 = por %p123, %p124
    %p126 = scmp.ne.s32.totalorder %s112, %s113
    %p127 = scmp.eq.s32.totalorder %s16, 1
    %p128 = por %p126, %p127
    %p130 = scmp.ne.s32.totalorder %s113, %s129
    %p131 = scmp.eq.s32.totalorder %s16, 0
    %p132 = por %p130, %p131
    %p133 = scmp.le.s32.totalorder 1, %s10
    %p134 = scmp.lt.s32.totalorder %s10, 3
    %p135 = pnand %p133, %p134
    %p136 = pneg %p135
    // Predicated region
    $region9: #{decoder_v2_forward.6} parent=5 // pred_check
      _
    $region10: #{decoder_v2_forward.6} parent=5 // pred_check_branch
      %138 = sbr.rel (%p135) target = $region12
    $region11: #{decoder_v2_forward.6} parent=5 // pred_region
      %s139 = ssub.s32 %s10, 1
      // Predicated region
      $region13: #{decoder_v2_forward.6} parent=11 // pred_check
        %p140 = pneg %p57
      $region14: #{decoder_v2_forward.6} parent=11 // pred_check_branch
        %142 = sbr.rel (%p140) target = $region16
      $region15: #{decoder_v2_forward.6} parent=11 // pred_region
        _
      $region16: #{decoder_v2_forward.6} parent=11 // pred_fallthru
        _
      // Predicated region
      $region17: #{decoder_v2_forward.6} parent=11 // pred_check
        %p143 = pneg %p78
      $region18: #{decoder_v2_forward.6} parent=11 // pred_check_branch
        %145 = sbr.rel (%p143) target = $region20
      $region19: #{decoder_v2_forward.6} parent=11 // pred_region
        _
      $region20: #{decoder_v2_forward.6} parent=11 // pred_fallthru
        _
      // Predicated region
      $region21: #{decoder_v2_forward.6} parent=11 // pred_check
        %p146 = pneg %p99
      $region22: #{decoder_v2_forward.6} parent=11 // pred_check_branch
        %148 = sbr.rel (%p146) target = $region24
      $region23: #{decoder_v2_forward.6} parent=11 // pred_region
        _
      $region24: #{decoder_v2_forward.6} parent=11 // pred_fallthru
        _
    $region12: #{decoder_v2_forward.6} parent=5 // pred_fallthru
      _
    %p149 = scmp.lt.s32.totalorder %s10, 2
    // Predicated region
    $region25: #{decoder_v2_forward.6} parent=5 // pred_check
      %p150 = pneg %p149
    $region26: #{decoder_v2_forward.6} parent=5 // pred_check_branch
      %152 = sbr.rel (%p150) target = $region28
    $region27: #{decoder_v2_forward.6} parent=5 // pred_region
      // Predicated region
      $region29: #{decoder_v2_forward.6} parent=27 // pred_check
        %p153 = pneg %p30
      $region30: #{decoder_v2_forward.6} parent=27 // pred_check_branch
        %155 = sbr.rel (%p153) target = $region32
      $region31: #{decoder_v2_forward.6} parent=27 // pred_region
        %p156 = scmp.lt.s32.totalorder %s10, 1
        %s157 = scalar_select %p156, %s10, 1
        %s158 = smul.addr %s157, 8
        %s159 = scalar_lea.vmem %s0, %s158
      $region32: #{decoder_v2_forward.6} parent=27 // pred_fallthru
        _
    $region28: #{decoder_v2_forward.6} parent=5 // pred_fallthru
      _
    %p160 = scmp.le.s32.totalorder 1, %s10
    %p161 = scmp.lt.s32.totalorder %s10, 3
    %p162 = pnand %p160, %p161
    %p163 = pneg %p162
    // Predicated region
    $region33: #{decoder_v2_forward.6} parent=5 // pred_check
      _
    $region34: #{decoder_v2_forward.6} parent=5 // pred_check_branch
      %165 = sbr.rel (%p162) target = $region36
    $region35: #{decoder_v2_forward.6} parent=5 // pred_region
      %s166 = ssub.s32 %s10, 1
      %p167 = scmp.lt.s32.totalorder %s15, 1
      %s168 = scalar_select %p167, %s15, 1
      %s169 = smul.addr %s168, 8
      %s170 = scalar_lea.vmem %s0, %s169
      %p171 = pneg %p36
      %p172 = pneg %p33
      %p173 = pneg %p57
      %p174 = pneg %p54
      %p175 = pneg %p78
      %p176 = pneg %p75
      %p177 = pneg %p99
      %p178 = pneg %p96
      %p179 = pneg %p125
      %p180 = pneg %p122
      %p181 = scmp.lt.s32.totalorder %s15, 1
      %s182 = scalar_select %p181, %s15, 1
      %s183 = smul.addr %s182, 8
      %s184 = scalar_lea.vmem %s4, %s183
      %p185 = scmp.lt.s32.totalorder %s15, 1
      %s186 = scalar_select %p185, %s15, 1
      %s187 = smul.addr %s186, 8
      %s188 = scalar_lea.vmem %s0, %s187
      %p189 = scmp.lt.s32.totalorder %s15, 1
      %s190 = scalar_select %p189, %s15, 1
      %s191 = smul.addr %s190, 8
      %s192 = scalar_lea.vmem %s4, %s191
      %v194 = vld [vmem:[%s188] sm:$0xff]
      %v195 = vpack.c.bf16 %v194, %v194
      %v196 = vld [vmem:[%s1] sm:$0xff]
      %v197 = vld [vmem:[%s1 + $0x8] sm:$0xff]
      %v198 = vld [vmem:[%s1 + $0x10] sm:$0xff]
      %v199 = vld [vmem:[%s1 + $0x18] sm:$0xff]
      %v200 = vpack.c.bf16 %v197, %v196
      %v201 = vpack.c.bf16 %v199, %v198
      %v202 = vld [vmem:[%s2] sm:$0x1]
      %v204 = vlaneseq
      %v205 = vshrl.u32 %v204, 7
      %v206 = vsub.s32 0, %v205
      %v207 = vrot.slane %v202, %v206
      %vm209 = vcmask 261120
      %v211 = vsel %vm209, %v195, 0
      %213 = vmatprep.subr.bf16.mxu0 0
      %214 = vmatpush1.bf16.msra.mxu0 %v200
      %215 = vmatprep.subr.bf16.mxu0 0
      %216 = vmatpush1.bf16.msra.mxu0 %v201
      %217 = vmatprep.subr.bf16.mxu0 0
      %218 = vmatpush1.bf16.msra.mxu0 0
      %219 = vmatprep.subr.bf16.mxu0 0
      %220 = vmatpush1.bf16.msra.mxu0 0
      %221 = vmatprep.subr.bf16.mxu0 0
      %222 = vmatpush1.bf16.msra.mxu0 0
      %223 = vmatprep.subr.bf16.mxu0 0
      %224 = vmatpush1.bf16.msra.mxu0 0
      %225 = vmatprep.subr.bf16.mxu0 0
      %226 = vmatpush1.bf16.msra.mxu0 0
      %227 = vmatprep.subr.bf16.mxu0 0
      %228 = vmatpush1.bf16.msra.mxu0 0
      %229 = vmatprep.subr.bf16.mxu0 0
      %230 = vmatpush1.bf16.msra.mxu0 0
      %231 = vmatprep.subr.bf16.mxu0 0
      %232 = vmatpush1.bf16.msra.mxu0 0
      %233 = vmatprep.subr.bf16.mxu0 0
      %234 = vmatpush1.bf16.msra.mxu0 0
      %235 = vmatprep.subr.bf16.mxu0 0
      %236 = vmatpush1.bf16.msra.mxu0 0
      %237 = vmatprep.subr.bf16.mxu0 0
      %238 = vmatpush1.bf16.msra.mxu0 0
      %239 = vmatprep.subr.bf16.mxu0 0
      %240 = vmatpush1.bf16.msra.mxu0 0
      %241 = vmatprep.subr.bf16.mxu0 0
      %242 = vmatpush1.bf16.msra.mxu0 0
      %243 = vmatprep.subr.bf16.mxu0 0
      %244 = vmatpush1.bf16.msra.mxu0 0
      %245 = vmatprep.mubr.bf16.mxu0 0
      %246 = vmatmul.mubr.bf16.gmra.mrb[0].mxu0 %v211
      %v247 = vpop.f32.mrb[0].mxu0
      %v248 = vadd.f32 %v207, %v247
      %v249 = vpop.f32.mrb[0].mxu0
      %v250 = vpop.f32.mrb[0].mxu0
      %v251 = vpop.f32.mrb[0].mxu0
      %252 = vdwg.mxu0
      %v253 = vld [vmem:[%s3] sm:$0xff]
      %v254 = vadd.f32 %v248, %v253
      %255 = vst.msk [vmem:[%s192] sm:$0xff] %vm209, %v254
      %p256 = scmp.lt.s32.totalorder %s15, 1
      %s257 = scalar_select %p256, %s15, 1
      %s258 = smul.addr %s257, 8
      %s259 = scalar_lea.vmem %s4, %s258
      // Predicated region
      $region37: #{decoder_v2_forward.6} parent=35 // pred_check
        %p260 = pneg %p122
      $region38: #{decoder_v2_forward.6} parent=35 // pred_check_branch
        %262 = sbr.rel (%p260) target = $region40
      $region39: #{decoder_v2_forward.6} parent=35 // pred_region
        _
      $region40: #{decoder_v2_forward.6} parent=35 // pred_fallthru
        _
    $region36: #{decoder_v2_forward.6} parent=5 // pred_fallthru
      _
    %p263 = scmp.le.s32.totalorder 2, %s10
    // Predicated region
    $region41: #{decoder_v2_forward.6} parent=5 // pred_check
      %p264 = pneg %p263
    $region42: #{decoder_v2_forward.6} parent=5 // pred_check_branch
      %266 = sbr.rel (%p264) target = $region44
    $region43: #{decoder_v2_forward.6} parent=5 // pred_region
      %s267 = ssub.s32 %s10, 2
      // Predicated region
      $region45: #{decoder_v2_forward.6} parent=43 // pred_check
        %p268 = pneg %p128
      $region46: #{decoder_v2_forward.6} parent=43 // pred_check_branch
        %270 = sbr.rel (%p268) target = $region48
      $region47: #{decoder_v2_forward.6} parent=43 // pred_region
        %p271 = scmp.lt.s32.totalorder %s16, 1
        %s272 = scalar_select %p271, %s16, 1
        %s273 = smul.addr %s272, 8
        %s274 = scalar_lea.vmem %s4, %s273
      $region48: #{decoder_v2_forward.6} parent=43 // pred_fallthru
        _
    $region44: #{decoder_v2_forward.6} parent=5 // pred_fallthru
      _
  $region6: #{decoder_v2_forward.6} parent=0 // loop_footer
    %s14 = sadd.s32 1, %s10
  $region7: #{decoder_v2_forward.6} parent=0 // loop_footer_branch
    %9 = sbr.rel target = $region3
  $region8: #{decoder_v2_forward.6} parent=0 // loop_exit
    _

// kernel: decoder_v2_forward.11
$region0: #{decoder_v2_forward.11}
  #allocation0 [shape = 'u32[]', space=smem, size = 0x4, offset = 0x4, fixed_abs, tag = 'smem constant byte address 0x4 - core index']
  #allocation1 [shape = 'u32[144,128]{1,0:T(1,128)}', space=vmem, size = 0x12000, scoped, tag = 'internal scratch']
  %s0 = inlined_call_operand.vmem [shape: f32[16,32], index: 0, kind: input, shape index: {}]
  %s1 = inlined_call_operand.vmem [shape: f32[32,32], index: 1, kind: input, shape index: {}]
  %s2 = inlined_call_operand.vmem [shape: f32[1,32], index: 2, kind: input, shape index: {}]
  %s3 = inlined_call_operand.hbm [shape: f32[16,32], index: 3, kind: output, shape index: {}]
  %s4 = sld [smem:[#allocation0]]
  $region22: #{decoder_v2_forward.11} parent=0
    _
  %s6 = ssub.s32 1, %s4
  %s7 = scalar_select 0, %s6, %s4
  $region1: #{decoder_v2_forward.11} parent=0
    #allocation2 [shape = 'u8[8192]{0}', space=vmem, size = 0x2000, scoped, tag = 'output window, operand 0, single buffered']
    #allocation3 [shape = 's32[1]{0}', space=sflag, size = 0x4, scoped, tag = 'scoped memory for decoder_v2_forward.11']
    %8 = vsyncpa [#allocation3], 0
    // Predicated region
    $region2: #{decoder_v2_forward.11} parent=1 // pred_check
      _
    $region3: #{decoder_v2_forward.11} parent=1 // pred_check_branch
      %10 = sbr.rel (0) target = $region5
    $region4: #{decoder_v2_forward.11} parent=1 // pred_region
      _
    $region5: #{decoder_v2_forward.11} parent=1 // pred_fallthru
      _
    // Predicated region
    $region6: #{decoder_v2_forward.11} parent=1 // pred_check
      _
    $region7: #{decoder_v2_forward.11} parent=1 // pred_check_branch
      %12 = sbr.rel (0) target = $region9
    $region8: #{decoder_v2_forward.11} parent=1 // pred_region
      _
    $region9: #{decoder_v2_forward.11} parent=1 // pred_fallthru
      _
    // Predicated region
    $region10: #{decoder_v2_forward.11} parent=1 // pred_check
      _
    $region11: #{decoder_v2_forward.11} parent=1 // pred_check_branch
      %14 = sbr.rel (0) target = $region13
    $region12: #{decoder_v2_forward.11} parent=1 // pred_region
      _
    $region13: #{decoder_v2_forward.11} parent=1 // pred_fallthru
      _
    %v16 = vld [vmem:[%s0] sm:$0xff]
    %v17 = vld [vmem:[%s0 + $0x8] sm:$0xff]
    %v18 = vpack.c.bf16 %v17, %v16
    %v19 = vld [vmem:[%s1] sm:$0xff]
    %v20 = vld [vmem:[%s1 + $0x8] sm:$0xff]
    %v21 = vld [vmem:[%s1 + $0x10] sm:$0xff]
    %v22 = vld [vmem:[%s1 + $0x18] sm:$0xff]
    %v23 = vpack.c.bf16 %v20, %v19
    %v24 = vpack.c.bf16 %v22, %v21
    %v25 = vld [vmem:[%s2] sm:$0x1]
    %v27 = vlaneseq
    %v28 = vshrl.u32 %v27, 7
    %v29 = vsub.s32 0, %v28
    %v30 = vrot.slane %v25, %v29
    %vm32 = vcmask 261120
    %v34 = vsel %vm32, %v18, 0
    %36 = vmatprep.subr.bf16.mxu0 0
    %37 = vmatpush1.bf16.msra.mxu0 %v23
    %38 = vmatprep.subr.bf16.mxu0 0
    %39 = vmatpush1.bf16.msra.mxu0 %v24
    %40 = vmatprep.subr.bf16.mxu0 0
    %41 = vmatpush1.bf16.msra.mxu0 0
    %42 = vmatprep.subr.bf16.mxu0 0
    %43 = vmatpush1.bf16.msra.mxu0 0
    %44 = vmatprep.subr.bf16.mxu0 0
    %45 = vmatpush1.bf16.msra.mxu0 0
    %46 = vmatprep.subr.bf16.mxu0 0
    %47 = vmatpush1.bf16.msra.mxu0 0
    %48 = vmatprep.subr.bf16.mxu0 0
    %49 = vmatpush1.bf16.msra.mxu0 0
    %50 = vmatprep.subr.bf16.mxu0 0
    %51 = vmatpush1.bf16.msra.mxu0 0
    %52 = vmatprep.subr.bf16.mxu0 0
    %53 = vmatpush1.bf16.msra.mxu0 0
    %54 = vmatprep.subr.bf16.mxu0 0
    %55 = vmatpush1.bf16.msra.mxu0 0
    %56 = vmatprep.subr.bf16.mxu0 0
    %57 = vmatpush1.bf16.msra.mxu0 0
    %58 = vmatprep.subr.bf16.mxu0 0
    %59 = vmatpush1.bf16.msra.mxu0 0
    %60 = vmatprep.subr.bf16.mxu0 0
    %61 = vmatpush1.bf16.msra.mxu0 0
    %62 = vmatprep.subr.bf16.mxu0 0
    %63 = vmatpush1.bf16.msra.mxu0 0
    %64 = vmatprep.subr.bf16.mxu0 0
    %65 = vmatpush1.bf16.msra.mxu0 0
    %66 = vmatprep.subr.bf16.mxu0 0
    %67 = vmatpush1.bf16.msra.mxu0 0
    %68 = vmatprep.mubr.bf16.mxu0 0
    %69 = vmatmul.mubr.bf16.gmra.mrb[0].mxu0 %v34
    %v70 = vpop.f32.mrb[0].mxu0
    %v71 = vadd.f32 %v30, %v70
    %v72 = vpop.f32.mrb[0].mxu0
    %v73 = vpop.f32.mrb[0].mxu0
    %v74 = vadd.f32 %v30, %v73
    %v75 = vpop.f32.mrb[0].mxu0
    %76 = vdwg.mxu0
    %77 = vst.msk [vmem:[#allocation2] sm:$0xff] %vm32, %v71
    %78 = vst.msk [vmem:[#allocation2 + $0x8] sm:$0xff] %vm32, %v74
    // Predicated region
    $region14: #{decoder_v2_forward.11} parent=1 // pred_check
      _
    $region15: #{decoder_v2_forward.11} parent=1 // pred_check_branch
      %80 = sbr.rel (0) target = $region17
    $region16: #{decoder_v2_forward.11} parent=1 // pred_region
      %s82 = ssub.s32 256, 256
      %83 = vsyncadd [#allocation3], %s82
      %s84 = sshll.u32 [#allocation2], 4
      %s85 = int_to_ptr.vmem [resolvable:$true] %s84
      %90 = dma.vmem_to_hbm [thread:$0]  %s85, 256, %s3, [#allocation3], 128, 128, 8
    $region17: #{decoder_v2_forward.11} parent=1 // pred_fallthru
      _
    // Predicated region
    $region18: #{decoder_v2_forward.11} parent=1 // pred_check
      _
    $region19: #{decoder_v2_forward.11} parent=1 // pred_check_branch
      %92 = sbr.rel (0) target = $region21
    $region20: #{decoder_v2_forward.11} parent=1 // pred_region
      %93 = dma.done [#allocation3], 256
    $region21: #{decoder_v2_forward.11} parent=1 // pred_fallthru
      _
    %94 = vsyncpa [#allocation3], 1

// kernel: decoder_v2_forward.7
$region0: #{decoder_v2_forward.7}
  #allocation0 [shape = 'u32[]', space=smem, size = 0x4, offset = 0x4, fixed_abs, tag = 'smem constant byte address 0x4 - core index']
  #allocation1 [shape = 'u32[144,128]{1,0:T(1,128)}', space=vmem, size = 0x12000, scoped, tag = 'internal scratch']
  %s0 = inlined_call_operand.vmem [shape: f32[2,1,8], index: 0, kind: input, shape index: {}]
  %s1 = inlined_call_operand.vmem [shape: f32[2,8,32], index: 1, kind: input, shape index: {}]
  %s2 = inlined_call_operand.vmem [shape: f32[32,32], index: 2, kind: input, shape index: {}]
  %s3 = inlined_call_operand.vmem [shape: f32[32,32], index: 3, kind: input, shape index: {}]
  %s4 = inlined_call_operand.vmem [shape: f32[32,32], index: 4, kind: input, shape index: {}]
  %s5 = inlined_call_operand.vmem [shape: f32[32,32], index: 5, kind: input, shape index: {}]
  %s6 = inlined_call_operand.vmem [shape: f32[1,32], index: 6, kind: input, shape index: {}]
  %s7 = inlined_call_operand.vmem [shape: f32[1,32], index: 7, kind: input, shape index: {}]
  %s8 = inlined_call_operand.vmem [shape: f32[1,32], index: 8, kind: input, shape index: {}]
  %s9 = inlined_call_operand.vmem [shape: f32[1,32], index: 9, kind: input, shape index: {}]
  %s10 = inlined_call_operand.vmem [shape: f32[1,32], index: 10, kind: input, shape index: {}]
  %s11 = inlined_call_operand.vmem [shape: f32[1,32], index: 11, kind: input, shape index: {}]
  %s12 = inlined_call_operand.vmem [shape: f32[2,8,32], index: 12, kind: output, shape index: {}]
  %s13 = sld [smem:[#allocation0]]
  $region81: #{decoder_v2_forward.7} parent=0
    _
  %s15 = ssub.s32 1, %s13
  %s16 = scalar_select 0, %s15, %s13
  loop: start=0, step=1, limit=4
  $region2: #{decoder_v2_forward.7} parent=0 // loop_pre_header
    _
  $region3: #{decoder_v2_forward.7} parent=0 // loop_header
    %s18 = sphi 0, %s22
    %p19 = scmp.ge.s32.totalorder %s18, 4
    %s28 = sphi 0, %s30
    %s31 = sphi 0, %s28
    %s32 = sphi 0, %s31
    %s48 = sphi 0, %s32
    %s54 = sphi 0, %s56
    %s57 = sphi 0, %s54
    %s58 = sphi 0, %s57
    %s74 = sphi 0, %s58
    %s78 = sphi 0, %s78
    %s80 = sphi 0, %s78
    %s81 = sphi 0, %s80
    %s95 = sphi 0, %s81
    %s99 = sphi 0, %s99
    %s101 = sphi 0, %s99
    %s102 = sphi 0, %s101
    %s116 = sphi 0, %s102
    %s120 = sphi 0, %s120
    %s122 = sphi 0, %s120
    %s123 = sphi 0, %s122
    %s137 = sphi 0, %s123
    %s141 = sphi 0, %s141
    %s143 = sphi 0, %s141
    %s144 = sphi 0, %s143
    %s158 = sphi 0, %s144
    %s162 = sphi 0, %s162
    %s164 = sphi 0, %s162
    %s165 = sphi 0, %s164
    %s179 = sphi 0, %s165
    %s183 = sphi 0, %s183
    %s185 = sphi 0, %s183
    %s186 = sphi 0, %s185
    %s200 = sphi 0, %s186
    %s204 = sphi 0, %s204
    %s206 = sphi 0, %s204
    %s207 = sphi 0, %s206
    %s221 = sphi 0, %s207
    %s225 = sphi 0, %s225
    %s227 = sphi 0, %s225
    %s228 = sphi 0, %s227
    %s242 = sphi 0, %s228
    %s246 = sphi 0, %s246
    %s248 = sphi 0, %s246
    %s249 = sphi 0, %s248
    %s263 = sphi 0, %s249
    %s267 = sphi 0, %s267
    %s269 = sphi 0, %s267
    %s270 = sphi 0, %s269
    %s284 = sphi 0, %s270
    %s290 = sphi 0, %s292
    %s293 = sphi 0, %s290
    %s294 = sphi 0, %s293
    %s310 = sphi 0, %s294
  $region4: #{decoder_v2_forward.7} parent=0 // loop_header_branch
    %21 = sbr.rel (%p19) target = $region8
  $region5: #{decoder_v2_forward.7} parent=0 // loop_body
    %s23 = ssub.s32 %s18, 1
    %s24 = ssub.s32 %s18, 2
    %s25 = sadd.s32 %s18, 1
    %s26 = ssub.s32 %s18, %s25
    %p27 = scmp.eq.s32.totalorder %s26, 0
    %s29 = sadd.s32 %s28, 1
    %s30 = scalar_select %p27, %s28, %s29
    %p33 = pneg %p27
    %p34 = scmp.eq.s32.totalorder %s18, 1
    %p35 = por %p33, %p34
    %p36 = scmp.ne.s32.totalorder %s28, %s31
    %p37 = scmp.eq.s32.totalorder %s18, 0
    %p38 = por %p36, %p37
    %p39 = scmp.ne.s32.totalorder %s28, %s31
    %p40 = scmp.eq.s32.totalorder %s23, 1
    %p41 = por %p39, %p40
    %p42 = scmp.ne.s32.totalorder %s31, %s32
    %p43 = scmp.eq.s32.totalorder %s23, 0
    %p44 = por %p42, %p43
    %p45 = scmp.ne.s32.totalorder %s31, %s32
    %p46 = scmp.eq.s32.totalorder %s24, 1
    %p47 = por %p45, %p46
    %p49 = scmp.ne.s32.totalorder %s32, %s48
    %p50 = scmp.eq.s32.totalorder %s24, 0
    %p51 = por %p49, %p50
    %s52 = ssub.s32 %s18, %s25
    %p53 = scmp.eq.s32.totalorder %s52, 0
    %s55 = sadd.s32 %s54, 1
    %s56 = scalar_select %p53, %s54, %s55
    %p59 = pneg %p53
    %p60 = scmp.eq.s32.totalorder %s18, 1
    %p61 = por %p59, %p60
    %p62 = scmp.ne.s32.totalorder %s54, %s57
    %p63 = scmp.eq.s32.totalorder %s18, 0
    %p64 = por %p62, %p63
    %p65 = scmp.ne.s32.totalorder %s54, %s57
    %p66 = scmp.eq.s32.totalorder %s23, 1
    %p67 = por %p65, %p66
    %p68 = scmp.ne.s32.totalorder %s57, %s58
    %p69 = scmp.eq.s32.totalorder %s23, 0
    %p70 = por %p68, %p69
    %p71 = scmp.ne.s32.totalorder %s57, %s58
    %p72 = scmp.eq.s32.totalorder %s24, 1
    %p73 = por %p71, %p72
    %p75 = scmp.ne.s32.totalorder %s58, %s74
    %p76 = scmp.eq.s32.totalorder %s24, 0
    %p77 = por %p75, %p76
    %s79 = sadd.s32 %s78, 1
    %p82 = scmp.eq.s32.totalorder %s18, 1
    %p83 = scmp.ne.s32.totalorder %s78, %s80
    %p84 = scmp.eq.s32.totalorder %s18, 0
    %p85 = por %p83, %p84
    %p86 = scmp.ne.s32.totalorder %s78, %s80
    %p87 = scmp.eq.s32.totalorder %s23, 1
    %p88 = por %p86, %p87
    %p89 = scmp.ne.s32.totalorder %s80, %s81
    %p90 = scmp.eq.s32.totalorder %s23, 0
    %p91 = por %p89, %p90
    %p92 = scmp.ne.s32.totalorder %s80, %s81
    %p93 = scmp.eq.s32.totalorder %s24, 1
    %p94 = por %p92, %p93
    %p96 = scmp.ne.s32.totalorder %s81, %s95
    %p97 = scmp.eq.s32.totalorder %s24, 0
    %p98 = por %p96, %p97
    %s100 = sadd.s32 %s99, 1
    %p103 = scmp.eq.s32.totalorder %s18, 1
    %p104 = scmp.ne.s32.totalorder %s99, %s101
    %p105 = scmp.eq.s32.totalorder %s18, 0
    %p106 = por %p104, %p105
    %p107 = scmp.ne.s32.totalorder %s99, %s101
    %p108 = scmp.eq.s32.totalorder %s23, 1
    %p109 = por %p107, %p108
    %p110 = scmp.ne.s32.totalorder %s101, %s102
    %p111 = scmp.eq.s32.totalorder %s23, 0
    %p112 = por %p110, %p111
    %p113 = scmp.ne.s32.totalorder %s101, %s102
    %p114 = scmp.eq.s32.totalorder %s24, 1
    %p115 = por %p113, %p114
    %p117 = scmp.ne.s32.totalorder %s102, %s116
    %p118 = scmp.eq.s32.totalorder %s24, 0
    %p119 = por %p117, %p118
    %s121 = sadd.s32 %s120, 1
    %p124 = scmp.eq.s32.totalorder %s18, 1
    %p125 = scmp.ne.s32.totalorder %s120, %s122
    %p126 = scmp.eq.s32.totalorder %s18, 0
    %p127 = por %p125, %p126
    %p128 = scmp.ne.s32.totalorder %s120, %s122
    %p129 = scmp.eq.s32.totalorder %s23, 1
    %p130 = por %p128, %p129
    %p131 = scmp.ne.s32.totalorder %s122, %s123
    %p132 = scmp.eq.s32.totalorder %s23, 0
    %p133 = por %p131, %p132
    %p134 = scmp.ne.s32.totalorder %s122, %s123
    %p135 = scmp.eq.s32.totalorder %s24, 1
    %p136 = por %p134, %p135
    %p138 = scmp.ne.s32.totalorder %s123, %s137
    %p139 = scmp.eq.s32.totalorder %s24, 0
    %p140 = por %p138, %p139
    %s142 = sadd.s32 %s141, 1
    %p145 = scmp.eq.s32.totalorder %s18, 1
    %p146 = scmp.ne.s32.totalorder %s141, %s143
    %p147 = scmp.eq.s32.totalorder %s18, 0
    %p148 = por %p146, %p147
    %p149 = scmp.ne.s32.totalorder %s141, %s143
    %p150 = scmp.eq.s32.totalorder %s23, 1
    %p151 = por %p149, %p150
    %p152 = scmp.ne.s32.totalorder %s143, %s144
    %p153 = scmp.eq.s32.totalorder %s23, 0
    %p154 = por %p152, %p153
    %p155 = scmp.ne.s32.totalorder %s143, %s144
    %p156 = scmp.eq.s32.totalorder %s24, 1
    %p157 = por %p155, %p156
    %p159 = scmp.ne.s32.totalorder %s144, %s158
    %p160 = scmp.eq.s32.totalorder %s24, 0
    %p161 = por %p159, %p160
    %s163 = sadd.s32 %s162, 1
    %p166 = scmp.eq.s32.totalorder %s18, 1
    %p167 = scmp.ne.s32.totalorder %s162, %s164
    %p168 = scmp.eq.s32.totalorder %s18, 0
    %p169 = por %p167, %p168
    %p170 = scmp.ne.s32.totalorder %s162, %s164
    %p171 = scmp.eq.s32.totalorder %s23, 1
    %p172 = por %p170, %p171
    %p173 = scmp.ne.s32.totalorder %s164, %s165
    %p174 = scmp.eq.s32.totalorder %s23, 0
    %p175 = por %p173, %p174
    %p176 = scmp.ne.s32.totalorder %s164, %s165
    %p177 = scmp.eq.s32.totalorder %s24, 1
    %p178 = por %p176, %p177
    %p180 = scmp.ne.s32.totalorder %s165, %s179
    %p181 = scmp.eq.s32.totalorder %s24, 0
    %p182 = por %p180, %p181
    %s184 = sadd.s32 %s183, 1
    %p187 = scmp.eq.s32.totalorder %s18, 1
    %p188 = scmp.ne.s32.totalorder %s183, %s185
    %p189 = scmp.eq.s32.totalorder %s18, 0
    %p190 = por %p188, %p189
    %p191 = scmp.ne.s32.totalorder %s183, %s185
    %p192 = scmp.eq.s32.totalorder %s23, 1
    %p193 = por %p191, %p192
    %p194 = scmp.ne.s32.totalorder %s185, %s186
    %p195 = scmp.eq.s32.totalorder %s23, 0
    %p196 = por %p194, %p195
    %p197 = scmp.ne.s32.totalorder %s185, %s186
    %p198 = scmp.eq.s32.totalorder %s24, 1
    %p199 = por %p197, %p198
    %p201 = scmp.ne.s32.totalorder %s186, %s200
    %p202 = scmp.eq.s32.totalorder %s24, 0
    %p203 = por %p201, %p202
    %s205 = sadd.s32 %s204, 1
    %p208 = scmp.eq.s32.totalorder %s18, 1
    %p209 = scmp.ne.s32.totalorder %s204, %s206
    %p210 = scmp.eq.s32.totalorder %s18, 0
    %p211 = por %p209, %p210
    %p212 = scmp.ne.s32.totalorder %s204, %s206
    %p213 = scmp.eq.s32.totalorder %s23, 1
    %p214 = por %p212, %p213
    %p215 = scmp.ne.s32.totalorder %s206, %s207
    %p216 = scmp.eq.s32.totalorder %s23, 0
    %p217 = por %p215, %p216
    %p218 = scmp.ne.s32.totalorder %s206, %s207
    %p219 = scmp.eq.s32.totalorder %s24, 1
    %p220 = por %p218, %p219
    %p222 = scmp.ne.s32.totalorder %s207, %s221
    %p223 = scmp.eq.s32.totalorder %s24, 0
    %p224 = por %p222, %p223
    %s226 = sadd.s32 %s225, 1
    %p229 = scmp.eq.s32.totalorder %s18, 1
    %p230 = scmp.ne.s32.totalorder %s225, %s227
    %p231 = scmp.eq.s32.totalorder %s18, 0
    %p232 = por %p230, %p231
    %p233 = scmp.ne.s32.totalorder %s225, %s227
    %p234 = scmp.eq.s32.totalorder %s23, 1
    %p235 = por %p233, %p234
    %p236 = scmp.ne.s32.totalorder %s227, %s228
    %p237 = scmp.eq.s32.totalorder %s23, 0
    %p238 = por %p236, %p237
    %p239 = scmp.ne.s32.totalorder %s227, %s228
    %p240 = scmp.eq.s32.totalorder %s24, 1
    %p241 = por %p239, %p240
    %p243 = scmp.ne.s32.totalorder %s228, %s242
    %p244 = scmp.eq.s32.totalorder %s24, 0
    %p245 = por %p243, %p244
    %s247 = sadd.s32 %s246, 1
    %p250 = scmp.eq.s32.totalorder %s18, 1
    %p251 = scmp.ne.s32.totalorder %s246, %s248
    %p252 = scmp.eq.s32.totalorder %s18, 0
    %p253 = por %p251, %p252
    %p254 = scmp.ne.s32.totalorder %s246, %s248
    %p255 = scmp.eq.s32.totalorder %s23, 1
    %p256 = por %p254, %p255
    %p257 = scmp.ne.s32.totalorder %s248, %s249
    %p258 = scmp.eq.s32.totalorder %s23, 0
    %p259 = por %p257, %p258
    %p260 = scmp.ne.s32.totalorder %s248, %s249
    %p261 = scmp.eq.s32.totalorder %s24, 1
    %p262 = por %p260, %p261
    %p264 = scmp.ne.s32.totalorder %s249, %s263
    %p265 = scmp.eq.s32.totalorder %s24, 0
    %p266 = por %p264, %p265
    %s268 = sadd.s32 %s267, 1
    %p271 = scmp.eq.s32.totalorder %s18, 1
    %p272 = scmp.ne.s32.totalorder %s267, %s269
    %p273 = scmp.eq.s32.totalorder %s18, 0
    %p274 = por %p272, %p273
    %p275 = scmp.ne.s32.totalorder %s267, %s269
    %p276 = scmp.eq.s32.totalorder %s23, 1
    %p277 = por %p275, %p276
    %p278 = scmp.ne.s32.totalorder %s269, %s270
    %p279 = scmp.eq.s32.totalorder %s23, 0
    %p280 = por %p278, %p279
    %p281 = scmp.ne.s32.totalorder %s269, %s270
    %p282 = scmp.eq.s32.totalorder %s24, 1
    %p283 = por %p281, %p282
    %p285 = scmp.ne.s32.totalorder %s270, %s284
    %p286 = scmp.eq.s32.totalorder %s24, 0
    %p287 = por %p285, %p286
    %s288 = ssub.s32 %s18, %s25
    %p289 = scmp.eq.s32.totalorder %s288, 0
    %s291 = sadd.s32 %s290, 1
    %s292 = scalar_select %p289, %s290, %s291
    %p295 = pneg %p289
    %p296 = scmp.eq.s32.totalorder %s18, 1
    %p297 = por %p295, %p296
    %p298 = scmp.ne.s32.totalorder %s290, %s293
    %p299 = scmp.eq.s32.totalorder %s18, 0
    %p300 = por %p298, %p299
    %p301 = scmp.ne.s32.totalorder %s290, %s293
    %p302 = scmp.eq.s32.totalorder %s23, 1
    %p303 = por %p301, %p302
    %p304 = scmp.ne.s32.totalorder %s293, %s294
    %p305 = scmp.eq.s32.totalorder %s23, 0
    %p306 = por %p304, %p305
    %p307 = scmp.ne.s32.totalorder %s293, %s294
    %p308 = scmp.eq.s32.totalorder %s24, 1
    %p309 = por %p307, %p308
    %p311 = scmp.ne.s32.totalorder %s294, %s310
    %p312 = scmp.eq.s32.totalorder %s24, 0
    %p313 = por %p311, %p312
    %p314 = scmp.le.s32.totalorder 1, %s18
    %p315 = scmp.lt.s32.totalorder %s18, 3
    %p316 = pnand %p314, %p315
    %p317 = pneg %p316
    // Predicated region
    $region9: #{decoder_v2_forward.7} parent=5 // pred_check
      _
    $region10: #{decoder_v2_forward.7} parent=5 // pred_check_branch
      %319 = sbr.rel (%p316) target = $region12
    $region11: #{decoder_v2_forward.7} parent=5 // pred_region
      %s320 = ssub.s32 %s18, 1
      // Predicated region
      $region13: #{decoder_v2_forward.7} parent=11 // pred_check
        %p321 = pneg %p91
      $region14: #{decoder_v2_forward.7} parent=11 // pred_check_branch
        %323 = sbr.rel (%p321) target = $region16
      $region15: #{decoder_v2_forward.7} parent=11 // pred_region
        _
      $region16: #{decoder_v2_forward.7} parent=11 // pred_fallthru
        _
      // Predicated region
      $region17: #{decoder_v2_forward.7} parent=11 // pred_check
        %p324 = pneg %p112
      $region18: #{decoder_v2_forward.7} parent=11 // pred_check_branch
        %326 = sbr.rel (%p324) target = $region20
      $region19: #{decoder_v2_forward.7} parent=11 // pred_region
        _
      $region20: #{decoder_v2_forward.7} parent=11 // pred_fallthru
        _
      // Predicated region
      $region21: #{decoder_v2_forward.7} parent=11 // pred_check
        %p327 = pneg %p133
      $region22: #{decoder_v2_forward.7} parent=11 // pred_check_branch
        %329 = sbr.rel (%p327) target = $region24
      $region23: #{decoder_v2_forward.7} parent=11 // pred_region
        _
      $region24: #{decoder_v2_forward.7} parent=11 // pred_fallthru
        _
      // Predicated region
      $region25: #{decoder_v2_forward.7} parent=11 // pred_check
        %p330 = pneg %p154
      $region26: #{decoder_v2_forward.7} parent=11 // pred_check_branch
        %332 = sbr.rel (%p330) target = $region28
      $region27: #{decoder_v2_forward.7} parent=11 // pred_region
        _
      $region28: #{decoder_v2_forward.7} parent=11 // pred_fallthru
        _
      // Predicated region
      $region29: #{decoder_v2_forward.7} parent=11 // pred_check
        %p333 = pneg %p175
      $region30: #{decoder_v2_forward.7} parent=11 // pred_check_branch
        %335 = sbr.rel (%p333) target = $region32
      $region31: #{decoder_v2_forward.7} parent=11 // pred_region
        _
      $region32: #{decoder_v2_forward.7} parent=11 // pred_fallthru
        _
      // Predicated region
      $region33: #{decoder_v2_forward.7} parent=11 // pred_check
        %p336 = pneg %p196
      $region34: #{decoder_v2_forward.7} parent=11 // pred_check_branch
        %338 = sbr.rel (%p336) target = $region36
      $region35: #{decoder_v2_forward.7} parent=11 // pred_region
        _
      $region36: #{decoder_v2_forward.7} parent=11 // pred_fallthru
        _
      // Predicated region
      $region37: #{decoder_v2_forward.7} parent=11 // pred_check
        %p339 = pneg %p217
      $region38: #{decoder_v2_forward.7} parent=11 // pred_check_branch
        %341 = sbr.rel (%p339) target = $region40
      $region39: #{decoder_v2_forward.7} parent=11 // pred_region
        _
      $region40: #{decoder_v2_forward.7} parent=11 // pred_fallthru
        _
      // Predicated region
      $region41: #{decoder_v2_forward.7} parent=11 // pred_check
        %p342 = pneg %p238
      $region42: #{decoder_v2_forward.7} parent=11 // pred_check_branch
        %344 = sbr.rel (%p342) target = $region44
      $region43: #{decoder_v2_forward.7} parent=11 // pred_region
        _
      $region44: #{decoder_v2_forward.7} parent=11 // pred_fallthru
        _
      // Predicated region
      $region45: #{decoder_v2_forward.7} parent=11 // pred_check
        %p345 = pneg %p259
      $region46: #{decoder_v2_forward.7} parent=11 // pred_check_branch
        %347 = sbr.rel (%p345) target = $region48
      $region47: #{decoder_v2_forward.7} parent=11 // pred_region
        _
      $region48: #{decoder_v2_forward.7} parent=11 // pred_fallthru
        _
      // Predicated region
      $region49: #{decoder_v2_forward.7} parent=11 // pred_check
        %p348 = pneg %p280
      $region50: #{decoder_v2_forward.7} parent=11 // pred_check_branch
        %350 = sbr.rel (%p348) target = $region52
      $region51: #{decoder_v2_forward.7} parent=11 // pred_region
        _
      $region52: #{decoder_v2_forward.7} parent=11 // pred_fallthru
        _
    $region12: #{decoder_v2_forward.7} parent=5 // pred_fallthru
      _
    %p351 = scmp.lt.s32.totalorder %s18, 2
    // Predicated region
    $region53: #{decoder_v2_forward.7} parent=5 // pred_check
      %p352 = pneg %p351
    $region54: #{decoder_v2_forward.7} parent=5 // pred_check_branch
      %354 = sbr.rel (%p352) target = $region56
    $region55: #{decoder_v2_forward.7} parent=5 // pred_region
      // Predicated region
      $region57: #{decoder_v2_forward.7} parent=55 // pred_check
        %p355 = pneg %p38
      $region58: #{decoder_v2_forward.7} parent=55 // pred_check_branch
        %357 = sbr.rel (%p355) target = $region60
      $region59: #{decoder_v2_forward.7} parent=55 // pred_region
        %p358 = scmp.lt.s32.totalorder %s18, 1
        %s359 = scalar_select %p358, %s18, 1
        %s360 = scalar_lea.vmem %s0, %s359
      $region60: #{decoder_v2_forward.7} parent=55 // pred_fallthru
        _
      // Predicated region
      $region61: #{decoder_v2_forward.7} parent=55 // pred_check
        %p361 = pneg %p64
      $region62: #{decoder_v2_forward.7} parent=55 // pred_check_branch
        %363 = sbr.rel (%p361) target = $region64
      $region63: #{decoder_v2_forward.7} parent=55 // pred_region
        %p364 = scmp.lt.s32.totalorder %s18, 1
        %s365 = scalar_select %p364, %s18, 1
        %s366 = smul.addr %s365, 8
        %s367 = scalar_lea.vmem %s1, %s366
      $region64: #{decoder_v2_forward.7} parent=55 // pred_fallthru
        _
    $region56: #{decoder_v2_forward.7} parent=5 // pred_fallthru
      _
    %p368 = scmp.le.s32.totalorder 1, %s18
    %p369 = scmp.lt.s32.totalorder %s18, 3
    %p370 = pnand %p368, %p369
    %p371 = pneg %p370
    // Predicated region
    $region65: #{decoder_v2_forward.7} parent=5 // pred_check
      _
    $region66: #{decoder_v2_forward.7} parent=5 // pred_check_branch
      %373 = sbr.rel (%p370) target = $region68
    $region67: #{decoder_v2_forward.7} parent=5 // pred_region
      %s374 = ssub.s32 %s18, 1
      %p375 = scmp.lt.s32.totalorder %s23, 1
      %s376 = scalar_select %p375, %s23, 1
      %s377 = scalar_lea.vmem %s0, %s376
      %p378 = pneg %p44
      %p379 = pneg %p41
      %p380 = scmp.lt.s32.totalorder %s23, 1
      %s381 = scalar_select %p380, %s23, 1
      %s382 = smul.addr %s381, 8
      %s383 = scalar_lea.vmem %s1, %s382
      %p384 = pneg %p70
      %p385 = pneg %p67
      %p386 = pneg %p91
      %p387 = pneg %p88
      %p388 = pneg %p112
      %p389 = pneg %p109
      %p390 = pneg %p133
      %p391 = pneg %p130
      %p392 = pneg %p154
      %p393 = pneg %p151
      %p394 = pneg %p175
      %p395 = pneg %p172
      %p396 = pneg %p196
      %p397 = pneg %p193
      %p398 = pneg %p217
      %p399 = pneg %p214
      %p400 = pneg %p238
      %p401 = pneg %p235
      %p402 = pneg %p259
      %p403 = pneg %p256
      %p404 = pneg %p280
      %p405 = pneg %p277
      %p406 = pneg %p306
      %p407 = pneg %p303
      %p408 = scmp.lt.s32.totalorder %s23, 1
      %s409 = scalar_select %p408, %s23, 1
      %s410 = smul.addr %s409, 8
      %s411 = scalar_lea.vmem %s12, %s410
      %p412 = scmp.lt.s32.totalorder %s23, 1
      %s413 = scalar_select %p412, %s23, 1
      %s414 = scalar_lea.vmem %s0, %s413
      %p415 = scmp.lt.s32.totalorder %s23, 1
      %s416 = scalar_select %p415, %s23, 1
      %s417 = smul.addr %s416, 8
      %s418 = scalar_lea.vmem %s1, %s417
      %p419 = scmp.lt.s32.totalorder %s23, 1
      %s420 = scalar_select %p419, %s23, 1
      %s421 = smul.addr %s420, 8
      %s422 = scalar_lea.vmem %s12, %s421
      %v424 = vld [vmem:[%s418] sm:$0xff]
      %v425 = vld [vmem:[%s414] sm:$0x1]
      %v426 = vpack.c.bf16 %v424, %v424
      %v427 = vld [vmem:[%s2] sm:$0xff]
      %v428 = vld [vmem:[%s2 + $0x8] sm:$0xff]
      %v429 = vld [vmem:[%s2 + $0x10] sm:$0xff]
      %v430 = vld [vmem:[%s2 + $0x18] sm:$0xff]
      %v431 = vpack.c.bf16 %v428, %v427
      %v432 = vpack.c.bf16 %v430, %v429
      %v433 = vld [vmem:[%s6] sm:$0x1]
      %v435 = vlaneseq
      %v436 = vshrl.u32 %v435, 7
      %v437 = vsub.s32 0, %v436
      %v438 = vrot.slane %v433, %v437
      %vm440 = vcmask 261120
      %v442 = vsel %vm440, %v426, 0
      %444 = vmatprep.subr.bf16.mxu0 0
      %445 = vmatpush1.bf16.msra.mxu0 %v431
      %446 = vmatprep.subr.bf16.mxu0 0
      %447 = vmatpush1.bf16.msra.mxu0 %v432
      %448 = vmatprep.subr.bf16.mxu0 0
      %449 = vmatpush1.bf16.msra.mxu0 0
      %450 = vmatprep.subr.bf16.mxu0 0
      %451 = vmatpush1.bf16.msra.mxu0 0
      %452 = vmatprep.subr.bf16.mxu0 0
      %453 = vmatpush1.bf16.msra.mxu0 0
      %454 = vmatprep.subr.bf16.mxu0 0
      %455 = vmatpush1.bf16.msra.mxu0 0
      %456 = vmatprep.subr.bf16.mxu0 0
      %457 = vmatpush1.bf16.msra.mxu0 0
      %458 = vmatprep.subr.bf16.mxu0 0
      %459 = vmatpush1.bf16.msra.mxu0 0
      %460 = vmatprep.subr.bf16.mxu0 0
      %461 = vmatpush1.bf16.msra.mxu0 0
      %462 = vmatprep.subr.bf16.mxu0 0
      %463 = vmatpush1.bf16.msra.mxu0 0
      %464 = vmatprep.subr.bf16.mxu0 0
      %465 = vmatpush1.bf16.msra.mxu0 0
      %466 = vmatprep.subr.bf16.mxu0 0
      %467 = vmatpush1.bf16.msra.mxu0 0
      %468 = vmatprep.subr.bf16.mxu0 0
      %469 = vmatpush1.bf16.msra.mxu0 0
      %470 = vmatprep.subr.bf16.mxu0 0
      %471 = vmatpush1.bf16.msra.mxu0 0
      %472 = vmatprep.subr.bf16.mxu0 0
      %473 = vmatpush1.bf16.msra.mxu0 0
      %474 = vmatprep.subr.bf16.mxu0 0
      %475 = vmatpush1.bf16.msra.mxu0 0
      %476 = vmatprep.mubr.bf16.mxu0 0
      %477 = vmatmul.mubr.bf16.gmra.mrb[0].mxu0 %v442
      %v478 = vpop.f32.mrb[0].mxu0
      %v479 = vadd.f32 %v438, %v478
      %v480 = vpop.f32.mrb[0].mxu0
      %v481 = vpop.f32.mrb[0].mxu0
      %v482 = vpop.f32.mrb[0].mxu0
      %483 = vdwg.mxu0
      %v484 = vld [vmem:[%s3] sm:$0xff]
      %v485 = vld [vmem:[%s3 + $0x8] sm:$0xff]
      %v486 = vld [vmem:[%s3 + $0x10] sm:$0xff]
      %v487 = vld [vmem:[%s3 + $0x18] sm:$0xff]
      %v488 = vpack.c.bf16 %v485, %v484
      %v489 = vpack.c.bf16 %v487, %v486
      %v490 = vld [vmem:[%s7] sm:$0x1]
      %v492 = vlaneseq
      %v493 = vshrl.u32 %v492, 7
      %v494 = vsub.s32 0, %v493
      %v495 = vrot.slane %v490, %v494
      %497 = vmatprep.subr.bf16.mxu0 0
      %498 = vmatpush1.bf16.msra.mxu0 %v488
      %499 = vmatprep.subr.bf16.mxu0 0
      %500 = vmatpush1.bf16.msra.mxu0 %v489
      %501 = vmatprep.subr.bf16.mxu0 0
      %502 = vmatpush1.bf16.msra.mxu0 0
      %503 = vmatprep.subr.bf16.mxu0 0
      %504 = vmatpush1.bf16.msra.mxu0 0
      %505 = vmatprep.subr.bf16.mxu0 0
      %506 = vmatpush1.bf16.msra.mxu0 0
      %507 = vmatprep.subr.bf16.mxu0 0
      %508 = vmatpush1.bf16.msra.mxu0 0
      %509 = vmatprep.subr.bf16.mxu0 0
      %510 = vmatpush1.bf16.msra.mxu0 0
      %511 = vmatprep.subr.bf16.mxu0 0
      %512 = vmatpush1.bf16.msra.mxu0 0
      %513 = vmatprep.subr.bf16.mxu0 0
      %514 = vmatpush1.bf16.msra.mxu0 0
      %515 = vmatprep.subr.bf16.mxu0 0
      %516 = vmatpush1.bf16.msra.mxu0 0
      %517 = vmatprep.subr.bf16.mxu0 0
      %518 = vmatpush1.bf16.msra.mxu0 0
      %519 = vmatprep.subr.bf16.mxu0 0
      %520 = vmatpush1.bf16.msra.mxu0 0
      %521 = vmatprep.subr.bf16.mxu0 0
      %522 = vmatpush1.bf16.msra.mxu0 0
      %523 = vmatprep.subr.bf16.mxu0 0
      %524 = vmatpush1.bf16.msra.mxu0 0
      %525 = vmatprep.subr.bf16.mxu0 0
      %526 = vmatpush1.bf16.msra.mxu0 0
      %527 = vmatprep.subr.bf16.mxu0 0
      %528 = vmatpush1.bf16.msra.mxu0 0
      %529 = vmatprep.mubr.bf16.mxu0 0
      %530 = vmatmul.mubr.bf16.gmra.mrb[0].mxu0 %v442
      %v531 = vpop.f32.mrb[0].mxu0
      %v532 = vadd.f32 %v495, %v531
      %v533 = vpop.f32.mrb[0].mxu0
      %v534 = vpop.f32.mrb[0].mxu0
      %v535 = vpop.f32.mrb[0].mxu0
      %536 = vdwg.mxu0
      %v537 = vld [vmem:[%s4] sm:$0xff]
      %v538 = vld [vmem:[%s4 + $0x8] sm:$0xff]
      %v539 = vld [vmem:[%s4 + $0x10] sm:$0xff]
      %v540 = vld [vmem:[%s4 + $0x18] sm:$0xff]
      %v541 = vpack.c.bf16 %v538, %v537
      %v542 = vpack.c.bf16 %v540, %v539
      %v543 = vld [vmem:[%s8] sm:$0x1]
      %v545 = vlaneseq
      %v546 = vshrl.u32 %v545, 7
      %v547 = vsub.s32 0, %v546
      %v548 = vrot.slane %v543, %v547
      %550 = vmatprep.subr.bf16.mxu0 0
      %551 = vmatpush1.bf16.msra.mxu0 %v541
      %552 = vmatprep.subr.bf16.mxu0 0
      %553 = vmatpush1.bf16.msra.mxu0 %v542
      %554 = vmatprep.subr.bf16.mxu0 0
      %555 = vmatpush1.bf16.msra.mxu0 0
      %556 = vmatprep.subr.bf16.mxu0 0
      %557 = vmatpush1.bf16.msra.mxu0 0
      %558 = vmatprep.subr.bf16.mxu0 0
      %559 = vmatpush1.bf16.msra.mxu0 0
      %560 = vmatprep.subr.bf16.mxu0 0
      %561 = vmatpush1.bf16.msra.mxu0 0
      %562 = vmatprep.subr.bf16.mxu0 0
      %563 = vmatpush1.bf16.msra.mxu0 0
      %564 = vmatprep.subr.bf16.mxu0 0
      %565 = vmatpush1.bf16.msra.mxu0 0
      %566 = vmatprep.subr.bf16.mxu0 0
      %567 = vmatpush1.bf16.msra.mxu0 0
      %568 = vmatprep.subr.bf16.mxu0 0
      %569 = vmatpush1.bf16.msra.mxu0 0
      %570 = vmatprep.subr.bf16.mxu0 0
      %571 = vmatpush1.bf16.msra.mxu0 0
      %572 = vmatprep.subr.bf16.mxu0 0
      %573 = vmatpush1.bf16.msra.mxu0 0
      %574 = vmatprep.subr.bf16.mxu0 0
      %575 = vmatpush1.bf16.msra.mxu0 0
      %576 = vmatprep.subr.bf16.mxu0 0
      %577 = vmatpush1.bf16.msra.mxu0 0
      %578 = vmatprep.subr.bf16.mxu0 0
      %579 = vmatpush1.bf16.msra.mxu0 0
      %580 = vmatprep.subr.bf16.mxu0 0
      %581 = vmatpush1.bf16.msra.mxu0 0
      %582 = vmatprep.mubr.bf16.mxu0 0
      %583 = vmatmul.mubr.bf16.gmra.mrb[0].mxu0 %v442
      %v584 = vpop.f32.mrb[0].mxu0
      %v585 = vadd.f32 %v548, %v584
      %v586 = vpop.f32.mrb[0].mxu0
      %v587 = vpop.f32.mrb[0].mxu0
      %v588 = vpop.f32.mrb[0].mxu0
      %589 = vdwg.mxu0
      %v590 = vpack.c.bf16 %v479, %v479
      %v591 = vpack.c.bf16 %v532, %v532
      %v592 = vpack.c.bf16 %v585, %v585
      %vm593 = vcmask 64512
      %v595 = vsel %vm593, %v590, 0
      %v598 = vsel %vm593, %v591, 0
      %600 = vmatprep.subr.bf16.mxu0 0
      %601 = vmatpush1.bf16.xpose.msra.mxu0 %v598
      %602 = vmatprep.subr.bf16.mxu0 0
      %603 = vmatpush1.bf16.xpose.msra.mxu0 0
      %604 = vmatprep.subr.bf16.mxu0 0
      %605 = vmatpush1.bf16.xpose.msra.mxu0 0
      %606 = vmatprep.subr.bf16.mxu0 0
      %607 = vmatpush1.bf16.xpose.msra.mxu0 0
      %608 = vmatprep.subr.bf16.mxu0 0
      %609 = vmatpush1.bf16.xpose.msra.mxu0 0
      %610 = vmatprep.subr.bf16.mxu0 0
      %611 = vmatpush1.bf16.xpose.msra.mxu0 0
      %612 = vmatprep.subr.bf16.mxu0 0
      %613 = vmatpush1.bf16.xpose.msra.mxu0 0
      %614 = vmatprep.subr.bf16.mxu0 0
      %615 = vmatpush1.bf16.xpose.msra.mxu0 0
      %616 = vmatprep.subr.bf16.mxu0 0
      %617 = vmatpush1.bf16.xpose.msra.mxu0 0
      %618 = vmatprep.subr.bf16.mxu0 0
      %619 = vmatpush1.bf16.xpose.msra.mxu0 0
      %620 = vmatprep.subr.bf16.mxu0 0
      %621 = vmatpush1.bf16.xpose.msra.mxu0 0
      %622 = vmatprep.subr.bf16.mxu0 0
      %623 = vmatpush1.bf16.xpose.msra.mxu0 0
      %624 = vmatprep.subr.bf16.mxu0 0
      %625 = vmatpush1.bf16.xpose.msra.mxu0 0
      %626 = vmatprep.subr.bf16.mxu0 0
      %627 = vmatpush1.bf16.xpose.msra.mxu0 0
      %628 = vmatprep.subr.bf16.mxu0 0
      %629 = vmatpush1.bf16.xpose.msra.mxu0 0
      %630 = vmatprep.subr.bf16.mxu0 0
      %631 = vmatpush1.bf16.xpose.msra.mxu0 0
      %632 = vmatprep.mubr.bf16.mxu0 0
      %633 = vmatmul.mubr.bf16.gmra.mrb[0].mxu0 %v595
      %v634 = vpop.f32.mrb[0].mxu0
      %v635 = vadd.f32 0.0, %v634
      %v636 = vpop.f32.mrb[0].mxu0
      %v637 = vpop.f32.mrb[0].mxu0
      %v638 = vpop.f32.mrb[0].mxu0
      %639 = vdwg.mxu0
      %v640 = vmul.f32 %v635, 0.35355338
      %v642 = vlaneseq
      %v643 = vshrl.u32 %v642, 7
      %v644 = vsub.s32 0, %v643
      %v645 = vrot.slane %v425, %v644
      %v647 = vadd.f32 %v640, %v645
      %v648 = vsel %vm593, %v647, -inf
      %649 = vmax.xlane.f32.xlu0 %v648
      %v650 = vpop.xlane.xlu0 %649
      %v651 = vsub.f32 %v647, %v650
      %v652 = vmul.f32 %v651, 1.442695
      %v653 = vpow.pop %v652
      %v654 = vsel %vm593, %v653, 0.0
      %655 = vadd.xlane.f32.xlu0 %v654
      %v656 = vpop.xlane.xlu0 %655
      %v657 = vrcp.pop %v656
      %v658 = vmul.f32 %v653, %v657
      %v659 = vpack.c.bf16 %v658, %v658
      %v661 = vsel %vm593, %v659, 0
      %vm663 = vcmask 1043456
      %v665 = vsel %vm663, %v592, 0
      %667 = vmatprep.subr.bf16.mxu0 0
      %668 = vmatpush1.bf16.msra.mxu0 %v665
      %669 = vmatprep.subr.bf16.mxu0 0
      %670 = vmatpush1.bf16.msra.mxu0 0
      %671 = vmatprep.subr.bf16.mxu0 0
      %672 = vmatpush1.bf16.msra.mxu0 0
      %673 = vmatprep.subr.bf16.mxu0 0
      %674 = vmatpush1.bf16.msra.mxu0 0
      %675 = vmatprep.subr.bf16.mxu0 0
      %676 = vmatpush1.bf16.msra.mxu0 0
      %677 = vmatprep.subr.bf16.mxu0 0
      %678 = vmatpush1.bf16.msra.mxu0 0
      %679 = vmatprep.subr.bf16.mxu0 0
      %680 = vmatpush1.bf16.msra.mxu0 0
      %681 = vmatprep.subr.bf16.mxu0 0
      %682 = vmatpush1.bf16.msra.mxu0 0
      %683 = vmatprep.subr.bf16.mxu0 0
      %684 = vmatpush1.bf16.msra.mxu0 0
      %685 = vmatprep.subr.bf16.mxu0 0
      %686 = vmatpush1.bf16.msra.mxu0 0
      %687 = vmatprep.subr.bf16.mxu0 0
      %688 = vmatpush1.bf16.msra.mxu0 0
      %689 = vmatprep.subr.bf16.mxu0 0
      %690 = vmatpush1.bf16.msra.mxu0 0
      %691 = vmatprep.subr.bf16.mxu0 0
      %692 = vmatpush1.bf16.msra.mxu0 0
      %693 = vmatprep.subr.bf16.mxu0 0
      %694 = vmatpush1.bf16.msra.mxu0 0
      %695 = vmatprep.subr.bf16.mxu0 0
      %696 = vmatpush1.bf16.msra.mxu0 0
      %697 = vmatprep.subr.bf16.mxu0 0
      %698 = vmatpush1.bf16.msra.mxu0 0
      %699 = vmatprep.mubr.bf16.mxu0 0
      %700 = vmatmul.mubr.bf16.gmra.mrb[0].mxu0 %v661
      %v701 = vpop.f32.mrb[0].mxu0
      %v702 = vadd.f32 0.0, %v701
      %v703 = vpop.f32.mrb[0].mxu0
      %v704 = vpop.f32.mrb[0].mxu0
      %v705 = vpop.f32.mrb[0].mxu0
      %706 = vdwg.mxu0
      %v707 = vpack.c.bf16 %v702, %v702
      %v708 = vld [vmem:[%s5] sm:$0xff]
      %v709 = vpack.c.bf16 %v708, %v708
      %711 = vrot.lane.b32.xlu0 %v590, 120
      %v712 = vpop.permute.xlu0 %711
      %714 = vrot.lane.b32.xlu0 %v591, 120
      %v715 = vpop.permute.xlu0 %714
      %v717 = vsel %vm593, %v712, 0
      %v720 = vsel %vm593, %v715, 0
      %722 = vmatprep.subr.bf16.mxu0 0
      %723 = vmatpush1.bf16.xpose.msra.mxu0 %v720
      %724 = vmatprep.subr.bf16.mxu0 0
      %725 = vmatpush1.bf16.xpose.msra.mxu0 0
      %726 = vmatprep.subr.bf16.mxu0 0
      %727 = vmatpush1.bf16.xpose.msra.mxu0 0
      %728 = vmatprep.subr.bf16.mxu0 0
      %729 = vmatpush1.bf16.xpose.msra.mxu0 0
      %730 = vmatprep.subr.bf16.mxu0 0
      %731 = vmatpush1.bf16.xpose.msra.mxu0 0
      %732 = vmatprep.subr.bf16.mxu0 0
      %733 = vmatpush1.bf16.xpose.msra.mxu0 0
      %734 = vmatprep.subr.bf16.mxu0 0
      %735 = vmatpush1.bf16.xpose.msra.mxu0 0
      %736 = vmatprep.subr.bf16.mxu0 0
      %737 = vmatpush1.bf16.xpose.msra.mxu0 0
      %738 = vmatprep.subr.bf16.mxu0 0
      %739 = vmatpush1.bf16.xpose.msra.mxu0 0
      %740 = vmatprep.subr.bf16.mxu0 0
      %741 = vmatpush1.bf16.xpose.msra.mxu0 0
      %742 = vmatprep.subr.bf16.mxu0 0
      %743 = vmatpush1.bf16.xpose.msra.mxu0 0
      %744 = vmatprep.subr.bf16.mxu0 0
      %745 = vmatpush1.bf16.xpose.msra.mxu0 0
      %746 = vmatprep.subr.bf16.mxu0 0
      %747 = vmatpush1.bf16.xpose.msra.mxu0 0
      %748 = vmatprep.subr.bf16.mxu0 0
      %749 = vmatpush1.bf16.xpose.msra.mxu0 0
      %750 = vmatprep.subr.bf16.mxu0 0
      %751 = vmatpush1.bf16.xpose.msra.mxu0 0
      %752 = vmatprep.subr.bf16.mxu0 0
      %753 = vmatpush1.bf16.xpose.msra.mxu0 0
      %754 = vmatprep.mubr.bf16.mxu0 0
      %755 = vmatmul.mubr.bf16.gmra.mrb[0].mxu0 %v717
      %v756 = vpop.f32.mrb[0].mxu0
      %v757 = vadd.f32 0.0, %v756
      %v758 = vpop.f32.mrb[0].mxu0
      %v759 = vpop.f32.mrb[0].mxu0
      %v760 = vpop.f32.mrb[0].mxu0
      %761 = vdwg.mxu0
      %v762 = vmul.f32 %v757, 0.35355338
      %v763 = vadd.f32 %v762, %v645
      %v764 = vsel %vm593, %v763, -inf
      %765 = vmax.xlane.f32.xlu0 %v764
      %v766 = vpop.xlane.xlu0 %765
      %v767 = vsub.f32 %v763, %v766
      %v768 = vmul.f32 %v767, 1.442695
      %v769 = vpow.pop %v768
      %v770 = vsel %vm593, %v769, 0.0
      %771 = vadd.xlane.f32.xlu0 %v770
      %v772 = vpop.xlane.xlu0 %771
      %v773 = vrcp.pop %v772
      %v774 = vmul.f32 %v769, %v773
      %v775 = vpack.c.bf16 %v774, %v774
      %777 = vrot.lane.b32.xlu0 %v592, 120
      %v778 = vpop.permute.xlu0 %777
      %v780 = vsel %vm593, %v775, 0
      %v783 = vsel %vm663, %v778, 0
      %785 = vmatprep.subr.bf16.mxu0 0
      %786 = vmatpush1.bf16.msra.mxu0 %v783
      %787 = vmatprep.subr.bf16.mxu0 0
      %788 = vmatpush1.bf16.msra.mxu0 0
      %789 = vmatprep.subr.bf16.mxu0 0
      %790 = vmatpush1.bf16.msra.mxu0 0
      %791 = vmatprep.subr.bf16.mxu0 0
      %792 = vmatpush1.bf16.msra.mxu0 0
      %793 = vmatprep.subr.bf16.mxu0 0
      %794 = vmatpush1.bf16.msra.mxu0 0
      %795 = vmatprep.subr.bf16.mxu0 0
      %796 = vmatpush1.bf16.msra.mxu0 0
      %797 = vmatprep.subr.bf16.mxu0 0
      %798 = vmatpush1.bf16.msra.mxu0 0
      %799 = vmatprep.subr.bf16.mxu0 0
      %800 = vmatpush1.bf16.msra.mxu0 0
      %801 = vmatprep.subr.bf16.mxu0 0
      %802 = vmatpush1.bf16.msra.mxu0 0
      %803 = vmatprep.subr.bf16.mxu0 0
      %804 = vmatpush1.bf16.msra.mxu0 0
      %805 = vmatprep.subr.bf16.mxu0 0
      %806 = vmatpush1.bf16.msra.mxu0 0
      %807 = vmatprep.subr.bf16.mxu0 0
      %808 = vmatpush1.bf16.msra.mxu0 0
      %809 = vmatprep.subr.bf16.mxu0 0
      %810 = vmatpush1.bf16.msra.mxu0 0
      %811 = vmatprep.subr.bf16.mxu0 0
      %812 = vmatpush1.bf16.msra.mxu0 0
      %813 = vmatprep.subr.bf16.mxu0 0
      %814 = vmatpush1.bf16.msra.mxu0 0
      %815 = vmatprep.subr.bf16.mxu0 0
      %816 = vmatpush1.bf16.msra.mxu0 0
      %817 = vmatprep.mubr.bf16.mxu0 0
      %818 = vmatmul.mubr.bf16.gmra.mrb[0].mxu0 %v780
      %v819 = vpop.f32.mrb[0].mxu0
      %v820 = vadd.f32 0.0, %v819
      %v821 = vpop.f32.mrb[0].mxu0
      %v822 = vpop.f32.mrb[0].mxu0
      %v823 = vpop.f32.mrb[0].mxu0
      %824 = vdwg.mxu0
      %v825 = vpack.c.bf16 %v820, %v820
      %v826 = vld [vmem:[%s5 + $0x8] sm:$0xff]
      %v827 = vpack.c.bf16 %v826, %v826
      %v829 = vsel %vm593, %v825, 0
      %v832 = vsel %vm663, %v827, 0
      %834 = vmatprep.subr.bf16.mxu0 0
      %835 = vmatpush1.bf16.msra.mxu0 %v832
      %836 = vmatprep.subr.bf16.mxu0 0
      %837 = vmatpush1.bf16.msra.mxu0 0
      %838 = vmatprep.subr.bf16.mxu0 0
      %839 = vmatpush1.bf16.msra.mxu0 0
      %840 = vmatprep.subr.bf16.mxu0 0
      %841 = vmatpush1.bf16.msra.mxu0 0
      %842 = vmatprep.subr.bf16.mxu0 0
      %843 = vmatpush1.bf16.msra.mxu0 0
      %844 = vmatprep.subr.bf16.mxu0 0
      %845 = vmatpush1.bf16.msra.mxu0 0
      %846 = vmatprep.subr.bf16.mxu0 0
      %847 = vmatpush1.bf16.msra.mxu0 0
      %848 = vmatprep.subr.bf16.mxu0 0
      %849 = vmatpush1.bf16.msra.mxu0 0
      %850 = vmatprep.subr.bf16.mxu0 0
      %851 = vmatpush1.bf16.msra.mxu0 0
      %852 = vmatprep.subr.bf16.mxu0 0
      %853 = vmatpush1.bf16.msra.mxu0 0
      %854 = vmatprep.subr.bf16.mxu0 0
      %855 = vmatpush1.bf16.msra.mxu0 0
      %856 = vmatprep.subr.bf16.mxu0 0
      %857 = vmatpush1.bf16.msra.mxu0 0
      %858 = vmatprep.subr.bf16.mxu0 0
      %859 = vmatpush1.bf16.msra.mxu0 0
      %860 = vmatprep.subr.bf16.mxu0 0
      %861 = vmatpush1.bf16.msra.mxu0 0
      %862 = vmatprep.subr.bf16.mxu0 0
      %863 = vmatpush1.bf16.msra.mxu0 0
      %864 = vmatprep.subr.bf16.mxu0 0
      %865 = vmatpush1.bf16.msra.mxu0 0
      %866 = vmatprep.mubr.bf16.mxu0 0
      %867 = vmatmul.mubr.bf16.gmra.mrb[0].mxu0 %v829
      %v868 = vpop.f32.mrb[0].mxu0
      %v869 = vadd.f32 0.0, %v868
      %v870 = vpop.f32.mrb[0].mxu0
      %v871 = vpop.f32.mrb[0].mxu0
      %v872 = vpop.f32.mrb[0].mxu0
      %873 = vdwg.mxu0
      %v875 = vsel %vm593, %v707, 0
      %v878 = vsel %vm663, %v709, 0
      %880 = vmatprep.subr.bf16.mxu0 0
      %881 = vmatpush1.bf16.msra.mxu0 %v878
      %882 = vmatprep.subr.bf16.mxu0 0
      %883 = vmatpush1.bf16.msra.mxu0 0
      %884 = vmatprep.subr.bf16.mxu0 0
      %885 = vmatpush1.bf16.msra.mxu0 0
      %886 = vmatprep.subr.bf16.mxu0 0
      %887 = vmatpush1.bf16.msra.mxu0 0
      %888 = vmatprep.subr.bf16.mxu0 0
      %889 = vmatpush1.bf16.msra.mxu0 0
      %890 = vmatprep.subr.bf16.mxu0 0
      %891 = vmatpush1.bf16.msra.mxu0 0
      %892 = vmatprep.subr.bf16.mxu0 0
      %893 = vmatpush1.bf16.msra.mxu0 0
      %894 = vmatprep.subr.bf16.mxu0 0
      %895 = vmatpush1.bf16.msra.mxu0 0
      %896 = vmatprep.subr.bf16.mxu0 0
      %897 = vmatpush1.bf16.msra.mxu0 0
      %898 = vmatprep.subr.bf16.mxu0 0
      %899 = vmatpush1.bf16.msra.mxu0 0
      %900 = vmatprep.subr.bf16.mxu0 0
      %901 = vmatpush1.bf16.msra.mxu0 0
      %902 = vmatprep.subr.bf16.mxu0 0
      %903 = vmatpush1.bf16.msra.mxu0 0
      %904 = vmatprep.subr.bf16.mxu0 0
      %905 = vmatpush1.bf16.msra.mxu0 0
      %906 = vmatprep.subr.bf16.mxu0 0
      %907 = vmatpush1.bf16.msra.mxu0 0
      %908 = vmatprep.subr.bf16.mxu0 0
      %909 = vmatpush1.bf16.msra.mxu0 0
      %910 = vmatprep.subr.bf16.mxu0 0
      %911 = vmatpush1.bf16.msra.mxu0 0
      %912 = vmatprep.mubr.bf16.mxu0 0
      %913 = vmatmul.mubr.bf16.gmra.mrb[0].mxu0 %v875
      %v914 = vpop.f32.mrb[0].mxu0
      %v915 = vadd.f32 %v869, %v914
      %v916 = vpop.f32.mrb[0].mxu0
      %v917 = vpop.f32.mrb[0].mxu0
      %v918 = vpop.f32.mrb[0].mxu0
      %919 = vdwg.mxu0
      %920 = vrot.lane.b32.xlu0 %v590, 112
      %v921 = vpop.permute.xlu0 %920
      %922 = vrot.lane.b32.xlu0 %v591, 112
      %v923 = vpop.permute.xlu0 %922
      %v925 = vsel %vm593, %v921, 0
      %v928 = vsel %vm593, %v923, 0
      %930 = vmatprep.subr.bf16.mxu0 0
      %931 = vmatpush1.bf16.xpose.msra.mxu0 %v928
      %932 = vmatprep.subr.bf16.mxu0 0
      %933 = vmatpush1.bf16.xpose.msra.mxu0 0
      %934 = vmatprep.subr.bf16.mxu0 0
      %935 = vmatpush1.bf16.xpose.msra.mxu0 0
      %936 = vmatprep.subr.bf16.mxu0 0
      %937 = vmatpush1.bf16.xpose.msra.mxu0 0
      %938 = vmatprep.subr.bf16.mxu0 0
      %939 = vmatpush1.bf16.xpose.msra.mxu0 0
      %940 = vmatprep.subr.bf16.mxu0 0
      %941 = vmatpush1.bf16.xpose.msra.mxu0 0
      %942 = vmatprep.subr.bf16.mxu0 0
      %943 = vmatpush1.bf16.xpose.msra.mxu0 0
      %944 = vmatprep.subr.bf16.mxu0 0
      %945 = vmatpush1.bf16.xpose.msra.mxu0 0
      %946 = vmatprep.subr.bf16.mxu0 0
      %947 = vmatpush1.bf16.xpose.msra.mxu0 0
      %948 = vmatprep.subr.bf16.mxu0 0
      %949 = vmatpush1.bf16.xpose.msra.mxu0 0
      %950 = vmatprep.subr.bf16.mxu0 0
      %951 = vmatpush1.bf16.xpose.msra.mxu0 0
      %952 = vmatprep.subr.bf16.mxu0 0
      %953 = vmatpush1.bf16.xpose.msra.mxu0 0
      %954 = vmatprep.subr.bf16.mxu0 0
      %955 = vmatpush1.bf16.xpose.msra.mxu0 0
      %956 = vmatprep.subr.bf16.mxu0 0
      %957 = vmatpush1.bf16.xpose.msra.mxu0 0
      %958 = vmatprep.subr.bf16.mxu0 0
      %959 = vmatpush1.bf16.xpose.msra.mxu0 0
      %960 = vmatprep.subr.bf16.mxu0 0
      %961 = vmatpush1.bf16.xpose.msra.mxu0 0
      %962 = vmatprep.mubr.bf16.mxu0 0
      %963 = vmatmul.mubr.bf16.gmra.mrb[0].mxu0 %v925
      %v964 = vpop.f32.mrb[0].mxu0
      %v965 = vadd.f32 0.0, %v964
      %v966 = vpop.f32.mrb[0].mxu0
      %v967 = vpop.f32.mrb[0].mxu0
      %v968 = vpop.f32.mrb[0].mxu0
      %969 = vdwg.mxu0
      %v970 = vmul.f32 %v965, 0.35355338
      %v971 = vadd.f32 %v970, %v645
      %v972 = vsel %vm593, %v971, -inf
      %973 = vmax.xlane.f32.xlu0 %v972
      %v974 = vpop.xlane.xlu0 %973
      %v975 = vsub.f32 %v971, %v974
      %v976 = vmul.f32 %v975, 1.442695
      %v977 = vpow.pop %v976
      %v978 = vsel %vm593, %v977, 0.0
      %979 = vadd.xlane.f32.xlu0 %v978
      %v980 = vpop.xlane.xlu0 %979
      %v981 = vrcp.pop %v980
      %v982 = vmul.f32 %v977, %v981
      %v983 = vpack.c.bf16 %v982, %v982
      %984 = vrot.lane.b32.xlu0 %v592, 112
      %v985 = vpop.permute.xlu0 %984
      %v987 = vsel %vm593, %v983, 0
      %v990 = vsel %vm663, %v985, 0
      %992 = vmatprep.subr.bf16.mxu0 0
      %993 = vmatpush1.bf16.msra.mxu0 %v990
      %994 = vmatprep.subr.bf16.mxu0 0
      %995 = vmatpush1.bf16.msra.mxu0 0
      %996 = vmatprep.subr.bf16.mxu0 0
      %997 = vmatpush1.bf16.msra.mxu0 0
      %998 = vmatprep.subr.bf16.mxu0 0
      %999 = vmatpush1.bf16.msra.mxu0 0
      %1000 = vmatprep.subr.bf16.mxu0 0
      %1001 = vmatpush1.bf16.msra.mxu0 0
      %1002 = vmatprep.subr.bf16.mxu0 0
      %1003 = vmatpush1.bf16.msra.mxu0 0
      %1004 = vmatprep.subr.bf16.mxu0 0
      %1005 = vmatpush1.bf16.msra.mxu0 0
      %1006 = vmatprep.subr.bf16.mxu0 0
      %1007 = vmatpush1.bf16.msra.mxu0 0
      %1008 = vmatprep.subr.bf16.mxu0 0
      %1009 = vmatpush1.bf16.msra.mxu0 0
      %1010 = vmatprep.subr.bf16.mxu0 0
      %1011 = vmatpush1.bf16.msra.mxu0 0
      %1012 = vmatprep.subr.bf16.mxu0 0
      %1013 = vmatpush1.bf16.msra.mxu0 0
      %1014 = vmatprep.subr.bf16.mxu0 0
      %1015 = vmatpush1.bf16.msra.mxu0 0
      %1016 = vmatprep.subr.bf16.mxu0 0
      %1017 = vmatpush1.bf16.msra.mxu0 0
      %1018 = vmatprep.subr.bf16.mxu0 0
      %1019 = vmatpush1.bf16.msra.mxu0 0
      %1020 = vmatprep.subr.bf16.mxu0 0
      %1021 = vmatpush1.bf16.msra.mxu0 0
      %1022 = vmatprep.subr.bf16.mxu0 0
      %1023 = vmatpush1.bf16.msra.mxu0 0
      %1024 = vmatprep.mubr.bf16.mxu0 0
      %1025 = vmatmul.mubr.bf16.gmra.mrb[0].mxu0 %v987
      %v1026 = vpop.f32.mrb[0].mxu0
      %v1027 = vadd.f32 0.0, %v1026
      %v1028 = vpop.f32.mrb[0].mxu0
      %v1029 = vpop.f32.mrb[0].mxu0
      %v1030 = vpop.f32.mrb[0].mxu0
      %1031 = vdwg.mxu0
      %v1032 = vpack.c.bf16 %v1027, %v1027
      %v1033 = vld [vmem:[%s5 + $0x10] sm:$0xff]
      %v1034 = vpack.c.bf16 %v1033, %v1033
      %v1036 = vsel %vm593, %v1032, 0
      %v1039 = vsel %vm663, %v1034, 0
      %1041 = vmatprep.subr.bf16.mxu0 0
      %1042 = vmatpush1.bf16.msra.mxu0 %v1039
      %1043 = vmatprep.subr.bf16.mxu0 0
      %1044 = vmatpush1.bf16.msra.mxu0 0
      %1045 = vmatprep.subr.bf16.mxu0 0
      %1046 = vmatpush1.bf16.msra.mxu0 0
      %1047 = vmatprep.subr.bf16.mxu0 0
      %1048 = vmatpush1.bf16.msra.mxu0 0
      %1049 = vmatprep.subr.bf16.mxu0 0
      %1050 = vmatpush1.bf16.msra.mxu0 0
      %1051 = vmatprep.subr.bf16.mxu0 0
      %1052 = vmatpush1.bf16.msra.mxu0 0
      %1053 = vmatprep.subr.bf16.mxu0 0
      %1054 = vmatpush1.bf16.msra.mxu0 0
      %1055 = vmatprep.subr.bf16.mxu0 0
      %1056 = vmatpush1.bf16.msra.mxu0 0
      %1057 = vmatprep.subr.bf16.mxu0 0
      %1058 = vmatpush1.bf16.msra.mxu0 0
      %1059 = vmatprep.subr.bf16.mxu0 0
      %1060 = vmatpush1.bf16.msra.mxu0 0
      %1061 = vmatprep.subr.bf16.mxu0 0
      %1062 = vmatpush1.bf16.msra.mxu0 0
      %1063 = vmatprep.subr.bf16.mxu0 0
      %1064 = vmatpush1.bf16.msra.mxu0 0
      %1065 = vmatprep.subr.bf16.mxu0 0
      %1066 = vmatpush1.bf16.msra.mxu0 0
      %1067 = vmatprep.subr.bf16.mxu0 0
      %1068 = vmatpush1.bf16.msra.mxu0 0
      %1069 = vmatprep.subr.bf16.mxu0 0
      %1070 = vmatpush1.bf16.msra.mxu0 0
      %1071 = vmatprep.subr.bf16.mxu0 0
      %1072 = vmatpush1.bf16.msra.mxu0 0
      %1073 = vmatprep.mubr.bf16.mxu0 0
      %1074 = vmatmul.mubr.bf16.gmra.mrb[0].mxu0 %v1036
      %v1075 = vpop.f32.mrb[0].mxu0
      %v1076 = vadd.f32 0.0, %v1075
      %v1077 = vpop.f32.mrb[0].mxu0
      %v1078 = vpop.f32.mrb[0].mxu0
      %v1079 = vpop.f32.mrb[0].mxu0
      %1080 = vdwg.mxu0
      %v1081 = vadd.f32 %v915, %v1076
      %1082 = vrot.lane.b32.xlu0 %v590, 104
      %v1083 = vpop.permute.xlu0 %1082
      %1084 = vrot.lane.b32.xlu0 %v591, 104
      %v1085 = vpop.permute.xlu0 %1084
      %v1087 = vsel %vm593, %v1083, 0
      %v1090 = vsel %vm593, %v1085, 0
      %1092 = vmatprep.subr.bf16.mxu0 0
      %1093 = vmatpush1.bf16.xpose.msra.mxu0 %v1090
      %1094 = vmatprep.subr.bf16.mxu0 0
      %1095 = vmatpush1.bf16.xpose.msra.mxu0 0
      %1096 = vmatprep.subr.bf16.mxu0 0
      %1097 = vmatpush1.bf16.xpose.msra.mxu0 0
      %1098 = vmatprep.subr.bf16.mxu0 0
      %1099 = vmatpush1.bf16.xpose.msra.mxu0 0
      %1100 = vmatprep.subr.bf16.mxu0 0
      %1101 = vmatpush1.bf16.xpose.msra.mxu0 0
      %1102 = vmatprep.subr.bf16.mxu0 0
      %1103 = vmatpush1.bf16.xpose.msra.mxu0 0
      %1104 = vmatprep.subr.bf16.mxu0 0
      %1105 = vmatpush1.bf16.xpose.msra.mxu0 0
      %1106 = vmatprep.subr.bf16.mxu0 0
      %1107 = vmatpush1.bf16.xpose.msra.mxu0 0
      %1108 = vmatprep.subr.bf16.mxu0 0
      %1109 = vmatpush1.bf16.xpose.msra.mxu0 0
      %1110 = vmatprep.subr.bf16.mxu0 0
      %1111 = vmatpush1.bf16.xpose.msra.mxu0 0
      %1112 = vmatprep.subr.bf16.mxu0 0
      %1113 = vmatpush1.bf16.xpose.msra.mxu0 0
      %1114 = vmatprep.subr.bf16.mxu0 0
      %1115 = vmatpush1.bf16.xpose.msra.mxu0 0
      %1116 = vmatprep.subr.bf16.mxu0 0
      %1117 = vmatpush1.bf16.xpose.msra.mxu0 0
      %1118 = vmatprep.subr.bf16.mxu0 0
      %1119 = vmatpush1.bf16.xpose.msra.mxu0 0
      %1120 = vmatprep.subr.bf16.mxu0 0
      %1121 = vmatpush1.bf16.xpose.msra.mxu0 0
      %1122 = vmatprep.subr.bf16.mxu0 0
      %1123 = vmatpush1.bf16.xpose.msra.mxu0 0
      %1124 = vmatprep.mubr.bf16.mxu0 0
      %1125 = vmatmul.mubr.bf16.gmra.mrb[0].mxu0 %v1087
      %v1126 = vpop.f32.mrb[0].mxu0
      %v1127 = vadd.f32 0.0, %v1126
      %v1128 = vpop.f32.mrb[0].mxu0
      %v1129 = vpop.f32.mrb[0].mxu0
      %v1130 = vpop.f32.mrb[0].mxu0
      %1131 = vdwg.mxu0
      %v1132 = vmul.f32 %v1127, 0.35355338
      %v1133 = vadd.f32 %v1132, %v645
      %v1134 = vsel %vm593, %v1133, -inf
      %1135 = vmax.xlane.f32.xlu0 %v1134
      %v1136 = vpop.xlane.xlu0 %1135
      %v1137 = vsub.f32 %v1133, %v1136
      %v1138 = vmul.f32 %v1137, 1.442695
      %v1139 = vpow.pop %v1138
      %v1140 = vsel %vm593, %v1139, 0.0
      %1141 = vadd.xlane.f32.xlu0 %v1140
      %v1142 = vpop.xlane.xlu0 %1141
      %v1143 = vrcp.pop %v1142
      %v1144 = vmul.f32 %v1139, %v1143
      %v1145 = vpack.c.bf16 %v1144, %v1144
      %1146 = vrot.lane.b32.xlu0 %v592, 104
      %v1147 = vpop.permute.xlu0 %1146
      %v1149 = vsel %vm593, %v1145, 0
      %v1152 = vsel %vm663, %v1147, 0
      %1154 = vmatprep.subr.bf16.mxu0 0
      %1155 = vmatpush1.bf16.msra.mxu0 %v1152
      %1156 = vmatprep.subr.bf16.mxu0 0
      %1157 = vmatpush1.bf16.msra.mxu0 0
      %1158 = vmatprep.subr.bf16.mxu0 0
      %1159 = vmatpush1.bf16.msra.mxu0 0
      %1160 = vmatprep.subr.bf16.mxu0 0
      %1161 = vmatpush1.bf16.msra.mxu0 0
      %1162 = vmatprep.subr.bf16.mxu0 0
      %1163 = vmatpush1.bf16.msra.mxu0 0
      %1164 = vmatprep.subr.bf16.mxu0 0
      %1165 = vmatpush1.bf16.msra.mxu0 0
      %1166 = vmatprep.subr.bf16.mxu0 0
      %1167 = vmatpush1.bf16.msra.mxu0 0
      %1168 = vmatprep.subr.bf16.mxu0 0
      %1169 = vmatpush1.bf16.msra.mxu0 0
      %1170 = vmatprep.subr.bf16.mxu0 0
      %1171 = vmatpush1.bf16.msra.mxu0 0
      %1172 = vmatprep.subr.bf16.mxu0 0
      %1173 = vmatpush1.bf16.msra.mxu0 0
      %1174 = vmatprep.subr.bf16.mxu0 0
      %1175 = vmatpush1.bf16.msra.mxu0 0
      %1176 = vmatprep.subr.bf16.mxu0 0
      %1177 = vmatpush1.bf16.msra.mxu0 0
      %1178 = vmatprep.subr.bf16.mxu0 0
      %1179 = vmatpush1.bf16.msra.mxu0 0
      %1180 = vmatprep.subr.bf16.mxu0 0
      %1181 = vmatpush1.bf16.msra.mxu0 0
      %1182 = vmatprep.subr.bf16.mxu0 0
      %1183 = vmatpush1.bf16.msra.mxu0 0
      %1184 = vmatprep.subr.bf16.mxu0 0
      %1185 = vmatpush1.bf16.msra.mxu0 0
      %1186 = vmatprep.mubr.bf16.mxu0 0
      %1187 = vmatmul.mubr.bf16.gmra.mrb[0].mxu0 %v1149
      %v1188 = vpop.f32.mrb[0].mxu0
      %v1189 = vadd.f32 0.0, %v1188
      %v1190 = vpop.f32.mrb[0].mxu0
      %v1191 = vpop.f32.mrb[0].mxu0
      %v1192 = vpop.f32.mrb[0].mxu0
      %1193 = vdwg.mxu0
      %v1194 = vpack.c.bf16 %v1189, %v1189
      %v1195 = vld [vmem:[%s5 + $0x18] sm:$0xff]
      %v1196 = vpack.c.bf16 %v1195, %v1195
      %v1198 = vsel %vm593, %v1194, 0
      %v1201 = vsel %vm663, %v1196, 0
      %1203 = vmatprep.subr.bf16.mxu0 0
      %1204 = vmatpush1.bf16.msra.mxu0 %v1201
      %1205 = vmatprep.subr.bf16.mxu0 0
      %1206 = vmatpush1.bf16.msra.mxu0 0
      %1207 = vmatprep.subr.bf16.mxu0 0
      %1208 = vmatpush1.bf16.msra.mxu0 0
      %1209 = vmatprep.subr.bf16.mxu0 0
      %1210 = vmatpush1.bf16.msra.mxu0 0
      %1211 = vmatprep.subr.bf16.mxu0 0
      %1212 = vmatpush1.bf16.msra.mxu0 0
      %1213 = vmatprep.subr.bf16.mxu0 0
      %1214 = vmatpush1.bf16.msra.mxu0 0
      %1215 = vmatprep.subr.bf16.mxu0 0
      %1216 = vmatpush1.bf16.msra.mxu0 0
      %1217 = vmatprep.subr.bf16.mxu0 0
      %1218 = vmatpush1.bf16.msra.mxu0 0
      %1219 = vmatprep.subr.bf16.mxu0 0
      %1220 = vmatpush1.bf16.msra.mxu0 0
      %1221 = vmatprep.subr.bf16.mxu0 0
      %1222 = vmatpush1.bf16.msra.mxu0 0
      %1223 = vmatprep.subr.bf16.mxu0 0
      %1224 = vmatpush1.bf16.msra.mxu0 0
      %1225 = vmatprep.subr.bf16.mxu0 0
      %1226 = vmatpush1.bf16.msra.mxu0 0
      %1227 = vmatprep.subr.bf16.mxu0 0
      %1228 = vmatpush1.bf16.msra.mxu0 0
      %1229 = vmatprep.subr.bf16.mxu0 0
      %1230 = vmatpush1.bf16.msra.mxu0 0
      %1231 = vmatprep.subr.bf16.mxu0 0
      %1232 = vmatpush1.bf16.msra.mxu0 0
      %1233 = vmatprep.subr.bf16.mxu0 0
      %1234 = vmatpush1.bf16.msra.mxu0 0
      %1235 = vmatprep.mubr.bf16.mxu0 0
      %1236 = vmatmul.mubr.bf16.gmra.mrb[0].mxu0 %v1198
      %v1237 = vpop.f32.mrb[0].mxu0
      %v1238 = vadd.f32 0.0, %v1237
      %v1239 = vpop.f32.mrb[0].mxu0
      %v1240 = vpop.f32.mrb[0].mxu0
      %v1241 = vpop.f32.mrb[0].mxu0
      %1242 = vdwg.mxu0
      %v1243 = vadd.f32 %v1081, %v1238
      %v1244 = vld [vmem:[%s9] sm:$0x1]
      %v1246 = vlaneseq
      %v1247 = vshrl.u32 %v1246, 7
      %v1248 = vsub.s32 0, %v1247
      %v1249 = vrot.slane %v1244, %v1248
      %v1251 = vadd.f32 %v1243, %v1249
      %v1252 = vld [vmem:[%s10] sm:$0x1]
      %v1253 = vld [vmem:[%s11] sm:$0x1]
      %v1254 = vadd.f32 %v424, %v1251
      %v1255 = vsel %vm440, %v1254, 0.0
      %1256 = vadd.xlane.f32.xlu0 %v1255
      %v1257 = vpop.xlane.xlu0 %1256
      %v1258 = vrcp.pop 32.0
      %v1259 = vmul.f32 %v1257, %v1258
      %v1260 = vsub.f32 %v1254, %v1259
      %v1261 = vmul.f32 %v1260, %v1260
      %v1262 = vsel %vm440, %v1261, 0.0
      %1263 = vadd.xlane.f32.xlu0 %v1262
      %v1264 = vpop.xlane.xlu0 %1263
      %v1265 = vmul.f32 %v1264, %v1258
      %v1266 = vadd.f32 %v1265, 1e-05
      %v1267 = vrsqrt.pop %v1266
      %v1268 = vmul.f32 %v1260, %v1267
      %v1270 = vlaneseq
      %v1271 = vshrl.u32 %v1270, 7
      %v1272 = vsub.s32 0, %v1271
      %v1273 = vrot.slane %v1252, %v1272
      %v1275 = vmul.f32 %v1268, %v1273
      %v1277 = vlaneseq
      %v1278 = vshrl.u32 %v1277, 7
      %v1279 = vsub.s32 0, %v1278
      %v1280 = vrot.slane %v1253, %v1279
      %v1282 = vadd.f32 %v1275, %v1280
      %1283 = vst.msk [vmem:[%s422] sm:$0xff] %vm440, %v1282
      %p1284 = scmp.lt.s32.totalorder %s23, 1
      %s1285 = scalar_select %p1284, %s23, 1
      %s1286 = smul.addr %s1285, 8
      %s1287 = scalar_lea.vmem %s12, %s1286
      // Predicated region
      $region69: #{decoder_v2_forward.7} parent=67 // pred_check
        %p1288 = pneg %p303
      $region70: #{decoder_v2_forward.7} parent=67 // pred_check_branch
        %1290 = sbr.rel (%p1288) target = $region72
      $region71: #{decoder_v2_forward.7} parent=67 // pred_region
        _
      $region72: #{decoder_v2_forward.7} parent=67 // pred_fallthru
        _
    $region68: #{decoder_v2_forward.7} parent=5 // pred_fallthru
      _
    %p1291 = scmp.le.s32.totalorder 2, %s18
    // Predicated region
    $region73: #{decoder_v2_forward.7} parent=5 // pred_check
      %p1292 = pneg %p1291
    $region74: #{decoder_v2_forward.7} parent=5 // pred_check_branch
      %1294 = sbr.rel (%p1292) target = $region76
    $region75: #{decoder_v2_forward.7} parent=5 // pred_region
      %s1295 = ssub.s32 %s18, 2
      // Predicated region
      $region77: #{decoder_v2_forward.7} parent=75 // pred_check
        %p1296 = pneg %p309
      $region78: #{decoder_v2_forward.7} parent=75 // pred_check_branch
        %1298 = sbr.rel (%p1296) target = $region80
      $region79: #{decoder_v2_forward.7} parent=75 // pred_region
        %p1299 = scmp.lt.s32.totalorder %s24, 1
        %s1300 = scalar_select %p1299, %s24, 1
        %s1301 = smul.addr %s1300, 8
        %s1302 = scalar_lea.vmem %s12, %s1301
      $region80: #{decoder_v2_forward.7} parent=75 // pred_fallthru
        _
    $region76: #{decoder_v2_forward.7} parent=5 // pred_fallthru
      _
  $region6: #{decoder_v2_forward.7} parent=0 // loop_footer
    %s22 = sadd.s32 1, %s18
  $region7: #{decoder_v2_forward.7} parent=0 // loop_footer_branch
    %17 = sbr.rel target = $region3
  $region8: #{decoder_v2_forward.7} parent=0 // loop_exit
    _

// kernel: decoder_v2_forward.8
$region0: #{decoder_v2_forward.8}
  #allocation0 [shape = 'u32[]', space=smem, size = 0x4, offset = 0x4, fixed_abs, tag = 'smem constant byte address 0x4 - core index']
  #allocation1 [shape = 'u32[144,128]{1,0:T(1,128)}', space=vmem, size = 0x12000, scoped, tag = 'internal scratch']
  %s0 = inlined_call_operand.vmem [shape: f32[2,8,32], index: 0, kind: input, shape index: {}]
  %s1 = inlined_call_operand.vmem [shape: f32[2,8,32], index: 1, kind: input, shape index: {}]
  %s2 = inlined_call_operand.vmem [shape: f32[32,32], index: 2, kind: input, shape index: {}]
  %s3 = inlined_call_operand.vmem [shape: f32[32,32], index: 3, kind: input, shape index: {}]
  %s4 = inlined_call_operand.vmem [shape: f32[32,32], index: 4, kind: input, shape index: {}]
  %s5 = inlined_call_operand.vmem [shape: f32[32,32], index: 5, kind: input, shape index: {}]
  %s6 = inlined_call_operand.vmem [shape: f32[1,32], index: 6, kind: input, shape index: {}]
  %s7 = inlined_call_operand.vmem [shape: f32[1,32], index: 7, kind: input, shape index: {}]
  %s8 = inlined_call_operand.vmem [shape: f32[1,32], index: 8, kind: input, shape index: {}]
  %s9 = inlined_call_operand.vmem [shape: f32[1,32], index: 9, kind: input, shape index: {}]
  %s10 = inlined_call_operand.vmem [shape: f32[1,32], index: 10, kind: input, shape index: {}]
  %s11 = inlined_call_operand.vmem [shape: f32[1,32], index: 11, kind: input, shape index: {}]
  %s12 = inlined_call_operand.vmem [shape: f32[32,64], index: 12, kind: input, shape index: {}]
  %s13 = inlined_call_operand.vmem [shape: f32[1,64], index: 13, kind: input, shape index: {}]
  %s14 = inlined_call_operand.vmem [shape: f32[64,32], index: 14, kind: input, shape index: {}]
  %s15 = inlined_call_operand.vmem [shape: f32[1,32], index: 15, kind: input, shape index: {}]
  %s16 = inlined_call_operand.vmem [shape: f32[1,32], index: 16, kind: input, shape index: {}]
  %s17 = inlined_call_operand.vmem [shape: f32[1,32], index: 17, kind: input, shape index: {}]
  %s18 = inlined_call_operand.vmem [shape: f32[2,8,32], index: 18, kind: output, shape index: {}]
  %s19 = sld [smem:[#allocation0]]
  $region105: #{decoder_v2_forward.8} parent=0
    _
  %s21 = ssub.s32 1, %s19
  %s22 = scalar_select 0, %s21, %s19
  loop: start=0, step=1, limit=4
  $region2: #{decoder_v2_forward.8} parent=0 // loop_pre_header
    _
  $region3: #{decoder_v2_forward.8} parent=0 // loop_header
    %s24 = sphi 0, %s28
    %p25 = scmp.ge.s32.totalorder %s24, 4
    %s34 = sphi 0, %s36
    %s37 = sphi 0, %s34
    %s38 = sphi 0, %s37
    %s54 = sphi 0, %s38
    %s60 = sphi 0, %s62
    %s63 = sphi 0, %s60
    %s64 = sphi 0, %s63
    %s80 = sphi 0, %s64
    %s84 = sphi 0, %s84
    %s86 = sphi 0, %s84
    %s87 = sphi 0, %s86
    %s101 = sphi 0, %s87
    %s105 = sphi 0, %s105
    %s107 = sphi 0, %s105
    %s108 = sphi 0, %s107
    %s122 = sphi 0, %s108
    %s126 = sphi 0, %s126
    %s128 = sphi 0, %s126
    %s129 = sphi 0, %s128
    %s143 = sphi 0, %s129
    %s147 = sphi 0, %s147
    %s149 = sphi 0, %s147
    %s150 = sphi 0, %s149
    %s164 = sphi 0, %s150
    %s168 = sphi 0, %s168
    %s170 = sphi 0, %s168
    %s171 = sphi 0, %s170
    %s185 = sphi 0, %s171
    %s189 = sphi 0, %s189
    %s191 = sphi 0, %s189
    %s192 = sphi 0, %s191
    %s206 = sphi 0, %s192
    %s210 = sphi 0, %s210
    %s212 = sphi 0, %s210
    %s213 = sphi 0, %s212
    %s227 = sphi 0, %s213
    %s231 = sphi 0, %s231
    %s233 = sphi 0, %s231
    %s234 = sphi 0, %s233
    %s248 = sphi 0, %s234
    %s252 = sphi 0, %s252
    %s254 = sphi 0, %s252
    %s255 = sphi 0, %s254
    %s269 = sphi 0, %s255
    %s273 = sphi 0, %s273
    %s275 = sphi 0, %s273
    %s276 = sphi 0, %s275
    %s290 = sphi 0, %s276
    %s294 = sphi 0, %s294
    %s296 = sphi 0, %s294
    %s297 = sphi 0, %s296
    %s311 = sphi 0, %s297
    %s315 = sphi 0, %s315
    %s317 = sphi 0, %s315
    %s318 = sphi 0, %s317
    %s332 = sphi 0, %s318
    %s336 = sphi 0, %s336
    %s338 = sphi 0, %s336
    %s339 = sphi 0, %s338
    %s353 = sphi 0, %s339
    %s357 = sphi 0, %s357
    %s359 = sphi 0, %s357
    %s360 = sphi 0, %s359
    %s374 = sphi 0, %s360
    %s378 = sphi 0, %s378
    %s380 = sphi 0, %s378
    %s381 = sphi 0, %s380
    %s395 = sphi 0, %s381
    %s399 = sphi 0, %s399
    %s401 = sphi 0, %s399
    %s402 = sphi 0, %s401
    %s416 = sphi 0, %s402
    %s422 = sphi 0, %s424
    %s425 = sphi 0, %s422
    %s426 = sphi 0, %s425
    %s442 = sphi 0, %s426
  $region4: #{decoder_v2_forward.8} parent=0 // loop_header_branch
    %27 = sbr.rel (%p25) target = $region8
  $region5: #{decoder_v2_forward.8} parent=0 // loop_body
    %s29 = ssub.s32 %s24, 1
    %s30 = ssub.s32 %s24, 2
    %s31 = sadd.s32 %s24, 1
    %s32 = ssub.s32 %s24, %s31
    %p33 = scmp.eq.s32.totalorder %s32, 0
    %s35 = sadd.s32 %s34, 1
    %s36 = scalar_select %p33, %s34, %s35
    %p39 = pneg %p33
    %p40 = scmp.eq.s32.totalorder %s24, 1
    %p41 = por %p39, %p40
    %p42 = scmp.ne.s32.totalorder %s34, %s37
    %p43 = scmp.eq.s32.totalorder %s24, 0
    %p44 = por %p42, %p43
    %p45 = scmp.ne.s32.totalorder %s34, %s37
    %p46 = scmp.eq.s32.totalorder %s29, 1
    %p47 = por %p45, %p46
    %p48 = scmp.ne.s32.totalorder %s37, %s38
    %p49 = scmp.eq.s32.totalorder %s29, 0
    %p50 = por %p48, %p49
    %p51 = scmp.ne.s32.totalorder %s37, %s38
    %p52 = scmp.eq.s32.totalorder %s30, 1
    %p53 = por %p51, %p52
    %p55 = scmp.ne.s32.totalorder %s38, %s54
    %p56 = scmp.eq.s32.totalorder %s30, 0
    %p57 = por %p55, %p56
    %s58 = ssub.s32 %s24, %s31
    %p59 = scmp.eq.s32.totalorder %s58, 0
    %s61 = sadd.s32 %s60, 1
    %s62 = scalar_select %p59, %s60, %s61
    %p65 = pneg %p59
    %p66 = scmp.eq.s32.totalorder %s24, 1
    %p67 = por %p65, %p66
    %p68 = scmp.ne.s32.totalorder %s60, %s63
    %p69 = scmp.eq.s32.totalorder %s24, 0
    %p70 = por %p68, %p69
    %p71 = scmp.ne.s32.totalorder %s60, %s63
    %p72 = scmp.eq.s32.totalorder %s29, 1
    %p73 = por %p71, %p72
    %p74 = scmp.ne.s32.totalorder %s63, %s64
    %p75 = scmp.eq.s32.totalorder %s29, 0
    %p76 = por %p74, %p75
    %p77 = scmp.ne.s32.totalorder %s63, %s64
    %p78 = scmp.eq.s32.totalorder %s30, 1
    %p79 = por %p77, %p78
    %p81 = scmp.ne.s32.totalorder %s64, %s80
    %p82 = scmp.eq.s32.totalorder %s30, 0
    %p83 = por %p81, %p82
    %s85 = sadd.s32 %s84, 1
    %p88 = scmp.eq.s32.totalorder %s24, 1
    %p89 = scmp.ne.s32.totalorder %s84, %s86
    %p90 = scmp.eq.s32.totalorder %s24, 0
    %p91 = por %p89, %p90
    %p92 = scmp.ne.s32.totalorder %s84, %s86
    %p93 = scmp.eq.s32.totalorder %s29, 1
    %p94 = por %p92, %p93
    %p95 = scmp.ne.s32.totalorder %s86, %s87
    %p96 = scmp.eq.s32.totalorder %s29, 0
    %p97 = por %p95, %p96
    %p98 = scmp.ne.s32.totalorder %s86, %s87
    %p99 = scmp.eq.s32.totalorder %s30, 1
    %p100 = por %p98, %p99
    %p102 = scmp.ne.s32.totalorder %s87, %s101
    %p103 = scmp.eq.s32.totalorder %s30, 0
    %p104 = por %p102, %p103
    %s106 = sadd.s32 %s105, 1
    %p109 = scmp.eq.s32.totalorder %s24, 1
    %p110 = scmp.ne.s32.totalorder %s105, %s107
    %p111 = scmp.eq.s32.totalorder %s24, 0
    %p112 = por %p110, %p111
    %p113 = scmp.ne.s32.totalorder %s105, %s107
    %p114 = scmp.eq.s32.totalorder %s29, 1
    %p115 = por %p113, %p114
    %p116 = scmp.ne.s32.totalorder %s107, %s108
    %p117 = scmp.eq.s32.totalorder %s29, 0
    %p118 = por %p116, %p117
    %p119 = scmp.ne.s32.totalorder %s107, %s108
    %p120 = scmp.eq.s32.totalorder %s30, 1
    %p121 = por %p119, %p120
    %p123 = scmp.ne.s32.totalorder %s108, %s122
    %p124 = scmp.eq.s32.totalorder %s30, 0
    %p125 = por %p123, %p124
    %s127 = sadd.s32 %s126, 1
    %p130 = scmp.eq.s32.totalorder %s24, 1
    %p131 = scmp.ne.s32.totalorder %s126, %s128
    %p132 = scmp.eq.s32.totalorder %s24, 0
    %p133 = por %p131, %p132
    %p134 = scmp.ne.s32.totalorder %s126, %s128
    %p135 = scmp.eq.s32.totalorder %s29, 1
    %p136 = por %p134, %p135
    %p137 = scmp.ne.s32.totalorder %s128, %s129
    %p138 = scmp.eq.s32.totalorder %s29, 0
    %p139 = por %p137, %p138
    %p140 = scmp.ne.s32.totalorder %s128, %s129
    %p141 = scmp.eq.s32.totalorder %s30, 1
    %p142 = por %p140, %p141
    %p144 = scmp.ne.s32.totalorder %s129, %s143
    %p145 = scmp.eq.s32.totalorder %s30, 0
    %p146 = por %p144, %p145
    %s148 = sadd.s32 %s147, 1
    %p151 = scmp.eq.s32.totalorder %s24, 1
    %p152 = scmp.ne.s32.totalorder %s147, %s149
    %p153 = scmp.eq.s32.totalorder %s24, 0
    %p154 = por %p152, %p153
    %p155 = scmp.ne.s32.totalorder %s147, %s149
    %p156 = scmp.eq.s32.totalorder %s29, 1
    %p157 = por %p155, %p156
    %p158 = scmp.ne.s32.totalorder %s149, %s150
    %p159 = scmp.eq.s32.totalorder %s29, 0
    %p160 = por %p158, %p159
    %p161 = scmp.ne.s32.totalorder %s149, %s150
    %p162 = scmp.eq.s32.totalorder %s30, 1
    %p163 = por %p161, %p162
    %p165 = scmp.ne.s32.totalorder %s150, %s164
    %p166 = scmp.eq.s32.totalorder %s30, 0
    %p167 = por %p165, %p166
    %s169 = sadd.s32 %s168, 1
    %p172 = scmp.eq.s32.totalorder %s24, 1
    %p173 = scmp.ne.s32.totalorder %s168, %s170
    %p174 = scmp.eq.s32.totalorder %s24, 0
    %p175 = por %p173, %p174
    %p176 = scmp.ne.s32.totalorder %s168, %s170
    %p177 = scmp.eq.s32.totalorder %s29, 1
    %p178 = por %p176, %p177
    %p179 = scmp.ne.s32.totalorder %s170, %s171
    %p180 = scmp.eq.s32.totalorder %s29, 0
    %p181 = por %p179, %p180
    %p182 = scmp.ne.s32.totalorder %s170, %s171
    %p183 = scmp.eq.s32.totalorder %s30, 1
    %p184 = por %p182, %p183
    %p186 = scmp.ne.s32.totalorder %s171, %s185
    %p187 = scmp.eq.s32.totalorder %s30, 0
    %p188 = por %p186, %p187
    %s190 = sadd.s32 %s189, 1
    %p193 = scmp.eq.s32.totalorder %s24, 1
    %p194 = scmp.ne.s32.totalorder %s189, %s191
    %p195 = scmp.eq.s32.totalorder %s24, 0
    %p196 = por %p194, %p195
    %p197 = scmp.ne.s32.totalorder %s189, %s191
    %p198 = scmp.eq.s32.totalorder %s29, 1
    %p199 = por %p197, %p198
    %p200 = scmp.ne.s32.totalorder %s191, %s192
    %p201 = scmp.eq.s32.totalorder %s29, 0
    %p202 = por %p200, %p201
    %p203 = scmp.ne.s32.totalorder %s191, %s192
    %p204 = scmp.eq.s32.totalorder %s30, 1
    %p205 = por %p203, %p204
    %p207 = scmp.ne.s32.totalorder %s192, %s206
    %p208 = scmp.eq.s32.totalorder %s30, 0
    %p209 = por %p207, %p208
    %s211 = sadd.s32 %s210, 1
    %p214 = scmp.eq.s32.totalorder %s24, 1
    %p215 = scmp.ne.s32.totalorder %s210, %s212
    %p216 = scmp.eq.s32.totalorder %s24, 0
    %p217 = por %p215, %p216
    %p218 = scmp.ne.s32.totalorder %s210, %s212
    %p219 = scmp.eq.s32.totalorder %s29, 1
    %p220 = por %p218, %p219
    %p221 = scmp.ne.s32.totalorder %s212, %s213
    %p222 = scmp.eq.s32.totalorder %s29, 0
    %p223 = por %p221, %p222
    %p224 = scmp.ne.s32.totalorder %s212, %s213
    %p225 = scmp.eq.s32.totalorder %s30, 1
    %p226 = por %p224, %p225
    %p228 = scmp.ne.s32.totalorder %s213, %s227
    %p229 = scmp.eq.s32.totalorder %s30, 0
    %p230 = por %p228, %p229
    %s232 = sadd.s32 %s231, 1
    %p235 = scmp.eq.s32.totalorder %s24, 1
    %p236 = scmp.ne.s32.totalorder %s231, %s233
    %p237 = scmp.eq.s32.totalorder %s24, 0
    %p238 = por %p236, %p237
    %p239 = scmp.ne.s32.totalorder %s231, %s233
    %p240 = scmp.eq.s32.totalorder %s29, 1
    %p241 = por %p239, %p240
    %p242 = scmp.ne.s32.totalorder %s233, %s234
    %p243 = scmp.eq.s32.totalorder %s29, 0
    %p244 = por %p242, %p243
    %p245 = scmp.ne.s32.totalorder %s233, %s234
    %p246 = scmp.eq.s32.totalorder %s30, 1
    %p247 = por %p245, %p246
    %p249 = scmp.ne.s32.totalorder %s234, %s248
    %p250 = scmp.eq.s32.totalorder %s30, 0
    %p251 = por %p249, %p250
    %s253 = sadd.s32 %s252, 1
    %p256 = scmp.eq.s32.totalorder %s24, 1
    %p257 = scmp.ne.s32.totalorder %s252, %s254
    %p258 = scmp.eq.s32.totalorder %s24, 0
    %p259 = por %p257, %p258
    %p260 = scmp.ne.s32.totalorder %s252, %s254
    %p261 = scmp.eq.s32.totalorder %s29, 1
    %p262 = por %p260, %p261
    %p263 = scmp.ne.s32.totalorder %s254, %s255
    %p264 = scmp.eq.s32.totalorder %s29, 0
    %p265 = por %p263, %p264
    %p266 = scmp.ne.s32.totalorder %s254, %s255
    %p267 = scmp.eq.s32.totalorder %s30, 1
    %p268 = por %p266, %p267
    %p270 = scmp.ne.s32.totalorder %s255, %s269
    %p271 = scmp.eq.s32.totalorder %s30, 0
    %p272 = por %p270, %p271
    %s274 = sadd.s32 %s273, 1
    %p277 = scmp.eq.s32.totalorder %s24, 1
    %p278 = scmp.ne.s32.totalorder %s273, %s275
    %p279 = scmp.eq.s32.totalorder %s24, 0
    %p280 = por %p278, %p279
    %p281 = scmp.ne.s32.totalorder %s273, %s275
    %p282 = scmp.eq.s32.totalorder %s29, 1
    %p283 = por %p281, %p282
    %p284 = scmp.ne.s32.totalorder %s275, %s276
    %p285 = scmp.eq.s32.totalorder %s29, 0
    %p286 = por %p284, %p285
    %p287 = scmp.ne.s32.totalorder %s275, %s276
    %p288 = scmp.eq.s32.totalorder %s30, 1
    %p289 = por %p287, %p288
    %p291 = scmp.ne.s32.totalorder %s276, %s290
    %p292 = scmp.eq.s32.totalorder %s30, 0
    %p293 = por %p291, %p292
    %s295 = sadd.s32 %s294, 1
    %p298 = scmp.eq.s32.totalorder %s24, 1
    %p299 = scmp.ne.s32.totalorder %s294, %s296
    %p300 = scmp.eq.s32.totalorder %s24, 0
    %p301 = por %p299, %p300
    %p302 = scmp.ne.s32.totalorder %s294, %s296
    %p303 = scmp.eq.s32.totalorder %s29, 1
    %p304 = por %p302, %p303
    %p305 = scmp.ne.s32.totalorder %s296, %s297
    %p306 = scmp.eq.s32.totalorder %s29, 0
    %p307 = por %p305, %p306
    %p308 = scmp.ne.s32.totalorder %s296, %s297
    %p309 = scmp.eq.s32.totalorder %s30, 1
    %p310 = por %p308, %p309
    %p312 = scmp.ne.s32.totalorder %s297, %s311
    %p313 = scmp.eq.s32.totalorder %s30, 0
    %p314 = por %p312, %p313
    %s316 = sadd.s32 %s315, 1
    %p319 = scmp.eq.s32.totalorder %s24, 1
    %p320 = scmp.ne.s32.totalorder %s315, %s317
    %p321 = scmp.eq.s32.totalorder %s24, 0
    %p322 = por %p320, %p321
    %p323 = scmp.ne.s32.totalorder %s315, %s317
    %p324 = scmp.eq.s32.totalorder %s29, 1
    %p325 = por %p323, %p324
    %p326 = scmp.ne.s32.totalorder %s317, %s318
    %p327 = scmp.eq.s32.totalorder %s29, 0
    %p328 = por %p326, %p327
    %p329 = scmp.ne.s32.totalorder %s317, %s318
    %p330 = scmp.eq.s32.totalorder %s30, 1
    %p331 = por %p329, %p330
    %p333 = scmp.ne.s32.totalorder %s318, %s332
    %p334 = scmp.eq.s32.totalorder %s30, 0
    %p335 = por %p333, %p334
    %s337 = sadd.s32 %s336, 1
    %p340 = scmp.eq.s32.totalorder %s24, 1
    %p341 = scmp.ne.s32.totalorder %s336, %s338
    %p342 = scmp.eq.s32.totalorder %s24, 0
    %p343 = por %p341, %p342
    %p344 = scmp.ne.s32.totalorder %s336, %s338
    %p345 = scmp.eq.s32.totalorder %s29, 1
    %p346 = por %p344, %p345
    %p347 = scmp.ne.s32.totalorder %s338, %s339
    %p348 = scmp.eq.s32.totalorder %s29, 0
    %p349 = por %p347, %p348
    %p350 = scmp.ne.s32.totalorder %s338, %s339
    %p351 = scmp.eq.s32.totalorder %s30, 1
    %p352 = por %p350, %p351
    %p354 = scmp.ne.s32.totalorder %s339, %s353
    %p355 = scmp.eq.s32.totalorder %s30, 0
    %p356 = por %p354, %p355
    %s358 = sadd.s32 %s357, 1
    %p361 = scmp.eq.s32.totalorder %s24, 1
    %p362 = scmp.ne.s32.totalorder %s357, %s359
    %p363 = scmp.eq.s32.totalorder %s24, 0
    %p364 = por %p362, %p363
    %p365 = scmp.ne.s32.totalorder %s357, %s359
    %p366 = scmp.eq.s32.totalorder %s29, 1
    %p367 = por %p365, %p366
    %p368 = scmp.ne.s32.totalorder %s359, %s360
    %p369 = scmp.eq.s32.totalorder %s29, 0
    %p370 = por %p368, %p369
    %p371 = scmp.ne.s32.totalorder %s359, %s360
    %p372 = scmp.eq.s32.totalorder %s30, 1
    %p373 = por %p371, %p372
    %p375 = scmp.ne.s32.totalorder %s360, %s374
    %p376 = scmp.eq.s32.totalorder %s30, 0
    %p377 = por %p375, %p376
    %s379 = sadd.s32 %s378, 1
    %p382 = scmp.eq.s32.totalorder %s24, 1
    %p383 = scmp.ne.s32.totalorder %s378, %s380
    %p384 = scmp.eq.s32.totalorder %s24, 0
    %p385 = por %p383, %p384
    %p386 = scmp.ne.s32.totalorder %s378, %s380
    %p387 = scmp.eq.s32.totalorder %s29, 1
    %p388 = por %p386, %p387
    %p389 = scmp.ne.s32.totalorder %s380, %s381
    %p390 = scmp.eq.s32.totalorder %s29, 0
    %p391 = por %p389, %p390
    %p392 = scmp.ne.s32.totalorder %s380, %s381
    %p393 = scmp.eq.s32.totalorder %s30, 1
    %p394 = por %p392, %p393
    %p396 = scmp.ne.s32.totalorder %s381, %s395
    %p397 = scmp.eq.s32.totalorder %s30, 0
    %p398 = por %p396, %p397
    %s400 = sadd.s32 %s399, 1
    %p403 = scmp.eq.s32.totalorder %s24, 1
    %p404 = scmp.ne.s32.totalorder %s399, %s401
    %p405 = scmp.eq.s32.totalorder %s24, 0
    %p406 = por %p404, %p405
    %p407 = scmp.ne.s32.totalorder %s399, %s401
    %p408 = scmp.eq.s32.totalorder %s29, 1
    %p409 = por %p407, %p408
    %p410 = scmp.ne.s32.totalorder %s401, %s402
    %p411 = scmp.eq.s32.totalorder %s29, 0
    %p412 = por %p410, %p411
    %p413 = scmp.ne.s32.totalorder %s401, %s402
    %p414 = scmp.eq.s32.totalorder %s30, 1
    %p415 = por %p413, %p414
    %p417 = scmp.ne.s32.totalorder %s402, %s416
    %p418 = scmp.eq.s32.totalorder %s30, 0
    %p419 = por %p417, %p418
    %s420 = ssub.s32 %s24, %s31
    %p421 = scmp.eq.s32.totalorder %s420, 0
    %s423 = sadd.s32 %s422, 1
    %s424 = scalar_select %p421, %s422, %s423
    %p427 = pneg %p421
    %p428 = scmp.eq.s32.totalorder %s24, 1
    %p429 = por %p427, %p428
    %p430 = scmp.ne.s32.totalorder %s422, %s425
    %p431 = scmp.eq.s32.totalorder %s24, 0
    %p432 = por %p430, %p431
    %p433 = scmp.ne.s32.totalorder %s422, %s425
    %p434 = scmp.eq.s32.totalorder %s29, 1
    %p435 = por %p433, %p434
    %p436 = scmp.ne.s32.totalorder %s425, %s426
    %p437 = scmp.eq.s32.totalorder %s29, 0
    %p438 = por %p436, %p437
    %p439 = scmp.ne.s32.totalorder %s425, %s426
    %p440 = scmp.eq.s32.totalorder %s30, 1
    %p441 = por %p439, %p440
    %p443 = scmp.ne.s32.totalorder %s426, %s442
    %p444 = scmp.eq.s32.totalorder %s30, 0
    %p445 = por %p443, %p444
    %p446 = scmp.le.s32.totalorder 1, %s24
    %p447 = scmp.lt.s32.totalorder %s24, 3
    %p448 = pnand %p446, %p447
    %p449 = pneg %p448
    // Predicated region
    $region9: #{decoder_v2_forward.8} parent=5 // pred_check
      _
    $region10: #{decoder_v2_forward.8} parent=5 // pred_check_branch
      %451 = sbr.rel (%p448) target = $region12
    $region11: #{decoder_v2_forward.8} parent=5 // pred_region
      %s452 = ssub.s32 %s24, 1
      // Predicated region
      $region13: #{decoder_v2_forward.8} parent=11 // pred_check
        %p453 = pneg %p97
      $region14: #{decoder_v2_forward.8} parent=11 // pred_check_branch
        %455 = sbr.rel (%p453) target = $region16
      $region15: #{decoder_v2_forward.8} parent=11 // pred_region
        _
      $region16: #{decoder_v2_forward.8} parent=11 // pred_fallthru
        _
      // Predicated region
      $region17: #{decoder_v2_forward.8} parent=11 // pred_check
        %p456 = pneg %p118
      $region18: #{decoder_v2_forward.8} parent=11 // pred_check_branch
        %458 = sbr.rel (%p456) target = $region20
      $region19: #{decoder_v2_forward.8} parent=11 // pred_region
        _
      $region20: #{decoder_v2_forward.8} parent=11 // pred_fallthru
        _
      // Predicated region
      $region21: #{decoder_v2_forward.8} parent=11 // pred_check
        %p459 = pneg %p139
      $region22: #{decoder_v2_forward.8} parent=11 // pred_check_branch
        %461 = sbr.rel (%p459) target = $region24
      $region23: #{decoder_v2_forward.8} parent=11 // pred_region
        _
      $region24: #{decoder_v2_forward.8} parent=11 // pred_fallthru
        _
      // Predicated region
      $region25: #{decoder_v2_forward.8} parent=11 // pred_check
        %p462 = pneg %p160
      $region26: #{decoder_v2_forward.8} parent=11 // pred_check_branch
        %464 = sbr.rel (%p462) target = $region28
      $region27: #{decoder_v2_forward.8} parent=11 // pred_region
        _
      $region28: #{decoder_v2_forward.8} parent=11 // pred_fallthru
        _
      // Predicated region
      $region29: #{decoder_v2_forward.8} parent=11 // pred_check
        %p465 = pneg %p181
      $region30: #{decoder_v2_forward.8} parent=11 // pred_check_branch
        %467 = sbr.rel (%p465) target = $region32
      $region31: #{decoder_v2_forward.8} parent=11 // pred_region
        _
      $region32: #{decoder_v2_forward.8} parent=11 // pred_fallthru
        _
      // Predicated region
      $region33: #{decoder_v2_forward.8} parent=11 // pred_check
        %p468 = pneg %p202
      $region34: #{decoder_v2_forward.8} parent=11 // pred_check_branch
        %470 = sbr.rel (%p468) target = $region36
      $region35: #{decoder_v2_forward.8} parent=11 // pred_region
        _
      $region36: #{decoder_v2_forward.8} parent=11 // pred_fallthru
        _
      // Predicated region
      $region37: #{decoder_v2_forward.8} parent=11 // pred_check
        %p471 = pneg %p223
      $region38: #{decoder_v2_forward.8} parent=11 // pred_check_branch
        %473 = sbr.rel (%p471) target = $region40
      $region39: #{decoder_v2_forward.8} parent=11 // pred_region
        _
      $region40: #{decoder_v2_forward.8} parent=11 // pred_fallthru
        _
      // Predicated region
      $region41: #{decoder_v2_forward.8} parent=11 // pred_check
        %p474 = pneg %p244
      $region42: #{decoder_v2_forward.8} parent=11 // pred_check_branch
        %476 = sbr.rel (%p474) target = $region44
      $region43: #{decoder_v2_forward.8} parent=11 // pred_region
        _
      $region44: #{decoder_v2_forward.8} parent=11 // pred_fallthru
        _
      // Predicated region
      $region45: #{decoder_v2_forward.8} parent=11 // pred_check
        %p477 = pneg %p265
      $region46: #{decoder_v2_forward.8} parent=11 // pred_check_branch
        %479 = sbr.rel (%p477) target = $region48
      $region47: #{decoder_v2_forward.8} parent=11 // pred_region
        _
      $region48: #{decoder_v2_forward.8} parent=11 // pred_fallthru
        _
      // Predicated region
      $region49: #{decoder_v2_forward.8} parent=11 // pred_check
        %p480 = pneg %p286
      $region50: #{decoder_v2_forward.8} parent=11 // pred_check_branch
        %482 = sbr.rel (%p480) target = $region52
      $region51: #{decoder_v2_forward.8} parent=11 // pred_region
        _
      $region52: #{decoder_v2_forward.8} parent=11 // pred_fallthru
        _
      // Predicated region
      $region53: #{decoder_v2_forward.8} parent=11 // pred_check
        %p483 = pneg %p307
      $region54: #{decoder_v2_forward.8} parent=11 // pred_check_branch
        %485 = sbr.rel (%p483) target = $region56
      $region55: #{decoder_v2_forward.8} parent=11 // pred_region
        _
      $region56: #{decoder_v2_forward.8} parent=11 // pred_fallthru
        _
      // Predicated region
      $region57: #{decoder_v2_forward.8} parent=11 // pred_check
        %p486 = pneg %p328
      $region58: #{decoder_v2_forward.8} parent=11 // pred_check_branch
        %488 = sbr.rel (%p486) target = $region60
      $region59: #{decoder_v2_forward.8} parent=11 // pred_region
        _
      $region60: #{decoder_v2_forward.8} parent=11 // pred_fallthru
        _
      // Predicated region
      $region61: #{decoder_v2_forward.8} parent=11 // pred_check
        %p489 = pneg %p349
      $region62: #{decoder_v2_forward.8} parent=11 // pred_check_branch
        %491 = sbr.rel (%p489) target = $region64
      $region63: #{decoder_v2_forward.8} parent=11 // pred_region
        _
      $region64: #{decoder_v2_forward.8} parent=11 // pred_fallthru
        _
      // Predicated region
      $region65: #{decoder_v2_forward.8} parent=11 // pred_check
        %p492 = pneg %p370
      $region66: #{decoder_v2_forward.8} parent=11 // pred_check_branch
        %494 = sbr.rel (%p492) target = $region68
      $region67: #{decoder_v2_forward.8} parent=11 // pred_region
        _
      $region68: #{decoder_v2_forward.8} parent=11 // pred_fallthru
        _
      // Predicated region
      $region69: #{decoder_v2_forward.8} parent=11 // pred_check
        %p495 = pneg %p391
      $region70: #{decoder_v2_forward.8} parent=11 // pred_check_branch
        %497 = sbr.rel (%p495) target = $region72
      $region71: #{decoder_v2_forward.8} parent=11 // pred_region
        _
      $region72: #{decoder_v2_forward.8} parent=11 // pred_fallthru
        _
      // Predicated region
      $region73: #{decoder_v2_forward.8} parent=11 // pred_check
        %p498 = pneg %p412
      $region74: #{decoder_v2_forward.8} parent=11 // pred_check_branch
        %500 = sbr.rel (%p498) target = $region76
      $region75: #{decoder_v2_forward.8} parent=11 // pred_region
        _
      $region76: #{decoder_v2_forward.8} parent=11 // pred_fallthru
        _
    $region12: #{decoder_v2_forward.8} parent=5 // pred_fallthru
      _
    %p501 = scmp.lt.s32.totalorder %s24, 2
    // Predicated region
    $region77: #{decoder_v2_forward.8} parent=5 // pred_check
      %p502 = pneg %p501
    $region78: #{decoder_v2_forward.8} parent=5 // pred_check_branch
      %504 = sbr.rel (%p502) target = $region80
    $region79: #{decoder_v2_forward.8} parent=5 // pred_region
      // Predicated region
      $region81: #{decoder_v2_forward.8} parent=79 // pred_check
        %p505 = pneg %p44
      $region82: #{decoder_v2_forward.8} parent=79 // pred_check_branch
        %507 = sbr.rel (%p505) target = $region84
      $region83: #{decoder_v2_forward.8} parent=79 // pred_region
        %p508 = scmp.lt.s32.totalorder %s24, 1
        %s509 = scalar_select %p508, %s24, 1
        %s510 = smul.addr %s509, 8
        %s511 = scalar_lea.vmem %s0, %s510
      $region84: #{decoder_v2_forward.8} parent=79 // pred_fallthru
        _
      // Predicated region
      $region85: #{decoder_v2_forward.8} parent=79 // pred_check
        %p512 = pneg %p70
      $region86: #{decoder_v2_forward.8} parent=79 // pred_check_branch
        %514 = sbr.rel (%p512) target = $region88
      $region87: #{decoder_v2_forward.8} parent=79 // pred_region
        %p515 = scmp.lt.s32.totalorder %s24, 1
        %s516 = scalar_select %p515, %s24, 1
        %s517 = smul.addr %s516, 8
        %s518 = scalar_lea.vmem %s1, %s517
      $region88: #{decoder_v2_forward.8} parent=79 // pred_fallthru
        _
    $region80: #{decoder_v2_forward.8} parent=5 // pred_fallthru
      _
    %p519 = scmp.le.s32.totalorder 1, %s24
    %p520 = scmp.lt.s32.totalorder %s24, 3
    %p521 = pnand %p519, %p520
    %p522 = pneg %p521
    // Predicated region
    $region89: #{decoder_v2_forward.8} parent=5 // pred_check
      _
    $region90: #{decoder_v2_forward.8} parent=5 // pred_check_branch
      %524 = sbr.rel (%p521) target = $region92
    $region91: #{decoder_v2_forward.8} parent=5 // pred_region
      %s525 = ssub.s32 %s24, 1
      %p526 = scmp.lt.s32.totalorder %s29, 1
      %s527 = scalar_select %p526, %s29, 1
      %s528 = smul.addr %s527, 8
      %s529 = scalar_lea.vmem %s0, %s528
      %p530 = pneg %p50
      %p531 = pneg %p47
      %p532 = scmp.lt.s32.totalorder %s29, 1
      %s533 = scalar_select %p532, %s29, 1
      %s534 = smul.addr %s533, 8
      %s535 = scalar_lea.vmem %s1, %s534
      %p536 = pneg %p76
      %p537 = pneg %p73
      %p538 = pneg %p97
      %p539 = pneg %p94
      %p540 = pneg %p118
      %p541 = pneg %p115
      %p542 = pneg %p139
      %p543 = pneg %p136
      %p544 = pneg %p160
      %p545 = pneg %p157
      %p546 = pneg %p181
      %p547 = pneg %p178
      %p548 = pneg %p202
      %p549 = pneg %p199
      %p550 = pneg %p223
      %p551 = pneg %p220
      %p552 = pneg %p244
      %p553 = pneg %p241
      %p554 = pneg %p265
      %p555 = pneg %p262
      %p556 = pneg %p286
      %p557 = pneg %p283
      %p558 = pneg %p307
      %p559 = pneg %p304
      %p560 = pneg %p328
      %p561 = pneg %p325
      %p562 = pneg %p349
      %p563 = pneg %p346
      %p564 = pneg %p370
      %p565 = pneg %p367
      %p566 = pneg %p391
      %p567 = pneg %p388
      %p568 = pneg %p412
      %p569 = pneg %p409
      %p570 = pneg %p438
      %p571 = pneg %p435
      %p572 = scmp.lt.s32.totalorder %s29, 1
      %s573 = scalar_select %p572, %s29, 1
      %s574 = smul.addr %s573, 8
      %s575 = scalar_lea.vmem %s18, %s574
      %p576 = scmp.lt.s32.totalorder %s29, 1
      %s577 = scalar_select %p576, %s29, 1
      %s578 = smul.addr %s577, 8
      %s579 = scalar_lea.vmem %s0, %s578
      %p580 = scmp.lt.s32.totalorder %s29, 1
      %s581 = scalar_select %p580, %s29, 1
      %s582 = smul.addr %s581, 8
      %s583 = scalar_lea.vmem %s1, %s582
      %p584 = scmp.lt.s32.totalorder %s29, 1
      %s585 = scalar_select %p584, %s29, 1
      %s586 = smul.addr %s585, 8
      %s587 = scalar_lea.vmem %s18, %s586
      %v589 = vld [vmem:[%s579] sm:$0xff]
      %v590 = vld [vmem:[%s583] sm:$0xff]
      %v591 = vpack.c.bf16 %v589, %v589
      %v592 = vpack.c.bf16 %v590, %v590
      %v593 = vld [vmem:[%s2] sm:$0xff]
      %v594 = vld [vmem:[%s2 + $0x8] sm:$0xff]
      %v595 = vld [vmem:[%s2 + $0x10] sm:$0xff]
      %v596 = vld [vmem:[%s2 + $0x18] sm:$0xff]
      %v597 = vpack.c.bf16 %v594, %v593
      %v598 = vpack.c.bf16 %v596, %v595
      %v599 = vld [vmem:[%s6] sm:$0x1]
      %v601 = vlaneseq
      %v602 = vshrl.u32 %v601, 7
      %v603 = vsub.s32 0, %v602
      %v604 = vrot.slane %v599, %v603
      %vm606 = vcmask 261120
      %v608 = vsel %vm606, %v591, 0
      %610 = vmatprep.subr.bf16.mxu0 0
      %611 = vmatpush1.bf16.msra.mxu0 %v597
      %612 = vmatprep.subr.bf16.mxu0 0
      %613 = vmatpush1.bf16.msra.mxu0 %v598
      %614 = vmatprep.subr.bf16.mxu0 0
      %615 = vmatpush1.bf16.msra.mxu0 0
      %616 = vmatprep.subr.bf16.mxu0 0
      %617 = vmatpush1.bf16.msra.mxu0 0
      %618 = vmatprep.subr.bf16.mxu0 0
      %619 = vmatpush1.bf16.msra.mxu0 0
      %620 = vmatprep.subr.bf16.mxu0 0
      %621 = vmatpush1.bf16.msra.mxu0 0
      %622 = vmatprep.subr.bf16.mxu0 0
      %623 = vmatpush1.bf16.msra.mxu0 0
      %624 = vmatprep.subr.bf16.mxu0 0
      %625 = vmatpush1.bf16.msra.mxu0 0
      %626 = vmatprep.subr.bf16.mxu0 0
      %627 = vmatpush1.bf16.msra.mxu0 0
      %628 = vmatprep.subr.bf16.mxu0 0
      %629 = vmatpush1.bf16.msra.mxu0 0
      %630 = vmatprep.subr.bf16.mxu0 0
      %631 = vmatpush1.bf16.msra.mxu0 0
      %632 = vmatprep.subr.bf16.mxu0 0
      %633 = vmatpush1.bf16.msra.mxu0 0
      %634 = vmatprep.subr.bf16.mxu0 0
      %635 = vmatpush1.bf16.msra.mxu0 0
      %636 = vmatprep.subr.bf16.mxu0 0
      %637 = vmatpush1.bf16.msra.mxu0 0
      %638 = vmatprep.subr.bf16.mxu0 0
      %639 = vmatpush1.bf16.msra.mxu0 0
      %640 = vmatprep.subr.bf16.mxu0 0
      %641 = vmatpush1.bf16.msra.mxu0 0
      %642 = vmatprep.mubr.bf16.mxu0 0
      %643 = vmatmul.mubr.bf16.gmra.mrb[0].mxu0 %v608
      %v644 = vpop.f32.mrb[0].mxu0
      %v645 = vadd.f32 %v604, %v644
      %v646 = vpop.f32.mrb[0].mxu0
      %v647 = vpop.f32.mrb[0].mxu0
      %v648 = vpop.f32.mrb[0].mxu0
      %649 = vdwg.mxu0
      %v650 = vld [vmem:[%s3] sm:$0xff]
      %v651 = vld [vmem:[%s3 + $0x8] sm:$0xff]
      %v652 = vld [vmem:[%s3 + $0x10] sm:$0xff]
      %v653 = vld [vmem:[%s3 + $0x18] sm:$0xff]
      %v654 = vpack.c.bf16 %v651, %v650
      %v655 = vpack.c.bf16 %v653, %v652
      %v656 = vld [vmem:[%s7] sm:$0x1]
      %v658 = vlaneseq
      %v659 = vshrl.u32 %v658, 7
      %v660 = vsub.s32 0, %v659
      %v661 = vrot.slane %v656, %v660
      %v664 = vsel %vm606, %v592, 0
      %666 = vmatprep.subr.bf16.mxu0 0
      %667 = vmatpush1.bf16.msra.mxu0 %v654
      %668 = vmatprep.subr.bf16.mxu0 0
      %669 = vmatpush1.bf16.msra.mxu0 %v655
      %670 = vmatprep.subr.bf16.mxu0 0
      %671 = vmatpush1.bf16.msra.mxu0 0
      %672 = vmatprep.subr.bf16.mxu0 0
      %673 = vmatpush1.bf16.msra.mxu0 0
      %674 = vmatprep.subr.bf16.mxu0 0
      %675 = vmatpush1.bf16.msra.mxu0 0
      %676 = vmatprep.subr.bf16.mxu0 0
      %677 = vmatpush1.bf16.msra.mxu0 0
      %678 = vmatprep.subr.bf16.mxu0 0
      %679 = vmatpush1.bf16.msra.mxu0 0
      %680 = vmatprep.subr.bf16.mxu0 0
      %681 = vmatpush1.bf16.msra.mxu0 0
      %682 = vmatprep.subr.bf16.mxu0 0
      %683 = vmatpush1.bf16.msra.mxu0 0
      %684 = vmatprep.subr.bf16.mxu0 0
      %685 = vmatpush1.bf16.msra.mxu0 0
      %686 = vmatprep.subr.bf16.mxu0 0
      %687 = vmatpush1.bf16.msra.mxu0 0
      %688 = vmatprep.subr.bf16.mxu0 0
      %689 = vmatpush1.bf16.msra.mxu0 0
      %690 = vmatprep.subr.bf16.mxu0 0
      %691 = vmatpush1.bf16.msra.mxu0 0
      %692 = vmatprep.subr.bf16.mxu0 0
      %693 = vmatpush1.bf16.msra.mxu0 0
      %694 = vmatprep.subr.bf16.mxu0 0
      %695 = vmatpush1.bf16.msra.mxu0 0
      %696 = vmatprep.subr.bf16.mxu0 0
      %697 = vmatpush1.bf16.msra.mxu0 0
      %698 = vmatprep.mubr.bf16.mxu0 0
      %699 = vmatmul.mubr.bf16.gmra.mrb[0].mxu0 %v664
      %v700 = vpop.f32.mrb[0].mxu0
      %v701 = vadd.f32 %v661, %v700
      %v702 = vpop.f32.mrb[0].mxu0
      %v703 = vpop.f32.mrb[0].mxu0
      %v704 = vpop.f32.mrb[0].mxu0
      %705 = vdwg.mxu0
      %v706 = vld [vmem:[%s4] sm:$0xff]
      %v707 = vld [vmem:[%s4 + $0x8] sm:$0xff]
      %v708 = vld [vmem:[%s4 + $0x10] sm:$0xff]
      %v709 = vld [vmem:[%s4 + $0x18] sm:$0xff]
      %v710 = vpack.c.bf16 %v707, %v706
      %v711 = vpack.c.bf16 %v709, %v708
      %v712 = vld [vmem:[%s8] sm:$0x1]
      %v714 = vlaneseq
      %v715 = vshrl.u32 %v714, 7
      %v716 = vsub.s32 0, %v715
      %v717 = vrot.slane %v712, %v716
      %719 = vmatprep.subr.bf16.mxu0 0
      %720 = vmatpush1.bf16.msra.mxu0 %v710
      %721 = vmatprep.subr.bf16.mxu0 0
      %722 = vmatpush1.bf16.msra.mxu0 %v711
      %723 = vmatprep.subr.bf16.mxu0 0
      %724 = vmatpush1.bf16.msra.mxu0 0
      %725 = vmatprep.subr.bf16.mxu0 0
      %726 = vmatpush1.bf16.msra.mxu0 0
      %727 = vmatprep.subr.bf16.mxu0 0
      %728 = vmatpush1.bf16.msra.mxu0 0
      %729 = vmatprep.subr.bf16.mxu0 0
      %730 = vmatpush1.bf16.msra.mxu0 0
      %731 = vmatprep.subr.bf16.mxu0 0
      %732 = vmatpush1.bf16.msra.mxu0 0
      %733 = vmatprep.subr.bf16.mxu0 0
      %734 = vmatpush1.bf16.msra.mxu0 0
      %735 = vmatprep.subr.bf16.mxu0 0
      %736 = vmatpush1.bf16.msra.mxu0 0
      %737 = vmatprep.subr.bf16.mxu0 0
      %738 = vmatpush1.bf16.msra.mxu0 0
      %739 = vmatprep.subr.bf16.mxu0 0
      %740 = vmatpush1.bf16.msra.mxu0 0
      %741 = vmatprep.subr.bf16.mxu0 0
      %742 = vmatpush1.bf16.msra.mxu0 0
      %743 = vmatprep.subr.bf16.mxu0 0
      %744 = vmatpush1.bf16.msra.mxu0 0
      %745 = vmatprep.subr.bf16.mxu0 0
      %746 = vmatpush1.bf16.msra.mxu0 0
      %747 = vmatprep.subr.bf16.mxu0 0
      %748 = vmatpush1.bf16.msra.mxu0 0
      %749 = vmatprep.subr.bf16.mxu0 0
      %750 = vmatpush1.bf16.msra.mxu0 0
      %751 = vmatprep.mubr.bf16.mxu0 0
      %752 = vmatmul.mubr.bf16.gmra.mrb[0].mxu0 %v664
      %v753 = vpop.f32.mrb[0].mxu0
      %v754 = vadd.f32 %v717, %v753
      %v755 = vpop.f32.mrb[0].mxu0
      %v756 = vpop.f32.mrb[0].mxu0
      %v757 = vpop.f32.mrb[0].mxu0
      %758 = vdwg.mxu0
      %v759 = vpack.c.bf16 %v645, %v645
      %v760 = vpack.c.bf16 %v701, %v701
      %v761 = vpack.c.bf16 %v754, %v754
      %vm762 = vcmask 64512
      %v764 = vsel %vm762, %v759, 0
      %v767 = vsel %vm762, %v760, 0
      %769 = vmatprep.subr.bf16.mxu0 0
      %770 = vmatpush1.bf16.xpose.msra.mxu0 %v767
      %771 = vmatprep.subr.bf16.mxu0 0
      %772 = vmatpush1.bf16.xpose.msra.mxu0 0
      %773 = vmatprep.subr.bf16.mxu0 0
      %774 = vmatpush1.bf16.xpose.msra.mxu0 0
      %775 = vmatprep.subr.bf16.mxu0 0
      %776 = vmatpush1.bf16.xpose.msra.mxu0 0
      %777 = vmatprep.subr.bf16.mxu0 0
      %778 = vmatpush1.bf16.xpose.msra.mxu0 0
      %779 = vmatprep.subr.bf16.mxu0 0
      %780 = vmatpush1.bf16.xpose.msra.mxu0 0
      %781 = vmatprep.subr.bf16.mxu0 0
      %782 = vmatpush1.bf16.xpose.msra.mxu0 0
      %783 = vmatprep.subr.bf16.mxu0 0
      %784 = vmatpush1.bf16.xpose.msra.mxu0 0
      %785 = vmatprep.subr.bf16.mxu0 0
      %786 = vmatpush1.bf16.xpose.msra.mxu0 0
      %787 = vmatprep.subr.bf16.mxu0 0
      %788 = vmatpush1.bf16.xpose.msra.mxu0 0
      %789 = vmatprep.subr.bf16.mxu0 0
      %790 = vmatpush1.bf16.xpose.msra.mxu0 0
      %791 = vmatprep.subr.bf16.mxu0 0
      %792 = vmatpush1.bf16.xpose.msra.mxu0 0
      %793 = vmatprep.subr.bf16.mxu0 0
      %794 = vmatpush1.bf16.xpose.msra.mxu0 0
      %795 = vmatprep.subr.bf16.mxu0 0
      %796 = vmatpush1.bf16.xpose.msra.mxu0 0
      %797 = vmatprep.subr.bf16.mxu0 0
      %798 = vmatpush1.bf16.xpose.msra.mxu0 0
      %799 = vmatprep.subr.bf16.mxu0 0
      %800 = vmatpush1.bf16.xpose.msra.mxu0 0
      %801 = vmatprep.mubr.bf16.mxu0 0
      %802 = vmatmul.mubr.bf16.gmra.mrb[0].mxu0 %v764
      %v803 = vpop.f32.mrb[0].mxu0
      %v804 = vadd.f32 0.0, %v803
      %v805 = vpop.f32.mrb[0].mxu0
      %v806 = vpop.f32.mrb[0].mxu0
      %v807 = vpop.f32.mrb[0].mxu0
      %808 = vdwg.mxu0
      %v809 = vmul.f32 %v804, 0.35355338
      %v810 = vsel %vm762, %v809, -inf
      %811 = vmax.xlane.f32.xlu0 %v810
      %v812 = vpop.xlane.xlu0 %811
      %v813 = vsub.f32 %v809, %v812
      %v814 = vmul.f32 %v813, 1.442695
      %v815 = vpow.pop %v814
      %v816 = vsel %vm762, %v815, 0.0
      %817 = vadd.xlane.f32.xlu0 %v816
      %v818 = vpop.xlane.xlu0 %817
      %v819 = vrcp.pop %v818
      %v820 = vmul.f32 %v815, %v819
      %v821 = vpack.c.bf16 %v820, %v820
      %v823 = vsel %vm762, %v821, 0
      %vm825 = vcmask 1043456
      %v827 = vsel %vm825, %v761, 0
      %829 = vmatprep.subr.bf16.mxu0 0
      %830 = vmatpush1.bf16.msra.mxu0 %v827
      %831 = vmatprep.subr.bf16.mxu0 0
      %832 = vmatpush1.bf16.msra.mxu0 0
      %833 = vmatprep.subr.bf16.mxu0 0
      %834 = vmatpush1.bf16.msra.mxu0 0
      %835 = vmatprep.subr.bf16.mxu0 0
      %836 = vmatpush1.bf16.msra.mxu0 0
      %837 = vmatprep.subr.bf16.mxu0 0
      %838 = vmatpush1.bf16.msra.mxu0 0
      %839 = vmatprep.subr.bf16.mxu0 0
      %840 = vmatpush1.bf16.msra.mxu0 0
      %841 = vmatprep.subr.bf16.mxu0 0
      %842 = vmatpush1.bf16.msra.mxu0 0
      %843 = vmatprep.subr.bf16.mxu0 0
      %844 = vmatpush1.bf16.msra.mxu0 0
      %845 = vmatprep.subr.bf16.mxu0 0
      %846 = vmatpush1.bf16.msra.mxu0 0
      %847 = vmatprep.subr.bf16.mxu0 0
      %848 = vmatpush1.bf16.msra.mxu0 0
      %849 = vmatprep.subr.bf16.mxu0 0
      %850 = vmatpush1.bf16.msra.mxu0 0
      %851 = vmatprep.subr.bf16.mxu0 0
      %852 = vmatpush1.bf16.msra.mxu0 0
      %853 = vmatprep.subr.bf16.mxu0 0
      %854 = vmatpush1.bf16.msra.mxu0 0
      %855 = vmatprep.subr.bf16.mxu0 0
      %856 = vmatpush1.bf16.msra.mxu0 0
      %857 = vmatprep.subr.bf16.mxu0 0
      %858 = vmatpush1.bf16.msra.mxu0 0
      %859 = vmatprep.subr.bf16.mxu0 0
      %860 = vmatpush1.bf16.msra.mxu0 0
      %861 = vmatprep.mubr.bf16.mxu0 0
      %862 = vmatmul.mubr.bf16.gmra.mrb[0].mxu0 %v823
      %v863 = vpop.f32.mrb[0].mxu0
      %v864 = vadd.f32 0.0, %v863
      %v865 = vpop.f32.mrb[0].mxu0
      %v866 = vpop.f32.mrb[0].mxu0
      %v867 = vpop.f32.mrb[0].mxu0
      %868 = vdwg.mxu0
      %v869 = vpack.c.bf16 %v864, %v864
      %v870 = vld [vmem:[%s5] sm:$0xff]
      %v871 = vpack.c.bf16 %v870, %v870
      %873 = vrot.lane.b32.xlu0 %v759, 120
      %v874 = vpop.permute.xlu0 %873
      %876 = vrot.lane.b32.xlu0 %v760, 120
      %v877 = vpop.permute.xlu0 %876
      %v879 = vsel %vm762, %v874, 0
      %v882 = vsel %vm762, %v877, 0
      %884 = vmatprep.subr.bf16.mxu0 0
      %885 = vmatpush1.bf16.xpose.msra.mxu0 %v882
      %886 = vmatprep.subr.bf16.mxu0 0
      %887 = vmatpush1.bf16.xpose.msra.mxu0 0
      %888 = vmatprep.subr.bf16.mxu0 0
      %889 = vmatpush1.bf16.xpose.msra.mxu0 0
      %890 = vmatprep.subr.bf16.mxu0 0
      %891 = vmatpush1.bf16.xpose.msra.mxu0 0
      %892 = vmatprep.subr.bf16.mxu0 0
      %893 = vmatpush1.bf16.xpose.msra.mxu0 0
      %894 = vmatprep.subr.bf16.mxu0 0
      %895 = vmatpush1.bf16.xpose.msra.mxu0 0
      %896 = vmatprep.subr.bf16.mxu0 0
      %897 = vmatpush1.bf16.xpose.msra.mxu0 0
      %898 = vmatprep.subr.bf16.mxu0 0
      %899 = vmatpush1.bf16.xpose.msra.mxu0 0
      %900 = vmatprep.subr.bf16.mxu0 0
      %901 = vmatpush1.bf16.xpose.msra.mxu0 0
      %902 = vmatprep.subr.bf16.mxu0 0
      %903 = vmatpush1.bf16.xpose.msra.mxu0 0
      %904 = vmatprep.subr.bf16.mxu0 0
      %905 = vmatpush1.bf16.xpose.msra.mxu0 0
      %906 = vmatprep.subr.bf16.mxu0 0
      %907 = vmatpush1.bf16.xpose.msra.mxu0 0
      %908 = vmatprep.subr.bf16.mxu0 0
      %909 = vmatpush1.bf16.xpose.msra.mxu0 0
      %910 = vmatprep.subr.bf16.mxu0 0
      %911 = vmatpush1.bf16.xpose.msra.mxu0 0
      %912 = vmatprep.subr.bf16.mxu0 0
      %913 = vmatpush1.bf16.xpose.msra.mxu0 0
      %914 = vmatprep.subr.bf16.mxu0 0
      %915 = vmatpush1.bf16.xpose.msra.mxu0 0
      %916 = vmatprep.mubr.bf16.mxu0 0
      %917 = vmatmul.mubr.bf16.gmra.mrb[0].mxu0 %v879
      %v918 = vpop.f32.mrb[0].mxu0
      %v919 = vadd.f32 0.0, %v918
      %v920 = vpop.f32.mrb[0].mxu0
      %v921 = vpop.f32.mrb[0].mxu0
      %v922 = vpop.f32.mrb[0].mxu0
      %923 = vdwg.mxu0
      %v924 = vmul.f32 %v919, 0.35355338
      %v925 = vsel %vm762, %v924, -inf
      %926 = vmax.xlane.f32.xlu0 %v925
      %v927 = vpop.xlane.xlu0 %926
      %v928 = vsub.f32 %v924, %v927
      %v929 = vmul.f32 %v928, 1.442695
      %v930 = vpow.pop %v929
      %v931 = vsel %vm762, %v930, 0.0
      %932 = vadd.xlane.f32.xlu0 %v931
      %v933 = vpop.xlane.xlu0 %932
      %v934 = vrcp.pop %v933
      %v935 = vmul.f32 %v930, %v934
      %v936 = vpack.c.bf16 %v935, %v935
      %938 = vrot.lane.b32.xlu0 %v761, 120
      %v939 = vpop.permute.xlu0 %938
      %v941 = vsel %vm762, %v936, 0
      %v944 = vsel %vm825, %v939, 0
      %946 = vmatprep.subr.bf16.mxu0 0
      %947 = vmatpush1.bf16.msra.mxu0 %v944
      %948 = vmatprep.subr.bf16.mxu0 0
      %949 = vmatpush1.bf16.msra.mxu0 0
      %950 = vmatprep.subr.bf16.mxu0 0
      %951 = vmatpush1.bf16.msra.mxu0 0
      %952 = vmatprep.subr.bf16.mxu0 0
      %953 = vmatpush1.bf16.msra.mxu0 0
      %954 = vmatprep.subr.bf16.mxu0 0
      %955 = vmatpush1.bf16.msra.mxu0 0
      %956 = vmatprep.subr.bf16.mxu0 0
      %957 = vmatpush1.bf16.msra.mxu0 0
      %958 = vmatprep.subr.bf16.mxu0 0
      %959 = vmatpush1.bf16.msra.mxu0 0
      %960 = vmatprep.subr.bf16.mxu0 0
      %961 = vmatpush1.bf16.msra.mxu0 0
      %962 = vmatprep.subr.bf16.mxu0 0
      %963 = vmatpush1.bf16.msra.mxu0 0
      %964 = vmatprep.subr.bf16.mxu0 0
      %965 = vmatpush1.bf16.msra.mxu0 0
      %966 = vmatprep.subr.bf16.mxu0 0
      %967 = vmatpush1.bf16.msra.mxu0 0
      %968 = vmatprep.subr.bf16.mxu0 0
      %969 = vmatpush1.bf16.msra.mxu0 0
      %970 = vmatprep.subr.bf16.mxu0 0
      %971 = vmatpush1.bf16.msra.mxu0 0
      %972 = vmatprep.subr.bf16.mxu0 0
      %973 = vmatpush1.bf16.msra.mxu0 0
      %974 = vmatprep.subr.bf16.mxu0 0
      %975 = vmatpush1.bf16.msra.mxu0 0
      %976 = vmatprep.subr.bf16.mxu0 0
      %977 = vmatpush1.bf16.msra.mxu0 0
      %978 = vmatprep.mubr.bf16.mxu0 0
      %979 = vmatmul.mubr.bf16.gmra.mrb[0].mxu0 %v941
      %v980 = vpop.f32.mrb[0].mxu0
      %v981 = vadd.f32 0.0, %v980
      %v982 = vpop.f32.mrb[0].mxu0
      %v983 = vpop.f32.mrb[0].mxu0
      %v984 = vpop.f32.mrb[0].mxu0
      %985 = vdwg.mxu0
      %v986 = vpack.c.bf16 %v981, %v981
      %v987 = vld [vmem:[%s5 + $0x8] sm:$0xff]
      %v988 = vpack.c.bf16 %v987, %v987
      %v990 = vsel %vm762, %v986, 0
      %v993 = vsel %vm825, %v988, 0
      %995 = vmatprep.subr.bf16.mxu0 0
      %996 = vmatpush1.bf16.msra.mxu0 %v993
      %997 = vmatprep.subr.bf16.mxu0 0
      %998 = vmatpush1.bf16.msra.mxu0 0
      %999 = vmatprep.subr.bf16.mxu0 0
      %1000 = vmatpush1.bf16.msra.mxu0 0
      %1001 = vmatprep.subr.bf16.mxu0 0
      %1002 = vmatpush1.bf16.msra.mxu0 0
      %1003 = vmatprep.subr.bf16.mxu0 0
      %1004 = vmatpush1.bf16.msra.mxu0 0
      %1005 = vmatprep.subr.bf16.mxu0 0
      %1006 = vmatpush1.bf16.msra.mxu0 0
      %1007 = vmatprep.subr.bf16.mxu0 0
      %1008 = vmatpush1.bf16.msra.mxu0 0
      %1009 = vmatprep.subr.bf16.mxu0 0
      %1010 = vmatpush1.bf16.msra.mxu0 0
      %1011 = vmatprep.subr.bf16.mxu0 0
      %1012 = vmatpush1.bf16.msra.mxu0 0
      %1013 = vmatprep.subr.bf16.mxu0 0
      %1014 = vmatpush1.bf16.msra.mxu0 0
      %1015 = vmatprep.subr.bf16.mxu0 0
      %1016 = vmatpush1.bf16.msra.mxu0 0
      %1017 = vmatprep.subr.bf16.mxu0 0
      %1018 = vmatpush1.bf16.msra.mxu0 0
      %1019 = vmatprep.subr.bf16.mxu0 0
      %1020 = vmatpush1.bf16.msra.mxu0 0
      %1021 = vmatprep.subr.bf16.mxu0 0
      %1022 = vmatpush1.bf16.msra.mxu0 0
      %1023 = vmatprep.subr.bf16.mxu0 0
      %1024 = vmatpush1.bf16.msra.mxu0 0
      %1025 = vmatprep.subr.bf16.mxu0 0
      %1026 = vmatpush1.bf16.msra.mxu0 0
      %1027 = vmatprep.mubr.bf16.mxu0 0
      %1028 = vmatmul.mubr.bf16.gmra.mrb[0].mxu0 %v990
      %v1029 = vpop.f32.mrb[0].mxu0
      %v1030 = vadd.f32 0.0, %v1029
      %v1031 = vpop.f32.mrb[0].mxu0
      %v1032 = vpop.f32.mrb[0].mxu0
      %v1033 = vpop.f32.mrb[0].mxu0
      %1034 = vdwg.mxu0
      %v1036 = vsel %vm762, %v869, 0
      %v1039 = vsel %vm825, %v871, 0
      %1041 = vmatprep.subr.bf16.mxu0 0
      %1042 = vmatpush1.bf16.msra.mxu0 %v1039
      %1043 = vmatprep.subr.bf16.mxu0 0
      %1044 = vmatpush1.bf16.msra.mxu0 0
      %1045 = vmatprep.subr.bf16.mxu0 0
      %1046 = vmatpush1.bf16.msra.mxu0 0
      %1047 = vmatprep.subr.bf16.mxu0 0
      %1048 = vmatpush1.bf16.msra.mxu0 0
      %1049 = vmatprep.subr.bf16.mxu0 0
      %1050 = vmatpush1.bf16.msra.mxu0 0
      %1051 = vmatprep.subr.bf16.mxu0 0
      %1052 = vmatpush1.bf16.msra.mxu0 0
      %1053 = vmatprep.subr.bf16.mxu0 0
      %1054 = vmatpush1.bf16.msra.mxu0 0
      %1055 = vmatprep.subr.bf16.mxu0 0
      %1056 = vmatpush1.bf16.msra.mxu0 0
      %1057 = vmatprep.subr.bf16.mxu0 0
      %1058 = vmatpush1.bf16.msra.mxu0 0
      %1059 = vmatprep.subr.bf16.mxu0 0
      %1060 = vmatpush1.bf16.msra.mxu0 0
      %1061 = vmatprep.subr.bf16.mxu0 0
      %1062 = vmatpush1.bf16.msra.mxu0 0
      %1063 = vmatprep.subr.bf16.mxu0 0
      %1064 = vmatpush1.bf16.msra.mxu0 0
      %1065 = vmatprep.subr.bf16.mxu0 0
      %1066 = vmatpush1.bf16.msra.mxu0 0
      %1067 = vmatprep.subr.bf16.mxu0 0
      %1068 = vmatpush1.bf16.msra.mxu0 0
      %1069 = vmatprep.subr.bf16.mxu0 0
      %1070 = vmatpush1.bf16.msra.mxu0 0
      %1071 = vmatprep.subr.bf16.mxu0 0
      %1072 = vmatpush1.bf16.msra.mxu0 0
      %1073 = vmatprep.mubr.bf16.mxu0 0
      %1074 = vmatmul.mubr.bf16.gmra.mrb[0].mxu0 %v1036
      %v1075 = vpop.f32.mrb[0].mxu0
      %v1076 = vadd.f32 %v1030, %v1075
      %v1077 = vpop.f32.mrb[0].mxu0
      %v1078 = vpop.f32.mrb[0].mxu0
      %v1079 = vpop.f32.mrb[0].mxu0
      %1080 = vdwg.mxu0
      %1081 = vrot.lane.b32.xlu0 %v759, 112
      %v1082 = vpop.permute.xlu0 %1081
      %1083 = vrot.lane.b32.xlu0 %v760, 112
      %v1084 = vpop.permute.xlu0 %1083
      %v1086 = vsel %vm762, %v1082, 0
      %v1089 = vsel %vm762, %v1084, 0
      %1091 = vmatprep.subr.bf16.mxu0 0
      %1092 = vmatpush1.bf16.xpose.msra.mxu0 %v1089
      %1093 = vmatprep.subr.bf16.mxu0 0
      %1094 = vmatpush1.bf16.xpose.msra.mxu0 0
      %1095 = vmatprep.subr.bf16.mxu0 0
      %1096 = vmatpush1.bf16.xpose.msra.mxu0 0
      %1097 = vmatprep.subr.bf16.mxu0 0
      %1098 = vmatpush1.bf16.xpose.msra.mxu0 0
      %1099 = vmatprep.subr.bf16.mxu0 0
      %1100 = vmatpush1.bf16.xpose.msra.mxu0 0
      %1101 = vmatprep.subr.bf16.mxu0 0
      %1102 = vmatpush1.bf16.xpose.msra.mxu0 0
      %1103 = vmatprep.subr.bf16.mxu0 0
      %1104 = vmatpush1.bf16.xpose.msra.mxu0 0
      %1105 = vmatprep.subr.bf16.mxu0 0
      %1106 = vmatpush1.bf16.xpose.msra.mxu0 0
      %1107 = vmatprep.subr.bf16.mxu0 0
      %1108 = vmatpush1.bf16.xpose.msra.mxu0 0
      %1109 = vmatprep.subr.bf16.mxu0 0
      %1110 = vmatpush1.bf16.xpose.msra.mxu0 0
      %1111 = vmatprep.subr.bf16.mxu0 0
      %1112 = vmatpush1.bf16.xpose.msra.mxu0 0
      %1113 = vmatprep.subr.bf16.mxu0 0
      %1114 = vmatpush1.bf16.xpose.msra.mxu0 0
      %1115 = vmatprep.subr.bf16.mxu0 0
      %1116 = vmatpush1.bf16.xpose.msra.mxu0 0
      %1117 = vmatprep.subr.bf16.mxu0 0
      %1118 = vmatpush1.bf16.xpose.msra.mxu0 0
      %1119 = vmatprep.subr.bf16.mxu0 0
      %1120 = vmatpush1.bf16.xpose.msra.mxu0 0
      %1121 = vmatprep.subr.bf16.mxu0 0
      %1122 = vmatpush1.bf16.xpose.msra.mxu0 0
      %1123 = vmatprep.mubr.bf16.mxu0 0
      %1124 = vmatmul.mubr.bf16.gmra.mrb[0].mxu0 %v1086
      %v1125 = vpop.f32.mrb[0].mxu0
      %v1126 = vadd.f32 0.0, %v1125
      %v1127 = vpop.f32.mrb[0].mxu0
      %v1128 = vpop.f32.mrb[0].mxu0
      %v1129 = vpop.f32.mrb[0].mxu0
      %1130 = vdwg.mxu0
      %v1131 = vmul.f32 %v1126, 0.35355338
      %v1132 = vsel %vm762, %v1131, -inf
      %1133 = vmax.xlane.f32.xlu0 %v1132
      %v1134 = vpop.xlane.xlu0 %1133
      %v1135 = vsub.f32 %v1131, %v1134
      %v1136 = vmul.f32 %v1135, 1.442695
      %v1137 = vpow.pop %v1136
      %v1138 = vsel %vm762, %v1137, 0.0
      %1139 = vadd.xlane.f32.xlu0 %v1138
      %v1140 = vpop.xlane.xlu0 %1139
      %v1141 = vrcp.pop %v1140
      %v1142 = vmul.f32 %v1137, %v1141
      %v1143 = vpack.c.bf16 %v1142, %v1142
      %1144 = vrot.lane.b32.xlu0 %v761, 112
      %v1145 = vpop.permute.xlu0 %1144
      %v1147 = vsel %vm762, %v1143, 0
      %v1150 = vsel %vm825, %v1145, 0
      %1152 = vmatprep.subr.bf16.mxu0 0
      %1153 = vmatpush1.bf16.msra.mxu0 %v1150
      %1154 = vmatprep.subr.bf16.mxu0 0
      %1155 = vmatpush1.bf16.msra.mxu0 0
      %1156 = vmatprep.subr.bf16.mxu0 0
      %1157 = vmatpush1.bf16.msra.mxu0 0
      %1158 = vmatprep.subr.bf16.mxu0 0
      %1159 = vmatpush1.bf16.msra.mxu0 0
      %1160 = vmatprep.subr.bf16.mxu0 0
      %1161 = vmatpush1.bf16.msra.mxu0 0
      %1162 = vmatprep.subr.bf16.mxu0 0
      %1163 = vmatpush1.bf16.msra.mxu0 0
      %1164 = vmatprep.subr.bf16.mxu0 0
      %1165 = vmatpush1.bf16.msra.mxu0 0
      %1166 = vmatprep.subr.bf16.mxu0 0
      %1167 = vmatpush1.bf16.msra.mxu0 0
      %1168 = vmatprep.subr.bf16.mxu0 0
      %1169 = vmatpush1.bf16.msra.mxu0 0
      %1170 = vmatprep.subr.bf16.mxu0 0
      %1171 = vmatpush1.bf16.msra.mxu0 0
      %1172 = vmatprep.subr.bf16.mxu0 0
      %1173 = vmatpush1.bf16.msra.mxu0 0
      %1174 = vmatprep.subr.bf16.mxu0 0
      %1175 = vmatpush1.bf16.msra.mxu0 0
      %1176 = vmatprep.subr.bf16.mxu0 0
      %1177 = vmatpush1.bf16.msra.mxu0 0
      %1178 = vmatprep.subr.bf16.mxu0 0
      %1179 = vmatpush1.bf16.msra.mxu0 0
      %1180 = vmatprep.subr.bf16.mxu0 0
      %1181 = vmatpush1.bf16.msra.mxu0 0
      %1182 = vmatprep.subr.bf16.mxu0 0
      %1183 = vmatpush1.bf16.msra.mxu0 0
      %1184 = vmatprep.mubr.bf16.mxu0 0
      %1185 = vmatmul.mubr.bf16.gmra.mrb[0].mxu0 %v1147
      %v1186 = vpop.f32.mrb[0].mxu0
      %v1187 = vadd.f32 0.0, %v1186
      %v1188 = vpop.f32.mrb[0].mxu0
      %v1189 = vpop.f32.mrb[0].mxu0
      %v1190 = vpop.f32.mrb[0].mxu0
      %1191 = vdwg.mxu0
      %v1192 = vpack.c.bf16 %v1187, %v1187
      %v1193 = vld [vmem:[%s5 + $0x10] sm:$0xff]
      %v1194 = vpack.c.bf16 %v1193, %v1193
      %v1196 = vsel %vm762, %v1192, 0
      %v1199 = vsel %vm825, %v1194, 0
      %1201 = vmatprep.subr.bf16.mxu0 0
      %1202 = vmatpush1.bf16.msra.mxu0 %v1199
      %1203 = vmatprep.subr.bf16.mxu0 0
      %1204 = vmatpush1.bf16.msra.mxu0 0
      %1205 = vmatprep.subr.bf16.mxu0 0
      %1206 = vmatpush1.bf16.msra.mxu0 0
      %1207 = vmatprep.subr.bf16.mxu0 0
      %1208 = vmatpush1.bf16.msra.mxu0 0
      %1209 = vmatprep.subr.bf16.mxu0 0
      %1210 = vmatpush1.bf16.msra.mxu0 0
      %1211 = vmatprep.subr.bf16.mxu0 0
      %1212 = vmatpush1.bf16.msra.mxu0 0
      %1213 = vmatprep.subr.bf16.mxu0 0
      %1214 = vmatpush1.bf16.msra.mxu0 0
      %1215 = vmatprep.subr.bf16.mxu0 0
      %1216 = vmatpush1.bf16.msra.mxu0 0
      %1217 = vmatprep.subr.bf16.mxu0 0
      %1218 = vmatpush1.bf16.msra.mxu0 0
      %1219 = vmatprep.subr.bf16.mxu0 0
      %1220 = vmatpush1.bf16.msra.mxu0 0
      %1221 = vmatprep.subr.bf16.mxu0 0
      %1222 = vmatpush1.bf16.msra.mxu0 0
      %1223 = vmatprep.subr.bf16.mxu0 0
      %1224 = vmatpush1.bf16.msra.mxu0 0
      %1225 = vmatprep.subr.bf16.mxu0 0
      %1226 = vmatpush1.bf16.msra.mxu0 0
      %1227 = vmatprep.subr.bf16.mxu0 0
      %1228 = vmatpush1.bf16.msra.mxu0 0
      %1229 = vmatprep.subr.bf16.mxu0 0
      %1230 = vmatpush1.bf16.msra.mxu0 0
      %1231 = vmatprep.subr.bf16.mxu0 0
      %1232 = vmatpush1.bf16.msra.mxu0 0
      %1233 = vmatprep.mubr.bf16.mxu0 0
      %1234 = vmatmul.mubr.bf16.gmra.mrb[0].mxu0 %v1196
      %v1235 = vpop.f32.mrb[0].mxu0
      %v1236 = vadd.f32 0.0, %v1235
      %v1237 = vpop.f32.mrb[0].mxu0
      %v1238 = vpop.f32.mrb[0].mxu0
      %v1239 = vpop.f32.mrb[0].mxu0
      %1240 = vdwg.mxu0
      %v1241 = vadd.f32 %v1076, %v1236
      %1242 = vrot.lane.b32.xlu0 %v759, 104
      %v1243 = vpop.permute.xlu0 %1242
      %1244 = vrot.lane.b32.xlu0 %v760, 104
      %v1245 = vpop.permute.xlu0 %1244
      %v1247 = vsel %vm762, %v1243, 0
      %v1250 = vsel %vm762, %v1245, 0
      %1252 = vmatprep.subr.bf16.mxu0 0
      %1253 = vmatpush1.bf16.xpose.msra.mxu0 %v1250
      %1254 = vmatprep.subr.bf16.mxu0 0
      %1255 = vmatpush1.bf16.xpose.msra.mxu0 0
      %1256 = vmatprep.subr.bf16.mxu0 0
      %1257 = vmatpush1.bf16.xpose.msra.mxu0 0
      %1258 = vmatprep.subr.bf16.mxu0 0
      %1259 = vmatpush1.bf16.xpose.msra.mxu0 0
      %1260 = vmatprep.subr.bf16.mxu0 0
      %1261 = vmatpush1.bf16.xpose.msra.mxu0 0
      %1262 = vmatprep.subr.bf16.mxu0 0
      %1263 = vmatpush1.bf16.xpose.msra.mxu0 0
      %1264 = vmatprep.subr.bf16.mxu0 0
      %1265 = vmatpush1.bf16.xpose.msra.mxu0 0
      %1266 = vmatprep.subr.bf16.mxu0 0
      %1267 = vmatpush1.bf16.xpose.msra.mxu0 0
      %1268 = vmatprep.subr.bf16.mxu0 0
      %1269 = vmatpush1.bf16.xpose.msra.mxu0 0
      %1270 = vmatprep.subr.bf16.mxu0 0
      %1271 = vmatpush1.bf16.xpose.msra.mxu0 0
      %1272 = vmatprep.subr.bf16.mxu0 0
      %1273 = vmatpush1.bf16.xpose.msra.mxu0 0
      %1274 = vmatprep.subr.bf16.mxu0 0
      %1275 = vmatpush1.bf16.xpose.msra.mxu0 0
      %1276 = vmatprep.subr.bf16.mxu0 0
      %1277 = vmatpush1.bf16.xpose.msra.mxu0 0
      %1278 = vmatprep.subr.bf16.mxu0 0
      %1279 = vmatpush1.bf16.xpose.msra.mxu0 0
      %1280 = vmatprep.subr.bf16.mxu0 0
      %1281 = vmatpush1.bf16.xpose.msra.mxu0 0
      %1282 = vmatprep.subr.bf16.mxu0 0
      %1283 = vmatpush1.bf16.xpose.msra.mxu0 0
      %1284 = vmatprep.mubr.bf16.mxu0 0
      %1285 = vmatmul.mubr.bf16.gmra.mrb[0].mxu0 %v1247
      %v1286 = vpop.f32.mrb[0].mxu0
      %v1287 = vadd.f32 0.0, %v1286
      %v1288 = vpop.f32.mrb[0].mxu0
      %v1289 = vpop.f32.mrb[0].mxu0
      %v1290 = vpop.f32.mrb[0].mxu0
      %1291 = vdwg.mxu0
      %v1292 = vmul.f32 %v1287, 0.35355338
      %v1293 = vsel %vm762, %v1292, -inf
      %1294 = vmax.xlane.f32.xlu0 %v1293
      %v1295 = vpop.xlane.xlu0 %1294
      %v1296 = vsub.f32 %v1292, %v1295
      %v1297 = vmul.f32 %v1296, 1.442695
      %v1298 = vpow.pop %v1297
      %v1299 = vsel %vm762, %v1298, 0.0
      %1300 = vadd.xlane.f32.xlu0 %v1299
      %v1301 = vpop.xlane.xlu0 %1300
      %v1302 = vrcp.pop %v1301
      %v1303 = vmul.f32 %v1298, %v1302
      %v1304 = vpack.c.bf16 %v1303, %v1303
      %1305 = vrot.lane.b32.xlu0 %v761, 104
      %v1306 = vpop.permute.xlu0 %1305
      %v1308 = vsel %vm762, %v1304, 0
      %v1311 = vsel %vm825, %v1306, 0
      %1313 = vmatprep.subr.bf16.mxu0 0
      %1314 = vmatpush1.bf16.msra.mxu0 %v1311
      %1315 = vmatprep.subr.bf16.mxu0 0
      %1316 = vmatpush1.bf16.msra.mxu0 0
      %1317 = vmatprep.subr.bf16.mxu0 0
      %1318 = vmatpush1.bf16.msra.mxu0 0
      %1319 = vmatprep.subr.bf16.mxu0 0
      %1320 = vmatpush1.bf16.msra.mxu0 0
      %1321 = vmatprep.subr.bf16.mxu0 0
      %1322 = vmatpush1.bf16.msra.mxu0 0
      %1323 = vmatprep.subr.bf16.mxu0 0
      %1324 = vmatpush1.bf16.msra.mxu0 0
      %1325 = vmatprep.subr.bf16.mxu0 0
      %1326 = vmatpush1.bf16.msra.mxu0 0
      %1327 = vmatprep.subr.bf16.mxu0 0
      %1328 = vmatpush1.bf16.msra.mxu0 0
      %1329 = vmatprep.subr.bf16.mxu0 0
      %1330 = vmatpush1.bf16.msra.mxu0 0
      %1331 = vmatprep.subr.bf16.mxu0 0
      %1332 = vmatpush1.bf16.msra.mxu0 0
      %1333 = vmatprep.subr.bf16.mxu0 0
      %1334 = vmatpush1.bf16.msra.mxu0 0
      %1335 = vmatprep.subr.bf16.mxu0 0
      %1336 = vmatpush1.bf16.msra.mxu0 0
      %1337 = vmatprep.subr.bf16.mxu0 0
      %1338 = vmatpush1.bf16.msra.mxu0 0
      %1339 = vmatprep.subr.bf16.mxu0 0
      %1340 = vmatpush1.bf16.msra.mxu0 0
      %1341 = vmatprep.subr.bf16.mxu0 0
      %1342 = vmatpush1.bf16.msra.mxu0 0
      %1343 = vmatprep.subr.bf16.mxu0 0
      %1344 = vmatpush1.bf16.msra.mxu0 0
      %1345 = vmatprep.mubr.bf16.mxu0 0
      %1346 = vmatmul.mubr.bf16.gmra.mrb[0].mxu0 %v1308
      %v1347 = vpop.f32.mrb[0].mxu0
      %v1348 = vadd.f32 0.0, %v1347
      %v1349 = vpop.f32.mrb[0].mxu0
      %v1350 = vpop.f32.mrb[0].mxu0
      %v1351 = vpop.f32.mrb[0].mxu0
      %1352 = vdwg.mxu0
      %v1353 = vpack.c.bf16 %v1348, %v1348
      %v1354 = vld [vmem:[%s5 + $0x18] sm:$0xff]
      %v1355 = vpack.c.bf16 %v1354, %v1354
      %v1357 = vsel %vm762, %v1353, 0
      %v1360 = vsel %vm825, %v1355, 0
      %1362 = vmatprep.subr.bf16.mxu0 0
      %1363 = vmatpush1.bf16.msra.mxu0 %v1360
      %1364 = vmatprep.subr.bf16.mxu0 0
      %1365 = vmatpush1.bf16.msra.mxu0 0
      %1366 = vmatprep.subr.bf16.mxu0 0
      %1367 = vmatpush1.bf16.msra.mxu0 0
      %1368 = vmatprep.subr.bf16.mxu0 0
      %1369 = vmatpush1.bf16.msra.mxu0 0
      %1370 = vmatprep.subr.bf16.mxu0 0
      %1371 = vmatpush1.bf16.msra.mxu0 0
      %1372 = vmatprep.subr.bf16.mxu0 0
      %1373 = vmatpush1.bf16.msra.mxu0 0
      %1374 = vmatprep.subr.bf16.mxu0 0
      %1375 = vmatpush1.bf16.msra.mxu0 0
      %1376 = vmatprep.subr.bf16.mxu0 0
      %1377 = vmatpush1.bf16.msra.mxu0 0
      %1378 = vmatprep.subr.bf16.mxu0 0
      %1379 = vmatpush1.bf16.msra.mxu0 0
      %1380 = vmatprep.subr.bf16.mxu0 0
      %1381 = vmatpush1.bf16.msra.mxu0 0
      %1382 = vmatprep.subr.bf16.mxu0 0
      %1383 = vmatpush1.bf16.msra.mxu0 0
      %1384 = vmatprep.subr.bf16.mxu0 0
      %1385 = vmatpush1.bf16.msra.mxu0 0
      %1386 = vmatprep.subr.bf16.mxu0 0
      %1387 = vmatpush1.bf16.msra.mxu0 0
      %1388 = vmatprep.subr.bf16.mxu0 0
      %1389 = vmatpush1.bf16.msra.mxu0 0
      %1390 = vmatprep.subr.bf16.mxu0 0
      %1391 = vmatpush1.bf16.msra.mxu0 0
      %1392 = vmatprep.subr.bf16.mxu0 0
      %1393 = vmatpush1.bf16.msra.mxu0 0
      %1394 = vmatprep.mubr.bf16.mxu0 0
      %1395 = vmatmul.mubr.bf16.gmra.mrb[0].mxu0 %v1357
      %v1396 = vpop.f32.mrb[0].mxu0
      %v1397 = vadd.f32 0.0, %v1396
      %v1398 = vpop.f32.mrb[0].mxu0
      %v1399 = vpop.f32.mrb[0].mxu0
      %v1400 = vpop.f32.mrb[0].mxu0
      %1401 = vdwg.mxu0
      %v1402 = vadd.f32 %v1241, %v1397
      %v1403 = vld [vmem:[%s9] sm:$0x1]
      %v1405 = vlaneseq
      %v1406 = vshrl.u32 %v1405, 7
      %v1407 = vsub.s32 0, %v1406
      %v1408 = vrot.slane %v1403, %v1407
      %v1410 = vadd.f32 %v1402, %v1408
      %v1411 = vld [vmem:[%s10] sm:$0x1]
      %v1412 = vld [vmem:[%s11] sm:$0x1]
      %v1413 = vadd.f32 %v589, %v1410
      %v1414 = vsel %vm606, %v1413, 0.0
      %1415 = vadd.xlane.f32.xlu0 %v1414
      %v1416 = vpop.xlane.xlu0 %1415
      %v1417 = vrcp.pop 32.0
      %v1418 = vmul.f32 %v1416, %v1417
      %v1419 = vsub.f32 %v1413, %v1418
      %v1420 = vmul.f32 %v1419, %v1419
      %v1421 = vsel %vm606, %v1420, 0.0
      %1422 = vadd.xlane.f32.xlu0 %v1421
      %v1423 = vpop.xlane.xlu0 %1422
      %v1424 = vmul.f32 %v1423, %v1417
      %v1425 = vadd.f32 %v1424, 1e-05
      %v1426 = vrsqrt.pop %v1425
      %v1427 = vmul.f32 %v1419, %v1426
      %v1429 = vlaneseq
      %v1430 = vshrl.u32 %v1429, 7
      %v1431 = vsub.s32 0, %v1430
      %v1432 = vrot.slane %v1411, %v1431
      %v1434 = vmul.f32 %v1427, %v1432
      %v1436 = vlaneseq
      %v1437 = vshrl.u32 %v1436, 7
      %v1438 = vsub.s32 0, %v1437
      %v1439 = vrot.slane %v1412, %v1438
      %v1441 = vadd.f32 %v1434, %v1439
      %v1442 = vpack.c.bf16 %v1441, %v1441
      %v1443 = vld [vmem:[%s12] sm:$0xff]
      %v1444 = vld [vmem:[%s12 + $0x8] sm:$0xff]
      %v1445 = vld [vmem:[%s12 + $0x10] sm:$0xff]
      %v1446 = vld [vmem:[%s12 + $0x18] sm:$0xff]
      %v1447 = vpack.c.bf16 %v1444, %v1443
      %v1448 = vpack.c.bf16 %v1446, %v1445
      %v1449 = vld [vmem:[%s13] sm:$0x1]
      %v1451 = vlaneseq
      %v1452 = vshrl.u32 %v1451, 7
      %v1453 = vsub.s32 0, %v1452
      %v1454 = vrot.slane %v1449, %v1453
      %v1457 = vsel %vm606, %v1442, 0
      %1459 = vmatprep.subr.bf16.mxu0 0
      %1460 = vmatpush1.bf16.msra.mxu0 %v1447
      %1461 = vmatprep.subr.bf16.mxu0 0
      %1462 = vmatpush1.bf16.msra.mxu0 %v1448
      %1463 = vmatprep.subr.bf16.mxu0 0
      %1464 = vmatpush1.bf16.msra.mxu0 0
      %1465 = vmatprep.subr.bf16.mxu0 0
      %1466 = vmatpush1.bf16.msra.mxu0 0
      %1467 = vmatprep.subr.bf16.mxu0 0
      %1468 = vmatpush1.bf16.msra.mxu0 0
      %1469 = vmatprep.subr.bf16.mxu0 0
      %1470 = vmatpush1.bf16.msra.mxu0 0
      %1471 = vmatprep.subr.bf16.mxu0 0
      %1472 = vmatpush1.bf16.msra.mxu0 0
      %1473 = vmatprep.subr.bf16.mxu0 0
      %1474 = vmatpush1.bf16.msra.mxu0 0
      %1475 = vmatprep.subr.bf16.mxu0 0
      %1476 = vmatpush1.bf16.msra.mxu0 0
      %1477 = vmatprep.subr.bf16.mxu0 0
      %1478 = vmatpush1.bf16.msra.mxu0 0
      %1479 = vmatprep.subr.bf16.mxu0 0
      %1480 = vmatpush1.bf16.msra.mxu0 0
      %1481 = vmatprep.subr.bf16.mxu0 0
      %1482 = vmatpush1.bf16.msra.mxu0 0
      %1483 = vmatprep.subr.bf16.mxu0 0
      %1484 = vmatpush1.bf16.msra.mxu0 0
      %1485 = vmatprep.subr.bf16.mxu0 0
      %1486 = vmatpush1.bf16.msra.mxu0 0
      %1487 = vmatprep.subr.bf16.mxu0 0
      %1488 = vmatpush1.bf16.msra.mxu0 0
      %1489 = vmatprep.subr.bf16.mxu0 0
      %1490 = vmatpush1.bf16.msra.mxu0 0
      %1491 = vmatprep.mubr.bf16.mxu0 0
      %1492 = vmatmul.mubr.bf16.gmra.mrb[0].mxu0 %v1457
      %v1493 = vpop.f32.mrb[0].mxu0
      %v1494 = vadd.f32 %v1454, %v1493
      %v1495 = vpop.f32.mrb[0].mxu0
      %v1496 = vpop.f32.mrb[0].mxu0
      %v1497 = vpop.f32.mrb[0].mxu0
      %1498 = vdwg.mxu0
      %v1499 = vmax.f32 %v1494, 0.0
      %v1500 = vpack.c.bf16 %v1499, %v1499
      %v1501 = vld [vmem:[%s14] sm:$0xff]
      %v1502 = vld [vmem:[%s14 + $0x8] sm:$0xff]
      %v1503 = vld [vmem:[%s14 + $0x10] sm:$0xff]
      %v1504 = vld [vmem:[%s14 + $0x18] sm:$0xff]
      %v1505 = vld [vmem:[%s14 + $0x20] sm:$0xff]
      %v1506 = vld [vmem:[%s14 + $0x28] sm:$0xff]
      %v1507 = vld [vmem:[%s14 + $0x30] sm:$0xff]
      %v1508 = vld [vmem:[%s14 + $0x38] sm:$0xff]
      %v1509 = vpack.c.bf16 %v1502, %v1501
      %v1510 = vpack.c.bf16 %v1504, %v1503
      %v1511 = vpack.c.bf16 %v1506, %v1505
      %v1512 = vpack.c.bf16 %v1508, %v1507
      %v1513 = vld [vmem:[%s15] sm:$0x1]
      %v1515 = vlaneseq
      %v1516 = vshrl.u32 %v1515, 7
      %v1517 = vsub.s32 0, %v1516
      %v1518 = vrot.slane %v1513, %v1517
      %vm1520 = vcmask 523264
      %v1522 = vsel %vm1520, %v1500, 0
      %1524 = vmatprep.subr.bf16.mxu0 0
      %1525 = vmatpush1.bf16.msra.mxu0 %v1509
      %1526 = vmatprep.subr.bf16.mxu0 0
      %1527 = vmatpush1.bf16.msra.mxu0 %v1510
      %1528 = vmatprep.subr.bf16.mxu0 0
      %1529 = vmatpush1.bf16.msra.mxu0 %v1511
      %1530 = vmatprep.subr.bf16.mxu0 0
      %1531 = vmatpush1.bf16.msra.mxu0 %v1512
      %1532 = vmatprep.subr.bf16.mxu0 0
      %1533 = vmatpush1.bf16.msra.mxu0 0
      %1534 = vmatprep.subr.bf16.mxu0 0
      %1535 = vmatpush1.bf16.msra.mxu0 0
      %1536 = vmatprep.subr.bf16.mxu0 0
      %1537 = vmatpush1.bf16.msra.mxu0 0
      %1538 = vmatprep.subr.bf16.mxu0 0
      %1539 = vmatpush1.bf16.msra.mxu0 0
      %1540 = vmatprep.subr.bf16.mxu0 0
      %1541 = vmatpush1.bf16.msra.mxu0 0
      %1542 = vmatprep.subr.bf16.mxu0 0
      %1543 = vmatpush1.bf16.msra.mxu0 0
      %1544 = vmatprep.subr.bf16.mxu0 0
      %1545 = vmatpush1.bf16.msra.mxu0 0
      %1546 = vmatprep.subr.bf16.mxu0 0
      %1547 = vmatpush1.bf16.msra.mxu0 0
      %1548 = vmatprep.subr.bf16.mxu0 0
      %1549 = vmatpush1.bf16.msra.mxu0 0
      %1550 = vmatprep.subr.bf16.mxu0 0
      %1551 = vmatpush1.bf16.msra.mxu0 0
      %1552 = vmatprep.subr.bf16.mxu0 0
      %1553 = vmatpush1.bf16.msra.mxu0 0
      %1554 = vmatprep.subr.bf16.mxu0 0
      %1555 = vmatpush1.bf16.msra.mxu0 0
      %1556 = vmatprep.mubr.bf16.mxu0 0
      %1557 = vmatmul.mubr.bf16.gmra.mrb[0].mxu0 %v1522
      %v1558 = vpop.f32.mrb[0].mxu0
      %v1559 = vadd.f32 %v1518, %v1558
      %v1560 = vpop.f32.mrb[0].mxu0
      %v1561 = vpop.f32.mrb[0].mxu0
      %v1562 = vpop.f32.mrb[0].mxu0
      %1563 = vdwg.mxu0
      %v1564 = vld [vmem:[%s16] sm:$0x1]
      %v1565 = vld [vmem:[%s17] sm:$0x1]
      %v1566 = vadd.f32 %v1441, %v1559
      %v1567 = vsel %vm606, %v1566, 0.0
      %1568 = vadd.xlane.f32.xlu0 %v1567
      %v1569 = vpop.xlane.xlu0 %1568
      %v1570 = vmul.f32 %v1569, %v1417
      %v1571 = vsub.f32 %v1566, %v1570
      %v1572 = vmul.f32 %v1571, %v1571
      %v1573 = vsel %vm606, %v1572, 0.0
      %1574 = vadd.xlane.f32.xlu0 %v1573
      %v1575 = vpop.xlane.xlu0 %1574
      %v1576 = vmul.f32 %v1575, %v1417
      %v1577 = vadd.f32 %v1576, 1e-05
      %v1578 = vrsqrt.pop %v1577
      %v1579 = vmul.f32 %v1571, %v1578
      %v1581 = vlaneseq
      %v1582 = vshrl.u32 %v1581, 7
      %v1583 = vsub.s32 0, %v1582
      %v1584 = vrot.slane %v1564, %v1583
      %v1586 = vmul.f32 %v1579, %v1584
      %v1588 = vlaneseq
      %v1589 = vshrl.u32 %v1588, 7
      %v1590 = vsub.s32 0, %v1589
      %v1591 = vrot.slane %v1565, %v1590
      %v1593 = vadd.f32 %v1586, %v1591
      %1594 = vst.msk [vmem:[%s587] sm:$0xff] %vm606, %v1593
      %p1595 = scmp.lt.s32.totalorder %s29, 1
      %s1596 = scalar_select %p1595, %s29, 1
      %s1597 = smul.addr %s1596, 8
      %s1598 = scalar_lea.vmem %s18, %s1597
      // Predicated region
      $region93: #{decoder_v2_forward.8} parent=91 // pred_check
        %p1599 = pneg %p435
      $region94: #{decoder_v2_forward.8} parent=91 // pred_check_branch
        %1601 = sbr.rel (%p1599) target = $region96
      $region95: #{decoder_v2_forward.8} parent=91 // pred_region
        _
      $region96: #{decoder_v2_forward.8} parent=91 // pred_fallthru
        _
    $region92: #{decoder_v2_forward.8} parent=5 // pred_fallthru
      _
    %p1602 = scmp.le.s32.totalorder 2, %s24
    // Predicated region
    $region97: #{decoder_v2_forward.8} parent=5 // pred_check
      %p1603 = pneg %p1602
    $region98: #{decoder_v2_forward.8} parent=5 // pred_check_branch
      %1605 = sbr.rel (%p1603) target = $region100
    $region99: #{decoder_v2_forward.8} parent=5 // pred_region
      %s1606 = ssub.s32 %s24, 2
      // Predicated region
      $region101: #{decoder_v2_forward.8} parent=99 // pred_check
        %p1607 = pneg %p441
      $region102: #{decoder_v2_forward.8} parent=99 // pred_check_branch
        %1609 = sbr.rel (%p1607) target = $region104
      $region103: #{decoder_v2_forward.8} parent=99 // pred_region
        %p1610 = scmp.lt.s32.totalorder %s30, 1
        %s1611 = scalar_select %p1610, %s30, 1
        %s1612 = smul.addr %s1611, 8
        %s1613 = scalar_lea.vmem %s18, %s1612
      $region104: #{decoder_v2_forward.8} parent=99 // pred_fallthru
        _
    $region100: #{decoder_v2_forward.8} parent=5 // pred_fallthru
      _
  $region6: #{decoder_v2_forward.8} parent=0 // loop_footer
    %s28 = sadd.s32 1, %s24
  $region7: #{decoder_v2_forward.8} parent=0 // loop_footer_branch
    %23 = sbr.rel target = $region3
  $region8: #{decoder_v2_forward.8} parent=0 // loop_exit
    _

</llo_original>
